<compile_context>
chip_gen: v7x
topology: tpu7x:2x2x1
jax: 0.10.0
libtpu: 0.0.40
codegen_flags: <defaults>
</compile_context>

<pallas_src>
import functools

import jax
import jax.numpy as jnp
import numpy as np
from jax.experimental import pallas as pl
from jax.experimental.pallas import tpu as pltpu


QUALITY_PAD = 128   # lane-dense padding of the 5-wide quality head
MIN_TB = 16         # minimum batch-tile rows (bf16 packs 16 sublanes per vreg)


def _round_up(x, m):
    return (x + m - 1) // m * m


# ----------------------------------------------------------------------------
# Pallas kernel: the whole MLP stack fused, one batch tile per grid step.
# ----------------------------------------------------------------------------
def _reflective_kernel(has_context, *refs):
    if has_context:
        (t_ref, c_ref,
         w1a_ref, w1b_ref, b1_ref,
         w2_ref, b2_ref, w3_ref, b3_ref,
         q1_ref, qb1_ref, q2_ref, qb2_ref, q3_ref, qb3_ref,
         s1a_ref, s1b_ref, sb1_ref, s2_ref, sb2_ref,
         analysis_ref, quality_ref, improve_ref) = refs
    else:
        (t_ref,
         w1a_ref, b1_ref,
         w2_ref, b2_ref, w3_ref, b3_ref,
         q1_ref, qb1_ref, q2_ref, qb2_ref, q3_ref, qb3_ref,
         s1a_ref, s1b_ref, sb1_ref, s2_ref, sb2_ref,
         analysis_ref, quality_ref, improve_ref) = refs
        c_ref = None
        w1b_ref = None

    f32 = jnp.float32
    bf16 = jnp.bfloat16

    def mm(a_bf16, w_ref):
        # bf16 x bf16 on the MXU, f32 accumulation.
        return jnp.dot(a_bf16, w_ref[...], preferred_element_type=f32)

    # thought_analyzer: Linear -> ReLU -> Dropout(id) -> Linear -> ReLU -> Linear
    # (inputs already bf16 — cast done once in the wrapper, not per grid step)
    h = mm(t_ref[...], w1a_ref)
    if has_context:
        h = h + mm(c_ref[...], w1b_ref)
    h = jnp.maximum(h + b1_ref[...], 0.0)
    h = jnp.maximum(mm(h.astype(bf16), w2_ref) + b2_ref[...], 0.0)
    analysis = mm(h.astype(bf16), w3_ref) + b3_ref[...]
    analysis_bf = analysis.astype(bf16)          # cast once, reused 3x below
    analysis_ref[...] = analysis_bf

    # quality_assessor: Linear -> ReLU -> Linear -> ReLU -> Linear -> Sigmoid
    # (last layer lane-padded 5 -> 128 with zero weights/bias; padded lanes
    #  carry sigmoid(0)=0.5 and meet zero rows of s1b below.)
    q = jnp.maximum(mm(analysis_bf, q1_ref) + qb1_ref[...], 0.0)
    q = jnp.maximum(mm(q.astype(bf16), q2_ref) + qb2_ref[...], 0.0)
    quality = jax.nn.sigmoid(mm(q.astype(bf16), q3_ref) + qb3_ref[...])
    quality_bf = quality.astype(bf16)            # cast once, reused for store + s1b
    quality_ref[...] = quality_bf

    # improvement_suggester: Linear(256+5 -> 128) -> ReLU -> Linear(128 -> D) -> Tanh
    # concat([analysis, quality]) @ W == analysis @ W[:256] + quality @ W[256:]
    s = mm(analysis_bf, s1a_ref) + mm(quality_bf, s1b_ref) + sb1_ref[...]
    s = jnp.maximum(s, 0.0)
    improve_ref[...] = jnp.tanh(mm(s.astype(bf16), s2_ref) + sb2_ref[...]).astype(bf16)


# ----------------------------------------------------------------------------
# Parameter init (PyTorch nn.Linear default: U[-1/sqrt(fan_in), +]),
# weights stored transposed and cast to bf16; biases stay f32.
# Quality head padded 5 -> 128 lanes; improvements head padded to a multiple
# of 128 lanes so every output store is lane-dense.
# ----------------------------------------------------------------------------
def init_params(key, model_dim, weight_dtype=jnp.bfloat16):
    def linear(k, fan_in, fan_out):
        kw, kb = jax.random.split(k)
        bound = 1.0 / np.sqrt(fan_in)
        w = jax.random.uniform(kw, (fan_in, fan_out), jnp.float32, -bound, bound)
        b = jax.random.uniform(kb, (1, fan_out), jnp.float32, -bound, bound)
        return w, b

    dpad = _round_up(model_dim, 128)
    keys = jax.random.split(key, 8)
    p = {}
    w1, p["b1"] = linear(keys[0], 2 * model_dim, 768)
    p["w1a"] = w1[:model_dim].astype(weight_dtype)      # thought half
    p["w1b"] = w1[model_dim:].astype(weight_dtype)      # context half
    w2, p["b2"] = linear(keys[1], 768, 512)
    p["w2"] = w2.astype(weight_dtype)
    w3, p["b3"] = linear(keys[2], 512, 256)
    p["w3"] = w3.astype(weight_dtype)
    q1, p["qb1"] = linear(keys[3], 256, 128)
    p["q1"] = q1.astype(weight_dtype)
    q2, p["qb2"] = linear(keys[4], 128, 64)
    p["q2"] = q2.astype(weight_dtype)
    q3, qb3 = linear(keys[5], 64, 5)
    p["q3"] = jnp.pad(q3, ((0, 0), (0, QUALITY_PAD - 5))).astype(weight_dtype)
    p["qb3"] = jnp.pad(qb3, ((0, 0), (0, QUALITY_PAD - 5)))          # f32
    s1, p["sb1"] = linear(keys[6], 256 + 5, 128)
    p["s1a"] = s1[:256].astype(weight_dtype)
    p["s1b"] = jnp.pad(s1[256:], ((0, QUALITY_PAD - 5), (0, 0))).astype(weight_dtype)
    s2, sb2 = linear(keys[7], 128, model_dim)
    p["s2"] = jnp.pad(s2, ((0, 0), (0, dpad - model_dim))).astype(weight_dtype)
    p["sb2"] = jnp.pad(sb2, ((0, 0), (0, dpad - model_dim)))         # f32
    return p


_W_KEYS_CTX = ("w1a", "w1b", "b1", "w2", "b2", "w3", "b3",
               "q1", "qb1", "q2", "qb2", "q3", "qb3",
               "s1a", "s1b", "sb1", "s2", "sb2")
_W_KEYS_NOCTX = ("w1a", "b1", "w2", "b2", "w3", "b3",
                 "q1", "qb1", "q2", "qb2", "q3", "qb3",
                 "s1a", "s1b", "sb1", "s2", "sb2")


# ----------------------------------------------------------------------------
# Wrapper
# ----------------------------------------------------------------------------
@functools.partial(jax.jit, static_argnames=("batch_tile",))
def reflective_thinking_forward(thought, context, params, *, batch_tile=1024):
    has_context = context is not None
    B, D = thought.shape                 # D == model_dim
    dpad = params["s2"].shape[1]         # lane-padded improvements width
    bf16 = jnp.bfloat16

    # Cast inputs once in the wrapper (halves input DMA, no per-step cast).
    thought = thought.astype(bf16)
    if has_context:
        context = context.astype(bf16)

    # --- batch tiling -------------------------------------------------------
    # * big batches: TB = batch_tile (default 1024; sweep 512/1024)
    # * batch fits one tile: split into >= 2 grid steps so both v7x TCs work
    # * tiny batches: pad up to 16 rows (bf16 sublane packing, unmasked stores)
    batch_tile = max(MIN_TB, _round_up(batch_tile, MIN_TB))
    if B <= batch_tile:
        if B >= 2 * MIN_TB:
            TB = _round_up(-(-B // 2), MIN_TB)
        else:
            TB = MIN_TB
    else:
        TB = batch_tile
    Bp = _round_up(B, TB)
    pad = Bp - B
    if pad:
        thought = jnp.pad(thought, ((0, pad), (0, 0)))
        if has_context:
            context = jnp.pad(context, ((0, pad), (0, 0)))
    grid = (Bp // TB,)

    weight_keys = _W_KEYS_CTX if has_context else _W_KEYS_NOCTX
    weights = [params[k] for k in weight_keys]

    def row_spec(n):
        return pl.BlockSpec((TB, n), lambda i: (i, 0))

    def const_spec(arr):
        # Weights/biases: same block every grid step -> fetched once, VMEM-resident.
        return pl.BlockSpec(arr.shape, lambda i: (0, 0))

    in_specs = ([row_spec(D)] + ([row_spec(D)] if has_context else [])
                + [const_spec(w) for w in weights])
    inputs = [thought] + ([context] if has_context else []) + weights

    out_shape = (
        jax.ShapeDtypeStruct((Bp, 256), bf16),
        jax.ShapeDtypeStruct((Bp, QUALITY_PAD), bf16),
        jax.ShapeDtypeStruct((Bp, dpad), bf16),
    )
    out_specs = (row_spec(256), row_spec(QUALITY_PAD), row_spec(dpad))

    # --- honest VMEM request (headroom, capped below physical limits) -------
    weight_bytes = sum(int(np.prod(w.shape)) * w.dtype.itemsize for w in weights)
    io_block_bytes = TB * ((2 * D if has_context else D)
                           + 256 + QUALITY_PAD + dpad) * 2           # bf16 blocks
    interm_bytes = TB * (768 + 512 + 256 + 128 + 64 + QUALITY_PAD + 128) * 4
    vmem_need = 2 * weight_bytes + 2 * io_block_bytes + interm_bytes
    vmem_limit = int(min(40 * 1024 * 1024, max(16 * 1024 * 1024, 1.5 * vmem_need)))

    flops_per_row = 2 * (D * 768 * (2 if has_context else 1)
                         + 768 * 512 + 512 * 256
                         + 256 * 128 + 128 * 64 + 64 * QUALITY_PAD
                         + 256 * 128 + QUALITY_PAD * 128 + 128 * dpad)
    cost = pl.CostEstimate(
        flops=int(Bp * flops_per_row),
        transcendentals=int(Bp * (QUALITY_PAD + dpad)),
        bytes_accessed=int(weight_bytes
                           + Bp * D * 2 * (2 if has_context else 1)
                           + Bp * (256 + QUALITY_PAD + dpad) * 2),
    )

    analysis, quality, improvements = pl.pallas_call(
        functools.partial(_reflective_kernel, has_context),
        out_shape=out_shape,
        grid_spec=pltpu.PrefetchScalarGridSpec(
            num_scalar_prefetch=0,
            grid=grid,
            in_specs=in_specs,
            out_specs=out_specs,
        ),
        compiler_params=pltpu.CompilerParams(
            dimension_semantics=("parallel",),          # megacore on v7x
            vmem_limit_bytes=vmem_limit,
        ),
        cost_estimate=cost,
    )(*inputs)

    return analysis[:B], quality[:B, :5], improvements[:B, :D]


# Pure-JAX reference (emulates the kernel numerics: bf16 weights/activations,
# f32 accumulation) for correctness checking.
def reference_forward(thought, context, params):
    f32, bf16 = jnp.float32, jnp.bfloat16
    D = thought.shape[1]

    def mm(a, w):
        return jnp.dot(a.astype(bf16), w.astype(bf16), preferred_element_type=f32)

    h = mm(thought, params["w1a"])
    if context is not None:
        h = h + mm(context, params["w1b"])
    h = jax.nn.relu(h + params["b1"])
    h = jax.nn.relu(mm(h, params["w2"]) + params["b2"])
    analysis = mm(h, params["w3"]) + params["b3"]
    q = jax.nn.relu(mm(analysis, params["q1"]) + params["qb1"])
    q = jax.nn.relu(mm(q, params["q2"]) + params["qb2"])
    quality = jax.nn.sigmoid(mm(q, params["q3"]) + params["qb3"])
    s = jax.nn.relu(mm(analysis, params["s1a"]) + mm(quality, params["s1b"])
                    + params["sb1"])
    improvements = jnp.tanh(mm(s, params["s2"]) + params["sb2"])
    return analysis, quality[:, :5], improvements[:, :D]


# Python-side (non-tensor) interpretation glue, mirroring the PyTorch module.
_QUALITY_DIMS = ["clarity", "depth", "coherence", "relevance", "creativity"]


def interpret_quality(quality_row):
    return {d: float(s) for d, s in zip(_QUALITY_DIMS, quality_row)}


def generate_suggestions(quality_dict):
    msgs = {
        "clarity": "Improve clarity by breaking down complex thoughts",
        "depth": "Deepen analysis by exploring more implications",
        "coherence": "Enhance coherence by better connecting ideas",
        "relevance": "Increase relevance by focusing on key aspects",
        "creativity": "Boost creativity by exploring novel connections",
    }
    return [msgs[d] for d in _QUALITY_DIMS if quality_dict.get(d, 1.0) < 0.5]


def _check(got, ref, tol=2e-2):
    np.testing.assert_allclose(np.asarray(got.astype(jnp.float32)),
                               np.asarray(ref.astype(jnp.float32)),
                               rtol=tol, atol=tol)


if __name__ == "__main__":
    MODEL_DIM = 128   # small model_dim consistent with the module's parameterization
    BATCH = 2

    key = jax.random.PRNGKey(0)
    kp, kt, kc = jax.random.split(key, 3)
    params = init_params(kp, MODEL_DIM)
    thought = jax.random.normal(kt, (BATCH, MODEL_DIM), jnp.float32)
    context = jax.random.normal(kc, (BATCH, MODEL_DIM), jnp.float32)

    # With context.
    analysis, quality, improvements = reflective_thinking_forward(thought, context, params)
    jax.block_until_ready((analysis, quality, improvements))

    ref_a, ref_q, ref_i = reference_forward(thought, context, params)
    assert analysis.shape == (BATCH, 256)
    assert quality.shape == (BATCH, 5)
    assert improvements.shape == (BATCH, MODEL_DIM)
    _check(analysis, ref_a)
    _check(quality, ref_q)
    _check(improvements, ref_i)

    # context=None path (statically skips half of the first matmul).
    a_nc, q_nc, i_nc = reflective_thinking_forward(thought, None, params)
    jax.block_until_ready((a_nc, q_nc, i_nc))
    r_a, r_q, r_i = reference_forward(thought, None, params)
    _check(a_nc, r_a)
    _check(q_nc, r_q)
    _check(i_nc, r_i)

    # Multi-step grid path (batch padded and split across >= 2 grid steps).
    kt2, kc2 = jax.random.split(jax.random.PRNGKey(1))
    B2 = 40
    thought2 = jax.random.normal(kt2, (B2, MODEL_DIM), jnp.float32)
    context2 = jax.random.normal(kc2, (B2, MODEL_DIM), jnp.float32)
    a2, q2, i2 = reflective_thinking_forward(thought2, context2, params)
    jax.block_until_ready((a2, q2, i2))
    r_a2, r_q2, r_i2 = reference_forward(thought2, context2, params)
    _check(a2, r_a2)
    _check(q2, r_q2)
    _check(i2, r_i2)

    # Non-tensor reflection outputs (dict / suggestions) — Python glue, row 0.
    qdict = interpret_quality(np.asarray(quality.astype(jnp.float32))[0])
    _ = generate_suggestions(qdict)
    # TODO(synk): MetaCognitiveInsight extraction (timestamps/strings) is pure
    # Python bookkeeping with no kernel equivalent; omitted.

    print("KERNEL_OK")
</pallas_src>

<mosaic_0001>
module attributes {stable_mosaic.version = 11 : i64} {
  func.func @_reflective_kernel(%arg0: i32, %arg1: memref<16x128xbf16, #tpu.memory_space<vmem>>, %arg2: memref<16x128xbf16, #tpu.memory_space<vmem>>, %arg3: memref<128x768xbf16, #tpu.memory_space<vmem>>, %arg4: memref<128x768xbf16, #tpu.memory_space<vmem>>, %arg5: memref<1x768xf32, #tpu.memory_space<vmem>>, %arg6: memref<768x512xbf16, #tpu.memory_space<vmem>>, %arg7: memref<1x512xf32, #tpu.memory_space<vmem>>, %arg8: memref<512x256xbf16, #tpu.memory_space<vmem>>, %arg9: memref<1x256xf32, #tpu.memory_space<vmem>>, %arg10: memref<256x128xbf16, #tpu.memory_space<vmem>>, %arg11: memref<1x128xf32, #tpu.memory_space<vmem>>, %arg12: memref<128x64xbf16, #tpu.memory_space<vmem>>, %arg13: memref<1x64xf32, #tpu.memory_space<vmem>>, %arg14: memref<64x128xbf16, #tpu.memory_space<vmem>>, %arg15: memref<1x128xf32, #tpu.memory_space<vmem>>, %arg16: memref<256x128xbf16, #tpu.memory_space<vmem>>, %arg17: memref<128x128xbf16, #tpu.memory_space<vmem>>, %arg18: memref<1x128xf32, #tpu.memory_space<vmem>>, %arg19: memref<128x128xbf16, #tpu.memory_space<vmem>>, %arg20: memref<1x128xf32, #tpu.memory_space<vmem>>, %arg21: memref<16x256xbf16, #tpu.memory_space<vmem>>, %arg22: memref<16x128xbf16, #tpu.memory_space<vmem>>, %arg23: memref<16x128xbf16, #tpu.memory_space<vmem>>) attributes {dimension_semantics = [#tpu.dimension_semantics<parallel>], iteration_bounds = array<i64: 1>, scalar_prefetch = 0 : i64, scratch_operands = 0 : i64, tpu.core_type = #tpu.core_type<tc>, window_params = [{transform_indices = @transform_0, window_bounds = array<i64: 16, 128>}, {transform_indices = @transform_1, window_bounds = array<i64: 16, 128>}, {pipeline_mode = #tpu.pipeline_mode<synchronous>, transform_indices = @transform_2, window_bounds = array<i64: 128, 768>}, {pipeline_mode = #tpu.pipeline_mode<synchronous>, transform_indices = @transform_3, window_bounds = array<i64: 128, 768>}, {pipeline_mode = #tpu.pipeline_mode<synchronous>, transform_indices = @transform_4, window_bounds = array<i64: 1, 768>}, {pipeline_mode = #tpu.pipeline_mode<synchronous>, transform_indices = @transform_5, window_bounds = array<i64: 768, 512>}, {pipeline_mode = #tpu.pipeline_mode<synchronous>, transform_indices = @transform_6, window_bounds = array<i64: 1, 512>}, {pipeline_mode = #tpu.pipeline_mode<synchronous>, transform_indices = @transform_7, window_bounds = array<i64: 512, 256>}, {pipeline_mode = #tpu.pipeline_mode<synchronous>, transform_indices = @transform_8, window_bounds = array<i64: 1, 256>}, {pipeline_mode = #tpu.pipeline_mode<synchronous>, transform_indices = @transform_9, window_bounds = array<i64: 256, 128>}, {pipeline_mode = #tpu.pipeline_mode<synchronous>, transform_indices = @transform_10, window_bounds = array<i64: 1, 128>}, {pipeline_mode = #tpu.pipeline_mode<synchronous>, transform_indices = @transform_11, window_bounds = array<i64: 128, 64>}, {pipeline_mode = #tpu.pipeline_mode<synchronous>, transform_indices = @transform_12, window_bounds = array<i64: 1, 64>}, {pipeline_mode = #tpu.pipeline_mode<synchronous>, transform_indices = @transform_13, window_bounds = array<i64: 64, 128>}, {pipeline_mode = #tpu.pipeline_mode<synchronous>, transform_indices = @transform_14, window_bounds = array<i64: 1, 128>}, {pipeline_mode = #tpu.pipeline_mode<synchronous>, transform_indices = @transform_15, window_bounds = array<i64: 256, 128>}, {pipeline_mode = #tpu.pipeline_mode<synchronous>, transform_indices = @transform_16, window_bounds = array<i64: 128, 128>}, {pipeline_mode = #tpu.pipeline_mode<synchronous>, transform_indices = @transform_17, window_bounds = array<i64: 1, 128>}, {pipeline_mode = #tpu.pipeline_mode<synchronous>, transform_indices = @transform_18, window_bounds = array<i64: 128, 128>}, {pipeline_mode = #tpu.pipeline_mode<synchronous>, transform_indices = @transform_19, window_bounds = array<i64: 1, 128>}, {transform_indices = @transform_20, window_bounds = array<i64: 16, 256>}, {transform_indices = @transform_21, window_bounds = array<i64: 16, 128>}, {transform_indices = @transform_22, window_bounds = array<i64: 16, 128>}]} {
    %c0 = arith.constant 0 : index
    %c0_0 = arith.constant 0 : index
    %0 = vector.load %arg1[%c0, %c0_0] : memref<16x128xbf16, #tpu.memory_space<vmem>>, vector<16x128xbf16>
    %c0_1 = arith.constant 0 : index
    %c0_2 = arith.constant 0 : index
    %1 = vector.load %arg3[%c0_1, %c0_2] : memref<128x768xbf16, #tpu.memory_space<vmem>>, vector<128x768xbf16>
    %cst = arith.constant dense<0.000000e+00> : vector<16x768xf32>
    %2 = tpu.matmul %0, %1, %cst {dimension_numbers = #tpu.dot_dimension_numbers<[1], [0], [0], [1], [0, 0, 1, 1], [], []>} : vector<16x128xbf16>, vector<128x768xbf16>, vector<16x768xf32> -> vector<16x768xf32>
    %c0_3 = arith.constant 0 : index
    %c0_4 = arith.constant 0 : index
    %3 = vector.load %arg2[%c0_3, %c0_4] : memref<16x128xbf16, #tpu.memory_space<vmem>>, vector<16x128xbf16>
    %c0_5 = arith.constant 0 : index
    %c0_6 = arith.constant 0 : index
    %4 = vector.load %arg4[%c0_5, %c0_6] : memref<128x768xbf16, #tpu.memory_space<vmem>>, vector<128x768xbf16>
    %cst_7 = arith.constant dense<0.000000e+00> : vector<16x768xf32>
    %5 = tpu.matmul %3, %4, %cst_7 {dimension_numbers = #tpu.dot_dimension_numbers<[1], [0], [0], [1], [0, 0, 1, 1], [], []>} : vector<16x128xbf16>, vector<128x768xbf16>, vector<16x768xf32> -> vector<16x768xf32>
    %6 = arith.addf %2, %5 : vector<16x768xf32>
    %c0_8 = arith.constant 0 : index
    %c0_9 = arith.constant 0 : index
    %7 = vector.load %arg5[%c0_8, %c0_9] : memref<1x768xf32, #tpu.memory_space<vmem>>, vector<1x768xf32>
    %8 = vector.broadcast %7 : vector<1x768xf32> to vector<16x768xf32>
    %9 = arith.addf %6, %8 : vector<16x768xf32>
    %cst_10 = arith.constant 0.000000e+00 : f32
    %10 = vector.broadcast %cst_10 : f32 to vector<16x768xf32>
    %11 = arith.maximumf %9, %10 : vector<16x768xf32>
    %12 = arith.truncf %11 : vector<16x768xf32> to vector<16x768xbf16>
    %c0_11 = arith.constant 0 : index
    %c0_12 = arith.constant 0 : index
    %13 = vector.load %arg6[%c0_11, %c0_12] : memref<768x512xbf16, #tpu.memory_space<vmem>>, vector<768x512xbf16>
    %cst_13 = arith.constant dense<0.000000e+00> : vector<16x512xf32>
    %14 = tpu.matmul %12, %13, %cst_13 {dimension_numbers = #tpu.dot_dimension_numbers<[1], [0], [0], [1], [0, 0, 1, 1], [], []>} : vector<16x768xbf16>, vector<768x512xbf16>, vector<16x512xf32> -> vector<16x512xf32>
    %c0_14 = arith.constant 0 : index
    %c0_15 = arith.constant 0 : index
    %15 = vector.load %arg7[%c0_14, %c0_15] : memref<1x512xf32, #tpu.memory_space<vmem>>, vector<1x512xf32>
    %16 = vector.broadcast %15 : vector<1x512xf32> to vector<16x512xf32>
    %17 = arith.addf %14, %16 : vector<16x512xf32>
    %cst_16 = arith.constant 0.000000e+00 : f32
    %18 = vector.broadcast %cst_16 : f32 to vector<16x512xf32>
    %19 = arith.maximumf %17, %18 : vector<16x512xf32>
    %20 = arith.truncf %19 : vector<16x512xf32> to vector<16x512xbf16>
    %c0_17 = arith.constant 0 : index
    %c0_18 = arith.constant 0 : index
    %21 = vector.load %arg8[%c0_17, %c0_18] : memref<512x256xbf16, #tpu.memory_space<vmem>>, vector<512x256xbf16>
    %cst_19 = arith.constant dense<0.000000e+00> : vector<16x256xf32>
    %22 = tpu.matmul %20, %21, %cst_19 {dimension_numbers = #tpu.dot_dimension_numbers<[1], [0], [0], [1], [0, 0, 1, 1], [], []>} : vector<16x512xbf16>, vector<512x256xbf16>, vector<16x256xf32> -> vector<16x256xf32>
    %c0_20 = arith.constant 0 : index
    %c0_21 = arith.constant 0 : index
    %23 = vector.load %arg9[%c0_20, %c0_21] : memref<1x256xf32, #tpu.memory_space<vmem>>, vector<1x256xf32>
    %24 = vector.broadcast %23 : vector<1x256xf32> to vector<16x256xf32>
    %25 = arith.addf %22, %24 : vector<16x256xf32>
    %26 = arith.truncf %25 : vector<16x256xf32> to vector<16x256xbf16>
    %c0_22 = arith.constant 0 : index
    %c0_23 = arith.constant 0 : index
    %27 = vector.load %arg21[%c0_22, %c0_23] : memref<16x256xbf16, #tpu.memory_space<vmem>>, vector<16x256xbf16>
    tpu.vector_store %arg21[%c0_22, %c0_23], %26 {strides = array<i32>} : memref<16x256xbf16, #tpu.memory_space<vmem>>, vector<16x256xbf16>,
    %c0_24 = arith.constant 0 : index
    %c0_25 = arith.constant 0 : index
    %28 = vector.load %arg10[%c0_24, %c0_25] : memref<256x128xbf16, #tpu.memory_space<vmem>>, vector<256x128xbf16>
    %cst_26 = arith.constant dense<0.000000e+00> : vector<16x128xf32>
    %29 = tpu.matmul %26, %28, %cst_26 {dimension_numbers = #tpu.dot_dimension_numbers<[1], [0], [0], [1], [0, 0, 1, 1], [], []>} : vector<16x256xbf16>, vector<256x128xbf16>, vector<16x128xf32> -> vector<16x128xf32>
    %c0_27 = arith.constant 0 : index
    %c0_28 = arith.constant 0 : index
    %30 = vector.load %arg11[%c0_27, %c0_28] : memref<1x128xf32, #tpu.memory_space<vmem>>, vector<1x128xf32>
    %31 = vector.broadcast %30 : vector<1x128xf32> to vector<16x128xf32>
    %32 = arith.addf %29, %31 : vector<16x128xf32>
    %cst_29 = arith.constant 0.000000e+00 : f32
    %33 = vector.broadcast %cst_29 : f32 to vector<16x128xf32>
    %34 = arith.maximumf %32, %33 : vector<16x128xf32>
    %35 = arith.truncf %34 : vector<16x128xf32> to vector<16x128xbf16>
    %c0_30 = arith.constant 0 : index
    %c0_31 = arith.constant 0 : index
    %36 = vector.load %arg12[%c0_30, %c0_31] : memref<128x64xbf16, #tpu.memory_space<vmem>>, vector<128x64xbf16>
    %cst_32 = arith.constant dense<0.000000e+00> : vector<16x64xf32>
    %37 = tpu.matmul %35, %36, %cst_32 {dimension_numbers = #tpu.dot_dimension_numbers<[1], [0], [0], [1], [0, 0, 1, 1], [], []>} : vector<16x128xbf16>, vector<128x64xbf16>, vector<16x64xf32> -> vector<16x64xf32>
    %c0_33 = arith.constant 0 : index
    %c0_34 = arith.constant 0 : index
    %38 = vector.load %arg13[%c0_33, %c0_34] : memref<1x64xf32, #tpu.memory_space<vmem>>, vector<1x64xf32>
    %39 = vector.broadcast %38 : vector<1x64xf32> to vector<16x64xf32>
    %40 = arith.addf %37, %39 : vector<16x64xf32>
    %cst_35 = arith.constant 0.000000e+00 : f32
    %41 = vector.broadcast %cst_35 : f32 to vector<16x64xf32>
    %42 = arith.maximumf %40, %41 : vector<16x64xf32>
    %43 = arith.truncf %42 : vector<16x64xf32> to vector<16x64xbf16>
    %c0_36 = arith.constant 0 : index
    %c0_37 = arith.constant 0 : index
    %44 = vector.load %arg14[%c0_36, %c0_37] : memref<64x128xbf16, #tpu.memory_space<vmem>>, vector<64x128xbf16>
    %cst_38 = arith.constant dense<0.000000e+00> : vector<16x128xf32>
    %45 = tpu.matmul %43, %44, %cst_38 {dimension_numbers = #tpu.dot_dimension_numbers<[1], [0], [0], [1], [0, 0, 1, 1], [], []>} : vector<16x64xbf16>, vector<64x128xbf16>, vector<16x128xf32> -> vector<16x128xf32>
    %c0_39 = arith.constant 0 : index
    %c0_40 = arith.constant 0 : index
    %46 = vector.load %arg15[%c0_39, %c0_40] : memref<1x128xf32, #tpu.memory_space<vmem>>, vector<1x128xf32>
    %47 = vector.broadcast %46 : vector<1x128xf32> to vector<16x128xf32>
    %48 = arith.addf %45, %47 : vector<16x128xf32>
    %49 = arith.negf %48 : vector<16x128xf32>
    %50 = math.exp %49 : vector<16x128xf32>
    %cst_41 = arith.constant 1.000000e+00 : f32
    %51 = vector.broadcast %cst_41 : f32 to vector<16x128xf32>
    %52 = arith.addf %51, %50 : vector<16x128xf32>
    %53 = arith.divf %51, %52 : vector<16x128xf32>
    %54 = arith.truncf %53 : vector<16x128xf32> to vector<16x128xbf16>
    %c0_42 = arith.constant 0 : index
    %c0_43 = arith.constant 0 : index
    %55 = vector.load %arg22[%c0_42, %c0_43] : memref<16x128xbf16, #tpu.memory_space<vmem>>, vector<16x128xbf16>
    tpu.vector_store %arg22[%c0_42, %c0_43], %54 {strides = array<i32>} : memref<16x128xbf16, #tpu.memory_space<vmem>>, vector<16x128xbf16>,
    %c0_44 = arith.constant 0 : index
    %c0_45 = arith.constant 0 : index
    %56 = vector.load %arg16[%c0_44, %c0_45] : memref<256x128xbf16, #tpu.memory_space<vmem>>, vector<256x128xbf16>
    %cst_46 = arith.constant dense<0.000000e+00> : vector<16x128xf32>
    %57 = tpu.matmul %26, %56, %cst_46 {dimension_numbers = #tpu.dot_dimension_numbers<[1], [0], [0], [1], [0, 0, 1, 1], [], []>} : vector<16x256xbf16>, vector<256x128xbf16>, vector<16x128xf32> -> vector<16x128xf32>
    %c0_47 = arith.constant 0 : index
    %c0_48 = arith.constant 0 : index
    %58 = vector.load %arg17[%c0_47, %c0_48] : memref<128x128xbf16, #tpu.memory_space<vmem>>, vector<128x128xbf16>
    %cst_49 = arith.constant dense<0.000000e+00> : vector<16x128xf32>
    %59 = tpu.matmul %54, %58, %cst_49 {dimension_numbers = #tpu.dot_dimension_numbers<[1], [0], [0], [1], [0, 0, 1, 1], [], []>} : vector<16x128xbf16>, vector<128x128xbf16>, vector<16x128xf32> -> vector<16x128xf32>
    %60 = arith.addf %57, %59 : vector<16x128xf32>
    %c0_50 = arith.constant 0 : index
    %c0_51 = arith.constant 0 : index
    %61 = vector.load %arg18[%c0_50, %c0_51] : memref<1x128xf32, #tpu.memory_space<vmem>>, vector<1x128xf32>
    %62 = vector.broadcast %61 : vector<1x128xf32> to vector<16x128xf32>
    %63 = arith.addf %60, %62 : vector<16x128xf32>
    %cst_52 = arith.constant 0.000000e+00 : f32
    %64 = vector.broadcast %cst_52 : f32 to vector<16x128xf32>
    %65 = arith.maximumf %63, %64 : vector<16x128xf32>
    %66 = arith.truncf %65 : vector<16x128xf32> to vector<16x128xbf16>
    %c0_53 = arith.constant 0 : index
    %c0_54 = arith.constant 0 : index
    %67 = vector.load %arg19[%c0_53, %c0_54] : memref<128x128xbf16, #tpu.memory_space<vmem>>, vector<128x128xbf16>
    %cst_55 = arith.constant dense<0.000000e+00> : vector<16x128xf32>
    %68 = tpu.matmul %66, %67, %cst_55 {dimension_numbers = #tpu.dot_dimension_numbers<[1], [0], [0], [1], [0, 0, 1, 1], [], []>} : vector<16x128xbf16>, vector<128x128xbf16>, vector<16x128xf32> -> vector<16x128xf32>
    %c0_56 = arith.constant 0 : index
    %c0_57 = arith.constant 0 : index
    %69 = vector.load %arg20[%c0_56, %c0_57] : memref<1x128xf32, #tpu.memory_space<vmem>>, vector<1x128xf32>
    %70 = vector.broadcast %69 : vector<1x128xf32> to vector<16x128xf32>
    %71 = arith.addf %68, %70 : vector<16x128xf32>
    %72 = math.tanh %71 : vector<16x128xf32>
    %73 = arith.truncf %72 : vector<16x128xf32> to vector<16x128xbf16>
    %c0_58 = arith.constant 0 : index
    %c0_59 = arith.constant 0 : index
    %74 = vector.load %arg23[%c0_58, %c0_59] : memref<16x128xbf16, #tpu.memory_space<vmem>>, vector<16x128xbf16>
    tpu.vector_store %arg23[%c0_58, %c0_59], %73 {strides = array<i32>} : memref<16x128xbf16, #tpu.memory_space<vmem>>, vector<16x128xbf16>,
    return
  }
  func.func @transform_0(%arg0: i32) -> (i32, i32) {
    %c0_i32 = arith.constant 0 : i32
    %c0_i32_0 = arith.constant 0 : i32
    return %arg0, %c0_i32 : i32, i32
  }
  func.func @transform_1(%arg0: i32) -> (i32, i32) {
    %c0_i32 = arith.constant 0 : i32
    %c0_i32_0 = arith.constant 0 : i32
    return %arg0, %c0_i32 : i32, i32
  }
  func.func @transform_2(%arg0: i32) -> (i32, i32) {
    %c0_i32 = arith.constant 0 : i32
    %c0_i32_0 = arith.constant 0 : i32
    %c0_i32_1 = arith.constant 0 : i32
    return %c0_i32, %c0_i32_0 : i32, i32
  }
  func.func @transform_3(%arg0: i32) -> (i32, i32) {
    %c0_i32 = arith.constant 0 : i32
    %c0_i32_0 = arith.constant 0 : i32
    %c0_i32_1 = arith.constant 0 : i32
    return %c0_i32, %c0_i32_0 : i32, i32
  }
  func.func @transform_4(%arg0: i32) -> (i32, i32) {
    %c0_i32 = arith.constant 0 : i32
    %c0_i32_0 = arith.constant 0 : i32
    %c0_i32_1 = arith.constant 0 : i32
    return %c0_i32, %c0_i32_0 : i32, i32
  }
  func.func @transform_5(%arg0: i32) -> (i32, i32) {
    %c0_i32 = arith.constant 0 : i32
    %c0_i32_0 = arith.constant 0 : i32
    %c0_i32_1 = arith.constant 0 : i32
    return %c0_i32, %c0_i32_0 : i32, i32
  }
  func.func @transform_6(%arg0: i32) -> (i32, i32) {
    %c0_i32 = arith.constant 0 : i32
    %c0_i32_0 = arith.constant 0 : i32
    %c0_i32_1 = arith.constant 0 : i32
    return %c0_i32, %c0_i32_0 : i32, i32
  }
  func.func @transform_7(%arg0: i32) -> (i32, i32) {
    %c0_i32 = arith.constant 0 : i32
    %c0_i32_0 = arith.constant 0 : i32
    %c0_i32_1 = arith.constant 0 : i32
    return %c0_i32, %c0_i32_0 : i32, i32
  }
  func.func @transform_8(%arg0: i32) -> (i32, i32) {
    %c0_i32 = arith.constant 0 : i32
    %c0_i32_0 = arith.constant 0 : i32
    %c0_i32_1 = arith.constant 0 : i32
    return %c0_i32, %c0_i32_0 : i32, i32
  }
  func.func @transform_9(%arg0: i32) -> (i32, i32) {
    %c0_i32 = arith.constant 0 : i32
    %c0_i32_0 = arith.constant 0 : i32
    %c0_i32_1 = arith.constant 0 : i32
    return %c0_i32, %c0_i32_0 : i32, i32
  }
  func.func @transform_10(%arg0: i32) -> (i32, i32) {
    %c0_i32 = arith.constant 0 : i32
    %c0_i32_0 = arith.constant 0 : i32
    %c0_i32_1 = arith.constant 0 : i32
    return %c0_i32, %c0_i32_0 : i32, i32
  }
  func.func @transform_11(%arg0: i32) -> (i32, i32) {
    %c0_i32 = arith.constant 0 : i32
    %c0_i32_0 = arith.constant 0 : i32
    %c0_i32_1 = arith.constant 0 : i32
    return %c0_i32, %c0_i32_0 : i32, i32
  }
  func.func @transform_12(%arg0: i32) -> (i32, i32) {
    %c0_i32 = arith.constant 0 : i32
    %c0_i32_0 = arith.constant 0 : i32
    %c0_i32_1 = arith.constant 0 : i32
    return %c0_i32, %c0_i32_0 : i32, i32
  }
  func.func @transform_13(%arg0: i32) -> (i32, i32) {
    %c0_i32 = arith.constant 0 : i32
    %c0_i32_0 = arith.constant 0 : i32
    %c0_i32_1 = arith.constant 0 : i32
    return %c0_i32, %c0_i32_0 : i32, i32
  }
  func.func @transform_14(%arg0: i32) -> (i32, i32) {
    %c0_i32 = arith.constant 0 : i32
    %c0_i32_0 = arith.constant 0 : i32
    %c0_i32_1 = arith.constant 0 : i32
    return %c0_i32, %c0_i32_0 : i32, i32
  }
  func.func @transform_15(%arg0: i32) -> (i32, i32) {
    %c0_i32 = arith.constant 0 : i32
    %c0_i32_0 = arith.constant 0 : i32
    %c0_i32_1 = arith.constant 0 : i32
    return %c0_i32, %c0_i32_0 : i32, i32
  }
  func.func @transform_16(%arg0: i32) -> (i32, i32) {
    %c0_i32 = arith.constant 0 : i32
    %c0_i32_0 = arith.constant 0 : i32
    %c0_i32_1 = arith.constant 0 : i32
    return %c0_i32, %c0_i32_0 : i32, i32
  }
  func.func @transform_17(%arg0: i32) -> (i32, i32) {
    %c0_i32 = arith.constant 0 : i32
    %c0_i32_0 = arith.constant 0 : i32
    %c0_i32_1 = arith.constant 0 : i32
    return %c0_i32, %c0_i32_0 : i32, i32
  }
  func.func @transform_18(%arg0: i32) -> (i32, i32) {
    %c0_i32 = arith.constant 0 : i32
    %c0_i32_0 = arith.constant 0 : i32
    %c0_i32_1 = arith.constant 0 : i32
    return %c0_i32, %c0_i32_0 : i32, i32
  }
  func.func @transform_19(%arg0: i32) -> (i32, i32) {
    %c0_i32 = arith.constant 0 : i32
    %c0_i32_0 = arith.constant 0 : i32
    %c0_i32_1 = arith.constant 0 : i32
    return %c0_i32, %c0_i32_0 : i32, i32
  }
  func.func @transform_20(%arg0: i32) -> (i32, i32) {
    %c0_i32 = arith.constant 0 : i32
    %c0_i32_0 = arith.constant 0 : i32
    return %arg0, %c0_i32 : i32, i32
  }
  func.func @transform_21(%arg0: i32) -> (i32, i32) {
    %c0_i32 = arith.constant 0 : i32
    %c0_i32_0 = arith.constant 0 : i32
    return %arg0, %c0_i32 : i32, i32
  }
  func.func @transform_22(%arg0: i32) -> (i32, i32) {
    %c0_i32 = arith.constant 0 : i32
    %c0_i32_0 = arith.constant 0 : i32
    return %arg0, %c0_i32 : i32, i32
  }
}

</mosaic_0001>

<llo_original>
// kernel: reflective_thinking_forward.1
$region0: #{reflective_thinking_forward.1}
  #allocation0 [shape = 'u32[]', space=smem, size = 0x4, offset = 0x4, fixed_abs, tag = 'smem constant byte address 0x4 - core index']
  #allocation1 [shape = 'u32[144,128]{1,0:T(1,128)}', space=vmem, size = 0x12000, scoped, tag = 'internal scratch']
  %s0 = inlined_call_operand.vmem [shape: bf16[16,128], index: 0, kind: input, shape index: {}]
  %s1 = inlined_call_operand.vmem [shape: bf16[16,128], index: 1, kind: input, shape index: {}]
  %s2 = inlined_call_operand.hbm [shape: bf16[128,768], index: 2, kind: input, shape index: {}]
  %s3 = inlined_call_operand.hbm [shape: bf16[128,768], index: 3, kind: input, shape index: {}]
  %s4 = inlined_call_operand.vmem [shape: f32[1,768], index: 4, kind: input, shape index: {}]
  %s5 = inlined_call_operand.hbm [shape: bf16[768,512], index: 5, kind: input, shape index: {}]
  %s6 = inlined_call_operand.vmem [shape: f32[1,512], index: 6, kind: input, shape index: {}]
  %s7 = inlined_call_operand.hbm [shape: bf16[512,256], index: 7, kind: input, shape index: {}]
  %s8 = inlined_call_operand.vmem [shape: f32[1,256], index: 8, kind: input, shape index: {}]
  %s9 = inlined_call_operand.vmem [shape: bf16[256,128], index: 9, kind: input, shape index: {}]
  %s10 = inlined_call_operand.vmem [shape: f32[1,128], index: 10, kind: input, shape index: {}]
  %s11 = inlined_call_operand.vmem [shape: bf16[128,64], index: 11, kind: input, shape index: {}]
  %s12 = inlined_call_operand.vmem [shape: f32[1,64], index: 12, kind: input, shape index: {}]
  %s13 = inlined_call_operand.hbm [shape: bf16[64,128], index: 13, kind: input, shape index: {}]
  %s14 = inlined_call_operand.vmem [shape: f32[1,128], index: 14, kind: input, shape index: {}]
  %s15 = inlined_call_operand.hbm [shape: bf16[256,128], index: 15, kind: input, shape index: {}]
  %s16 = inlined_call_operand.hbm [shape: bf16[128,128], index: 16, kind: input, shape index: {}]
  %s17 = inlined_call_operand.vmem [shape: f32[1,128], index: 17, kind: input, shape index: {}]
  %s18 = inlined_call_operand.hbm [shape: bf16[128,128], index: 18, kind: input, shape index: {}]
  %s19 = inlined_call_operand.vmem [shape: f32[1,128], index: 19, kind: input, shape index: {}]
  %s20 = inlined_call_operand.vmem [shape: bf16[16,256], index: 20, kind: output, shape index: {0}]
  %s21 = inlined_call_operand.vmem [shape: bf16[16,128], index: 21, kind: output, shape index: {1}]
  %s22 = inlined_call_operand.vmem [shape: bf16[16,128], index: 22, kind: output, shape index: {2}]
  %23 = xla_tuple %s20, %s21, %s22
  %s24 = sld [smem:[#allocation0]]
  $region138: #{reflective_thinking_forward.1} parent=0
    _
  %s26 = ssub.s32 1, %s24
  %s27 = scalar_select 0, %s26, %s24
  $region1: #{reflective_thinking_forward.1} parent=0
    #allocation2 [shape = 'u8[196608]{0}', space=vmem, size = 0x30000, scoped, tag = 'input window, operand 2, single buffered']
    #allocation3 [shape = 's32[1]{0}', space=sflag, size = 0x4, scoped, tag = 'scoped memory for reflective_thinking_forward.1']
    #allocation4 [shape = 'u8[196608]{0}', space=vmem, size = 0x30000, scoped, tag = 'input window, operand 3, single buffered']
    #allocation5 [shape = 's32[1]{0}', space=sflag, size = 0x4, scoped, tag = 'scoped memory for reflective_thinking_forward.1']
    #allocation6 [shape = 'u8[786432]{0}', space=vmem, size = 0xc0000, scoped, tag = 'input window, operand 5, single buffered']
    #allocation7 [shape = 'u8[262144]{0}', space=vmem, size = 0x40000, scoped, tag = 'input window, operand 7, single buffered']
    #allocation8 [shape = 's32[1]{0}', space=sflag, size = 0x4, scoped, tag = 'scoped memory for reflective_thinking_forward.1']
    #allocation9 [shape = 'u8[16384]{0}', space=vmem, size = 0x4000, scoped, tag = 'input window, operand 13, single buffered']
    #allocation10 [shape = 'u8[65536]{0}', space=vmem, size = 0x10000, scoped, tag = 'input window, operand 15, single buffered']
    #allocation11 [shape = 's32[1]{0}', space=sflag, size = 0x4, scoped, tag = 'scoped memory for reflective_thinking_forward.1']
    #allocation12 [shape = 'u8[32768]{0}', space=vmem, size = 0x8000, scoped, tag = 'input window, operand 16, single buffered']
    #allocation13 [shape = 'u8[32768]{0}', space=vmem, size = 0x8000, scoped, tag = 'input window, operand 18, single buffered']
    #allocation14 [shape = 's32[1]{0}', space=sflag, size = 0x4, scoped, tag = 'scoped memory for reflective_thinking_forward.1']
    %28 = vsyncpa [#allocation3], 0
    %29 = vsyncpa [#allocation5], 0
    %30 = vsyncpa [#allocation8], 0
    %31 = vsyncpa [#allocation11], 0
    %32 = vsyncpa [#allocation14], 0
    // Predicated region
    $region2: #{reflective_thinking_forward.1} parent=1 // pred_check
      _
    $region3: #{reflective_thinking_forward.1} parent=1 // pred_check_branch
      %34 = sbr.rel (0) target = $region5
    $region4: #{reflective_thinking_forward.1} parent=1 // pred_region
      _
    $region5: #{reflective_thinking_forward.1} parent=1 // pred_fallthru
      _
    // Predicated region
    $region6: #{reflective_thinking_forward.1} parent=1 // pred_check
      _
    $region7: #{reflective_thinking_forward.1} parent=1 // pred_check_branch
      %36 = sbr.rel (0) target = $region9
    $region8: #{reflective_thinking_forward.1} parent=1 // pred_region
      _
    $region9: #{reflective_thinking_forward.1} parent=1 // pred_fallthru
      _
    // Predicated region
    $region10: #{reflective_thinking_forward.1} parent=1 // pred_check
      _
    $region11: #{reflective_thinking_forward.1} parent=1 // pred_check_branch
      %38 = sbr.rel (0) target = $region13
    $region12: #{reflective_thinking_forward.1} parent=1 // pred_region
      %s40 = ssub.s32 6144, 6144
      %41 = vsyncadd [#allocation3], %s40
      %s42 = sshll.u32 [#allocation2], 4
      %s43 = int_to_ptr.vmem [resolvable:$true] %s42
      %48 = dma.hbm_to_vmem [thread:$0]  %s2, 6144, %s43, [#allocation3], 384, 384, 24
    $region13: #{reflective_thinking_forward.1} parent=1 // pred_fallthru
      _
    // Predicated region
    $region14: #{reflective_thinking_forward.1} parent=1 // pred_check
      _
    $region15: #{reflective_thinking_forward.1} parent=1 // pred_check_branch
      %50 = sbr.rel (0) target = $region17
    $region16: #{reflective_thinking_forward.1} parent=1 // pred_region
      %s52 = ssub.s32 6144, 6144
      %53 = vsyncadd [#allocation5], %s52
      %s54 = sshll.u32 [#allocation4], 4
      %s55 = int_to_ptr.vmem [resolvable:$true] %s54
      %60 = dma.hbm_to_vmem [thread:$0]  %s3, 6144, %s55, [#allocation5], 384, 384, 24
    $region17: #{reflective_thinking_forward.1} parent=1 // pred_fallthru
      _
    // Predicated region
    $region18: #{reflective_thinking_forward.1} parent=1 // pred_check
      _
    $region19: #{reflective_thinking_forward.1} parent=1 // pred_check_branch
      %62 = sbr.rel (0) target = $region21
    $region20: #{reflective_thinking_forward.1} parent=1 // pred_region
      _
    $region21: #{reflective_thinking_forward.1} parent=1 // pred_fallthru
      _
    // Predicated region
    $region22: #{reflective_thinking_forward.1} parent=1 // pred_check
      _
    $region23: #{reflective_thinking_forward.1} parent=1 // pred_check_branch
      %64 = sbr.rel (0) target = $region25
    $region24: #{reflective_thinking_forward.1} parent=1 // pred_region
      %s66 = ssub.s32 24576, 24576
      %67 = vsyncadd [#allocation5], %s66
      %s68 = sshll.u32 [#allocation6], 4
      %s69 = int_to_ptr.vmem [resolvable:$true] %s68
      %74 = dma.hbm_to_vmem [thread:$0]  %s5, 24576, %s69, [#allocation5], 256, 256, 16
    $region25: #{reflective_thinking_forward.1} parent=1 // pred_fallthru
      _
    // Predicated region
    $region26: #{reflective_thinking_forward.1} parent=1 // pred_check
      _
    $region27: #{reflective_thinking_forward.1} parent=1 // pred_check_branch
      %76 = sbr.rel (0) target = $region29
    $region28: #{reflective_thinking_forward.1} parent=1 // pred_region
      _
    $region29: #{reflective_thinking_forward.1} parent=1 // pred_fallthru
      _
    // Predicated region
    $region30: #{reflective_thinking_forward.1} parent=1 // pred_check
      _
    $region31: #{reflective_thinking_forward.1} parent=1 // pred_check_branch
      %78 = sbr.rel (0) target = $region33
    $region32: #{reflective_thinking_forward.1} parent=1 // pred_region
      %s80 = ssub.s32 8192, 8192
      %81 = vsyncadd [#allocation8], %s80
      %s82 = sshll.u32 [#allocation7], 4
      %s83 = int_to_ptr.vmem [resolvable:$true] %s82
      %88 = dma.hbm_to_vmem [thread:$0]  %s7, 8192, %s83, [#allocation8], 128, 128, 8
    $region33: #{reflective_thinking_forward.1} parent=1 // pred_fallthru
      _
    // Predicated region
    $region34: #{reflective_thinking_forward.1} parent=1 // pred_check
      _
    $region35: #{reflective_thinking_forward.1} parent=1 // pred_check_branch
      %90 = sbr.rel (0) target = $region37
    $region36: #{reflective_thinking_forward.1} parent=1 // pred_region
      _
    $region37: #{reflective_thinking_forward.1} parent=1 // pred_fallthru
      _
    // Predicated region
    $region38: #{reflective_thinking_forward.1} parent=1 // pred_check
      _
    $region39: #{reflective_thinking_forward.1} parent=1 // pred_check_branch
      %92 = sbr.rel (0) target = $region41
    $region40: #{reflective_thinking_forward.1} parent=1 // pred_region
      _
    $region41: #{reflective_thinking_forward.1} parent=1 // pred_fallthru
      _
    // Predicated region
    $region42: #{reflective_thinking_forward.1} parent=1 // pred_check
      _
    $region43: #{reflective_thinking_forward.1} parent=1 // pred_check_branch
      %94 = sbr.rel (0) target = $region45
    $region44: #{reflective_thinking_forward.1} parent=1 // pred_region
      _
    $region45: #{reflective_thinking_forward.1} parent=1 // pred_fallthru
      _
    // Predicated region
    $region46: #{reflective_thinking_forward.1} parent=1 // pred_check
      _
    $region47: #{reflective_thinking_forward.1} parent=1 // pred_check_branch
      %96 = sbr.rel (0) target = $region49
    $region48: #{reflective_thinking_forward.1} parent=1 // pred_region
      _
    $region49: #{reflective_thinking_forward.1} parent=1 // pred_fallthru
      _
    // Predicated region
    $region50: #{reflective_thinking_forward.1} parent=1 // pred_check
      _
    $region51: #{reflective_thinking_forward.1} parent=1 // pred_check_branch
      %98 = sbr.rel (0) target = $region53
    $region52: #{reflective_thinking_forward.1} parent=1 // pred_region
      _
    $region53: #{reflective_thinking_forward.1} parent=1 // pred_fallthru
      _
    // Predicated region
    $region54: #{reflective_thinking_forward.1} parent=1 // pred_check
      _
    $region55: #{reflective_thinking_forward.1} parent=1 // pred_check_branch
      %100 = sbr.rel (0) target = $region57
    $region56: #{reflective_thinking_forward.1} parent=1 // pred_region
      %s102 = ssub.s32 512, 512
      %103 = vsyncadd [#allocation8], %s102
      %s104 = sshll.u32 [#allocation9], 4
      %s105 = int_to_ptr.vmem [resolvable:$true] %s104
      %110 = dma.hbm_to_vmem [thread:$0]  %s13, 512, %s105, [#allocation8], 64, 64, 4
    $region57: #{reflective_thinking_forward.1} parent=1 // pred_fallthru
      _
    // Predicated region
    $region58: #{reflective_thinking_forward.1} parent=1 // pred_check
      _
    $region59: #{reflective_thinking_forward.1} parent=1 // pred_check_branch
      %112 = sbr.rel (0) target = $region61
    $region60: #{reflective_thinking_forward.1} parent=1 // pred_region
      _
    $region61: #{reflective_thinking_forward.1} parent=1 // pred_fallthru
      _
    // Predicated region
    $region62: #{reflective_thinking_forward.1} parent=1 // pred_check
      _
    $region63: #{reflective_thinking_forward.1} parent=1 // pred_check_branch
      %114 = sbr.rel (0) target = $region65
    $region64: #{reflective_thinking_forward.1} parent=1 // pred_region
      %s116 = ssub.s32 2048, 2048
      %117 = vsyncadd [#allocation11], %s116
      %s118 = sshll.u32 [#allocation10], 4
      %s119 = int_to_ptr.vmem [resolvable:$true] %s118
      %124 = dma.hbm_to_vmem [thread:$0]  %s15, 2048, %s119, [#allocation11], 64, 64, 4
    $region65: #{reflective_thinking_forward.1} parent=1 // pred_fallthru
      _
    // Predicated region
    $region66: #{reflective_thinking_forward.1} parent=1 // pred_check
      _
    $region67: #{reflective_thinking_forward.1} parent=1 // pred_check_branch
      %126 = sbr.rel (0) target = $region69
    $region68: #{reflective_thinking_forward.1} parent=1 // pred_region
      %s128 = ssub.s32 1024, 1024
      %129 = vsyncadd [#allocation11], %s128
      %s130 = sshll.u32 [#allocation12], 4
      %s131 = int_to_ptr.vmem [resolvable:$true] %s130
      %136 = dma.hbm_to_vmem [thread:$0]  %s16, 1024, %s131, [#allocation11], 64, 64, 4
    $region69: #{reflective_thinking_forward.1} parent=1 // pred_fallthru
      _
    // Predicated region
    $region70: #{reflective_thinking_forward.1} parent=1 // pred_check
      _
    $region71: #{reflective_thinking_forward.1} parent=1 // pred_check_branch
      %138 = sbr.rel (0) target = $region73
    $region72: #{reflective_thinking_forward.1} parent=1 // pred_region
      _
    $region73: #{reflective_thinking_forward.1} parent=1 // pred_fallthru
      _
    // Predicated region
    $region74: #{reflective_thinking_forward.1} parent=1 // pred_check
      _
    $region75: #{reflective_thinking_forward.1} parent=1 // pred_check_branch
      %140 = sbr.rel (0) target = $region77
    $region76: #{reflective_thinking_forward.1} parent=1 // pred_region
      %s142 = ssub.s32 1024, 1024
      %143 = vsyncadd [#allocation14], %s142
      %s144 = sshll.u32 [#allocation13], 4
      %s145 = int_to_ptr.vmem [resolvable:$true] %s144
      %150 = dma.hbm_to_vmem [thread:$0]  %s18, 1024, %s145, [#allocation14], 64, 64, 4
    $region77: #{reflective_thinking_forward.1} parent=1 // pred_fallthru
      _
    // Predicated region
    $region78: #{reflective_thinking_forward.1} parent=1 // pred_check
      _
    $region79: #{reflective_thinking_forward.1} parent=1 // pred_check_branch
      %152 = sbr.rel (0) target = $region81
    $region80: #{reflective_thinking_forward.1} parent=1 // pred_region
      _
    $region81: #{reflective_thinking_forward.1} parent=1 // pred_fallthru
      _
    // Predicated region
    $region82: #{reflective_thinking_forward.1} parent=1 // pred_check
      _
    $region83: #{reflective_thinking_forward.1} parent=1 // pred_check_branch
      %154 = sbr.rel (0) target = $region85
    $region84: #{reflective_thinking_forward.1} parent=1 // pred_region
      %155 = dma.done [#allocation3], 6144
    $region85: #{reflective_thinking_forward.1} parent=1 // pred_fallthru
      _
    // Predicated region
    $region86: #{reflective_thinking_forward.1} parent=1 // pred_check
      _
    $region87: #{reflective_thinking_forward.1} parent=1 // pred_check_branch
      %157 = sbr.rel (0) target = $region89
    $region88: #{reflective_thinking_forward.1} parent=1 // pred_region
      %158 = dma.done [#allocation5], 6144
    $region89: #{reflective_thinking_forward.1} parent=1 // pred_fallthru
      _
    // Predicated region
    $region90: #{reflective_thinking_forward.1} parent=1 // pred_check
      _
    $region91: #{reflective_thinking_forward.1} parent=1 // pred_check_branch
      %160 = sbr.rel (0) target = $region93
    $region92: #{reflective_thinking_forward.1} parent=1 // pred_region
      %161 = dma.done [#allocation5], 24576
    $region93: #{reflective_thinking_forward.1} parent=1 // pred_fallthru
      _
    // Predicated region
    $region94: #{reflective_thinking_forward.1} parent=1 // pred_check
      _
    $region95: #{reflective_thinking_forward.1} parent=1 // pred_check_branch
      %163 = sbr.rel (0) target = $region97
    $region96: #{reflective_thinking_forward.1} parent=1 // pred_region
      %164 = dma.done [#allocation8], 8192
    $region97: #{reflective_thinking_forward.1} parent=1 // pred_fallthru
      _
    // Predicated region
    $region98: #{reflective_thinking_forward.1} parent=1 // pred_check
      _
    $region99: #{reflective_thinking_forward.1} parent=1 // pred_check_branch
      %166 = sbr.rel (0) target = $region101
    $region100: #{reflective_thinking_forward.1} parent=1 // pred_region
      %167 = dma.done [#allocation8], 512
    $region101: #{reflective_thinking_forward.1} parent=1 // pred_fallthru
      _
    // Predicated region
    $region102: #{reflective_thinking_forward.1} parent=1 // pred_check
      _
    $region103: #{reflective_thinking_forward.1} parent=1 // pred_check_branch
      %169 = sbr.rel (0) target = $region105
    $region104: #{reflective_thinking_forward.1} parent=1 // pred_region
      %170 = dma.done [#allocation11], 2048
    $region105: #{reflective_thinking_forward.1} parent=1 // pred_fallthru
      _
    // Predicated region
    $region106: #{reflective_thinking_forward.1} parent=1 // pred_check
      _
    $region107: #{reflective_thinking_forward.1} parent=1 // pred_check_branch
      %172 = sbr.rel (0) target = $region109
    $region108: #{reflective_thinking_forward.1} parent=1 // pred_region
      %173 = dma.done [#allocation11], 1024
    $region109: #{reflective_thinking_forward.1} parent=1 // pred_fallthru
      _
    // Predicated region
    $region110: #{reflective_thinking_forward.1} parent=1 // pred_check
      _
    $region111: #{reflective_thinking_forward.1} parent=1 // pred_check_branch
      %175 = sbr.rel (0) target = $region113
    $region112: #{reflective_thinking_forward.1} parent=1 // pred_region
      %176 = dma.done [#allocation14], 1024
    $region113: #{reflective_thinking_forward.1} parent=1 // pred_fallthru
      _
    %v178 = vld [vmem:[%s0] sm:$0xf]
    %v179 = vld [vmem:[%s0 + $0x4] sm:$0xf]
    %v180 = vld [vmem:[#allocation2] sm:$0xff]
    %v181 = vld [vmem:[#allocation2 + $0x8] sm:$0xff]
    %v182 = vld [vmem:[#allocation2 + $0x10] sm:$0xff]
    %v183 = vld [vmem:[#allocation2 + $0x18] sm:$0xff]
    %v184 = vld [vmem:[#allocation2 + $0x20] sm:$0xff]
    %v185 = vld [vmem:[#allocation2 + $0x28] sm:$0xff]
    %v186 = vld [vmem:[#allocation2 + $0x30] sm:$0xff]
    %v187 = vld [vmem:[#allocation2 + $0x38] sm:$0xff]
    %v188 = vld [vmem:[#allocation2 + $0x40] sm:$0xff]
    %v189 = vld [vmem:[#allocation2 + $0x48] sm:$0xff]
    %v190 = vld [vmem:[#allocation2 + $0x50] sm:$0xff]
    %v191 = vld [vmem:[#allocation2 + $0x58] sm:$0xff]
    %v192 = vld [vmem:[#allocation2 + $0x60] sm:$0xff]
    %v193 = vld [vmem:[#allocation2 + $0x68] sm:$0xff]
    %v194 = vld [vmem:[#allocation2 + $0x70] sm:$0xff]
    %v195 = vld [vmem:[#allocation2 + $0x78] sm:$0xff]
    %v196 = vld [vmem:[#allocation2 + $0x80] sm:$0xff]
    %v197 = vld [vmem:[#allocation2 + $0x88] sm:$0xff]
    %v198 = vld [vmem:[#allocation2 + $0x90] sm:$0xff]
    %v199 = vld [vmem:[#allocation2 + $0x98] sm:$0xff]
    %v200 = vld [vmem:[#allocation2 + $0xa0] sm:$0xff]
    %v201 = vld [vmem:[#allocation2 + $0xa8] sm:$0xff]
    %v202 = vld [vmem:[#allocation2 + $0xb0] sm:$0xff]
    %v203 = vld [vmem:[#allocation2 + $0xb8] sm:$0xff]
    %v204 = vld [vmem:[#allocation2 + $0xc0] sm:$0xff]
    %v205 = vld [vmem:[#allocation2 + $0xc8] sm:$0xff]
    %v206 = vld [vmem:[#allocation2 + $0xd0] sm:$0xff]
    %v207 = vld [vmem:[#allocation2 + $0xd8] sm:$0xff]
    %v208 = vld [vmem:[#allocation2 + $0xe0] sm:$0xff]
    %v209 = vld [vmem:[#allocation2 + $0xe8] sm:$0xff]
    %v210 = vld [vmem:[#allocation2 + $0xf0] sm:$0xff]
    %v211 = vld [vmem:[#allocation2 + $0xf8] sm:$0xff]
    %v212 = vld [vmem:[#allocation2 + $0x100] sm:$0xff]
    %v213 = vld [vmem:[#allocation2 + $0x108] sm:$0xff]
    %v214 = vld [vmem:[#allocation2 + $0x110] sm:$0xff]
    %v215 = vld [vmem:[#allocation2 + $0x118] sm:$0xff]
    %v216 = vld [vmem:[#allocation2 + $0x120] sm:$0xff]
    %v217 = vld [vmem:[#allocation2 + $0x128] sm:$0xff]
    %v218 = vld [vmem:[#allocation2 + $0x130] sm:$0xff]
    %v219 = vld [vmem:[#allocation2 + $0x138] sm:$0xff]
    %v220 = vld [vmem:[#allocation2 + $0x140] sm:$0xff]
    %v221 = vld [vmem:[#allocation2 + $0x148] sm:$0xff]
    %v222 = vld [vmem:[#allocation2 + $0x150] sm:$0xff]
    %v223 = vld [vmem:[#allocation2 + $0x158] sm:$0xff]
    %v224 = vld [vmem:[#allocation2 + $0x160] sm:$0xff]
    %v225 = vld [vmem:[#allocation2 + $0x168] sm:$0xff]
    %v226 = vld [vmem:[#allocation2 + $0x170] sm:$0xff]
    %v227 = vld [vmem:[#allocation2 + $0x178] sm:$0xff]
    %v228 = vld [vmem:[%s1] sm:$0xf]
    %v229 = vld [vmem:[%s1 + $0x4] sm:$0xf]
    %v230 = vld [vmem:[#allocation4] sm:$0xff]
    %v231 = vld [vmem:[#allocation4 + $0x8] sm:$0xff]
    %v232 = vld [vmem:[#allocation4 + $0x10] sm:$0xff]
    %v233 = vld [vmem:[#allocation4 + $0x18] sm:$0xff]
    %v234 = vld [vmem:[#allocation4 + $0x20] sm:$0xff]
    %v235 = vld [vmem:[#allocation4 + $0x28] sm:$0xff]
    %v236 = vld [vmem:[#allocation4 + $0x30] sm:$0xff]
    %v237 = vld [vmem:[#allocation4 + $0x38] sm:$0xff]
    %v238 = vld [vmem:[#allocation4 + $0x40] sm:$0xff]
    %v239 = vld [vmem:[#allocation4 + $0x48] sm:$0xff]
    %v240 = vld [vmem:[#allocation4 + $0x50] sm:$0xff]
    %v241 = vld [vmem:[#allocation4 + $0x58] sm:$0xff]
    %v242 = vld [vmem:[#allocation4 + $0x60] sm:$0xff]
    %v243 = vld [vmem:[#allocation4 + $0x68] sm:$0xff]
    %v244 = vld [vmem:[#allocation4 + $0x70] sm:$0xff]
    %v245 = vld [vmem:[#allocation4 + $0x78] sm:$0xff]
    %v246 = vld [vmem:[#allocation4 + $0x80] sm:$0xff]
    %v247 = vld [vmem:[#allocation4 + $0x88] sm:$0xff]
    %v248 = vld [vmem:[#allocation4 + $0x90] sm:$0xff]
    %v249 = vld [vmem:[#allocation4 + $0x98] sm:$0xff]
    %v250 = vld [vmem:[#allocation4 + $0xa0] sm:$0xff]
    %v251 = vld [vmem:[#allocation4 + $0xa8] sm:$0xff]
    %v252 = vld [vmem:[#allocation4 + $0xb0] sm:$0xff]
    %v253 = vld [vmem:[#allocation4 + $0xb8] sm:$0xff]
    %v254 = vld [vmem:[#allocation4 + $0xc0] sm:$0xff]
    %v255 = vld [vmem:[#allocation4 + $0xc8] sm:$0xff]
    %v256 = vld [vmem:[#allocation4 + $0xd0] sm:$0xff]
    %v257 = vld [vmem:[#allocation4 + $0xd8] sm:$0xff]
    %v258 = vld [vmem:[#allocation4 + $0xe0] sm:$0xff]
    %v259 = vld [vmem:[#allocation4 + $0xe8] sm:$0xff]
    %v260 = vld [vmem:[#allocation4 + $0xf0] sm:$0xff]
    %v261 = vld [vmem:[#allocation4 + $0xf8] sm:$0xff]
    %v262 = vld [vmem:[#allocation4 + $0x100] sm:$0xff]
    %v263 = vld [vmem:[#allocation4 + $0x108] sm:$0xff]
    %v264 = vld [vmem:[#allocation4 + $0x110] sm:$0xff]
    %v265 = vld [vmem:[#allocation4 + $0x118] sm:$0xff]
    %v266 = vld [vmem:[#allocation4 + $0x120] sm:$0xff]
    %v267 = vld [vmem:[#allocation4 + $0x128] sm:$0xff]
    %v268 = vld [vmem:[#allocation4 + $0x130] sm:$0xff]
    %v269 = vld [vmem:[#allocation4 + $0x138] sm:$0xff]
    %v270 = vld [vmem:[#allocation4 + $0x140] sm:$0xff]
    %v271 = vld [vmem:[#allocation4 + $0x148] sm:$0xff]
    %v272 = vld [vmem:[#allocation4 + $0x150] sm:$0xff]
    %v273 = vld [vmem:[#allocation4 + $0x158] sm:$0xff]
    %v274 = vld [vmem:[#allocation4 + $0x160] sm:$0xff]
    %v275 = vld [vmem:[#allocation4 + $0x168] sm:$0xff]
    %v276 = vld [vmem:[#allocation4 + $0x170] sm:$0xff]
    %v277 = vld [vmem:[#allocation4 + $0x178] sm:$0xff]
    %v280 = vunpack.c.l.b16 %v228
    %v281 = vunpack.c.l.b16 %v229
    %v282 = vpack.c.b16 %v281, %v280
    %v332 = vunpack.c.l.b16 %v230
    %v333 = vunpack.c.h.b16 %v230
    %v334 = vunpack.c.l.b16 %v231
    %v335 = vunpack.c.h.b16 %v231
    %v336 = vunpack.c.l.b16 %v232
    %v337 = vunpack.c.h.b16 %v232
    %v338 = vunpack.c.l.b16 %v233
    %v339 = vunpack.c.h.b16 %v233
    %v340 = vunpack.c.l.b16 %v234
    %v341 = vunpack.c.h.b16 %v234
    %v342 = vunpack.c.l.b16 %v235
    %v343 = vunpack.c.h.b16 %v235
    %v344 = vunpack.c.l.b16 %v236
    %v345 = vunpack.c.h.b16 %v236
    %v346 = vunpack.c.l.b16 %v237
    %v347 = vunpack.c.h.b16 %v237
    %v348 = vunpack.c.l.b16 %v238
    %v349 = vunpack.c.h.b16 %v238
    %v350 = vunpack.c.l.b16 %v239
    %v351 = vunpack.c.h.b16 %v239
    %v352 = vunpack.c.l.b16 %v240
    %v353 = vunpack.c.h.b16 %v240
    %v354 = vunpack.c.l.b16 %v241
    %v355 = vunpack.c.h.b16 %v241
    %v356 = vunpack.c.l.b16 %v242
    %v357 = vunpack.c.h.b16 %v242
    %v358 = vunpack.c.l.b16 %v243
    %v359 = vunpack.c.h.b16 %v243
    %v360 = vunpack.c.l.b16 %v244
    %v361 = vunpack.c.h.b16 %v244
    %v362 = vunpack.c.l.b16 %v245
    %v363 = vunpack.c.h.b16 %v245
    %v364 = vunpack.c.l.b16 %v246
    %v365 = vunpack.c.h.b16 %v246
    %v366 = vunpack.c.l.b16 %v247
    %v367 = vunpack.c.h.b16 %v247
    %v368 = vunpack.c.l.b16 %v248
    %v369 = vunpack.c.h.b16 %v248
    %v370 = vunpack.c.l.b16 %v249
    %v371 = vunpack.c.h.b16 %v249
    %v372 = vunpack.c.l.b16 %v250
    %v373 = vunpack.c.h.b16 %v250
    %v374 = vunpack.c.l.b16 %v251
    %v375 = vunpack.c.h.b16 %v251
    %v376 = vunpack.c.l.b16 %v252
    %v377 = vunpack.c.h.b16 %v252
    %v378 = vunpack.c.l.b16 %v253
    %v379 = vunpack.c.h.b16 %v253
    %v380 = vunpack.c.l.b16 %v254
    %v381 = vunpack.c.h.b16 %v254
    %v382 = vunpack.c.l.b16 %v255
    %v383 = vunpack.c.h.b16 %v255
    %v384 = vunpack.c.l.b16 %v256
    %v385 = vunpack.c.h.b16 %v256
    %v386 = vunpack.c.l.b16 %v257
    %v387 = vunpack.c.h.b16 %v257
    %v388 = vunpack.c.l.b16 %v258
    %v389 = vunpack.c.h.b16 %v258
    %v390 = vunpack.c.l.b16 %v259
    %v391 = vunpack.c.h.b16 %v259
    %v392 = vunpack.c.l.b16 %v260
    %v393 = vunpack.c.h.b16 %v260
    %v394 = vunpack.c.l.b16 %v261
    %v395 = vunpack.c.h.b16 %v261
    %v396 = vunpack.c.l.b16 %v262
    %v397 = vunpack.c.h.b16 %v262
    %v398 = vunpack.c.l.b16 %v263
    %v399 = vunpack.c.h.b16 %v263
    %v400 = vunpack.c.l.b16 %v264
    %v401 = vunpack.c.h.b16 %v264
    %v402 = vunpack.c.l.b16 %v265
    %v403 = vunpack.c.h.b16 %v265
    %v404 = vunpack.c.l.b16 %v266
    %v405 = vunpack.c.h.b16 %v266
    %v406 = vunpack.c.l.b16 %v267
    %v407 = vunpack.c.h.b16 %v267
    %v408 = vunpack.c.l.b16 %v268
    %v409 = vunpack.c.h.b16 %v268
    %v410 = vunpack.c.l.b16 %v269
    %v411 = vunpack.c.h.b16 %v269
    %v412 = vunpack.c.l.b16 %v270
    %v413 = vunpack.c.h.b16 %v270
    %v414 = vunpack.c.l.b16 %v271
    %v415 = vunpack.c.h.b16 %v271
    %v416 = vunpack.c.l.b16 %v272
    %v417 = vunpack.c.h.b16 %v272
    %v418 = vunpack.c.l.b16 %v273
    %v419 = vunpack.c.h.b16 %v273
    %v420 = vunpack.c.l.b16 %v274
    %v421 = vunpack.c.h.b16 %v274
    %v422 = vunpack.c.l.b16 %v275
    %v423 = vunpack.c.h.b16 %v275
    %v424 = vunpack.c.l.b16 %v276
    %v425 = vunpack.c.h.b16 %v276
    %v426 = vunpack.c.l.b16 %v277
    %v427 = vunpack.c.h.b16 %v277
    %v428 = vpack.c.b16 %v338, %v332
    %v429 = vpack.c.b16 %v339, %v333
    %v430 = vpack.c.b16 %v340, %v334
    %v431 = vpack.c.b16 %v341, %v335
    %v432 = vpack.c.b16 %v342, %v336
    %v433 = vpack.c.b16 %v343, %v337
    %v434 = vpack.c.b16 %v350, %v344
    %v435 = vpack.c.b16 %v351, %v345
    %v436 = vpack.c.b16 %v352, %v346
    %v437 = vpack.c.b16 %v353, %v347
    %v438 = vpack.c.b16 %v354, %v348
    %v439 = vpack.c.b16 %v355, %v349
    %v440 = vpack.c.b16 %v362, %v356
    %v441 = vpack.c.b16 %v363, %v357
    %v442 = vpack.c.b16 %v364, %v358
    %v443 = vpack.c.b16 %v365, %v359
    %v444 = vpack.c.b16 %v366, %v360
    %v445 = vpack.c.b16 %v367, %v361
    %v446 = vpack.c.b16 %v374, %v368
    %v447 = vpack.c.b16 %v375, %v369
    %v448 = vpack.c.b16 %v376, %v370
    %v449 = vpack.c.b16 %v377, %v371
    %v450 = vpack.c.b16 %v378, %v372
    %v451 = vpack.c.b16 %v379, %v373
    %v452 = vpack.c.b16 %v386, %v380
    %v453 = vpack.c.b16 %v387, %v381
    %v454 = vpack.c.b16 %v388, %v382
    %v455 = vpack.c.b16 %v389, %v383
    %v456 = vpack.c.b16 %v390, %v384
    %v457 = vpack.c.b16 %v391, %v385
    %v458 = vpack.c.b16 %v398, %v392
    %v459 = vpack.c.b16 %v399, %v393
    %v460 = vpack.c.b16 %v400, %v394
    %v461 = vpack.c.b16 %v401, %v395
    %v462 = vpack.c.b16 %v402, %v396
    %v463 = vpack.c.b16 %v403, %v397
    %v464 = vpack.c.b16 %v410, %v404
    %v465 = vpack.c.b16 %v411, %v405
    %v466 = vpack.c.b16 %v412, %v406
    %v467 = vpack.c.b16 %v413, %v407
    %v468 = vpack.c.b16 %v414, %v408
    %v469 = vpack.c.b16 %v415, %v409
    %v470 = vpack.c.b16 %v422, %v416
    %v471 = vpack.c.b16 %v423, %v417
    %v472 = vpack.c.b16 %v424, %v418
    %v473 = vpack.c.b16 %v425, %v419
    %v474 = vpack.c.b16 %v426, %v420
    %v475 = vpack.c.b16 %v427, %v421
    %524 = vmatprep.subr.bf16.mxu0 %v429
    %525 = vmatpush1.bf16.msra.mxu0 %v428
    %526 = vmatprep.subr.bf16.mxu0 %v435
    %527 = vmatpush1.bf16.msra.mxu0 %v434
    %528 = vmatprep.subr.bf16.mxu0 %v441
    %529 = vmatpush1.bf16.msra.mxu0 %v440
    %530 = vmatprep.subr.bf16.mxu0 %v447
    %531 = vmatpush1.bf16.msra.mxu0 %v446
    %532 = vmatprep.subr.bf16.mxu0 %v453
    %533 = vmatpush1.bf16.msra.mxu0 %v452
    %534 = vmatprep.subr.bf16.mxu0 %v459
    %535 = vmatpush1.bf16.msra.mxu0 %v458
    %536 = vmatprep.subr.bf16.mxu0 %v465
    %537 = vmatpush1.bf16.msra.mxu0 %v464
    %538 = vmatprep.subr.bf16.mxu0 %v471
    %539 = vmatpush1.bf16.msra.mxu0 %v470
    %540 = vmatprep.subr.bf16.mxu0 0
    %541 = vmatpush1.bf16.msra.mxu0 0
    %542 = vmatprep.subr.bf16.mxu0 0
    %543 = vmatpush1.bf16.msra.mxu0 0
    %544 = vmatprep.subr.bf16.mxu0 0
    %545 = vmatpush1.bf16.msra.mxu0 0
    %546 = vmatprep.subr.bf16.mxu0 0
    %547 = vmatpush1.bf16.msra.mxu0 0
    %548 = vmatprep.subr.bf16.mxu0 0
    %549 = vmatpush1.bf16.msra.mxu0 0
    %550 = vmatprep.subr.bf16.mxu0 0
    %551 = vmatpush1.bf16.msra.mxu0 0
    %552 = vmatprep.subr.bf16.mxu0 0
    %553 = vmatpush1.bf16.msra.mxu0 0
    %554 = vmatprep.subr.bf16.mxu0 0
    %555 = vmatpush1.bf16.msra.mxu0 0
    %556 = vmatprep.mubr.bf16.mxu0 0
    %557 = vmatmul.mubr.bf16.gmra.mrb[0].mxu0 %v282
    %v558 = vpop.f32.mrb[0].mxu0
    %v559 = vadd.f32 0.0, %v558
    %v560 = vpop.f32.mrb[0].mxu0
    %v561 = vadd.f32 0.0, %v560
    %v562 = vpop.f32.mrb[0].mxu0
    %v563 = vadd.f32 0.0, %v562
    %v564 = vpop.f32.mrb[0].mxu0
    %v565 = vadd.f32 0.0, %v564
    %566 = vdwg.mxu0
    %567 = vmatprep.subr.bf16.mxu0 %v431
    %568 = vmatpush1.bf16.msra.mxu0 %v430
    %569 = vmatprep.subr.bf16.mxu0 %v437
    %570 = vmatpush1.bf16.msra.mxu0 %v436
    %571 = vmatprep.subr.bf16.mxu0 %v443
    %572 = vmatpush1.bf16.msra.mxu0 %v442
    %573 = vmatprep.subr.bf16.mxu0 %v449
    %574 = vmatpush1.bf16.msra.mxu0 %v448
    %575 = vmatprep.subr.bf16.mxu0 %v455
    %576 = vmatpush1.bf16.msra.mxu0 %v454
    %577 = vmatprep.subr.bf16.mxu0 %v461
    %578 = vmatpush1.bf16.msra.mxu0 %v460
    %579 = vmatprep.subr.bf16.mxu0 %v467
    %580 = vmatpush1.bf16.msra.mxu0 %v466
    %581 = vmatprep.subr.bf16.mxu0 %v473
    %582 = vmatpush1.bf16.msra.mxu0 %v472
    %583 = vmatprep.subr.bf16.mxu0 0
    %584 = vmatpush1.bf16.msra.mxu0 0
    %585 = vmatprep.subr.bf16.mxu0 0
    %586 = vmatpush1.bf16.msra.mxu0 0
    %587 = vmatprep.subr.bf16.mxu0 0
    %588 = vmatpush1.bf16.msra.mxu0 0
    %589 = vmatprep.subr.bf16.mxu0 0
    %590 = vmatpush1.bf16.msra.mxu0 0
    %591 = vmatprep.subr.bf16.mxu0 0
    %592 = vmatpush1.bf16.msra.mxu0 0
    %593 = vmatprep.subr.bf16.mxu0 0
    %594 = vmatpush1.bf16.msra.mxu0 0
    %595 = vmatprep.subr.bf16.mxu0 0
    %596 = vmatpush1.bf16.msra.mxu0 0
    %597 = vmatprep.subr.bf16.mxu0 0
    %598 = vmatpush1.bf16.msra.mxu0 0
    %599 = vmatprep.mubr.bf16.mxu0 0
    %600 = vmatmul.mubr.bf16.gmra.mrb[0].mxu0 %v282
    %v601 = vpop.f32.mrb[0].mxu0
    %v602 = vadd.f32 0.0, %v601
    %v603 = vpop.f32.mrb[0].mxu0
    %v604 = vadd.f32 0.0, %v603
    %v605 = vpop.f32.mrb[0].mxu0
    %v606 = vadd.f32 0.0, %v605
    %v607 = vpop.f32.mrb[0].mxu0
    %v608 = vadd.f32 0.0, %v607
    %609 = vdwg.mxu0
    %610 = vmatprep.subr.bf16.mxu0 %v433
    %611 = vmatpush1.bf16.msra.mxu0 %v432
    %612 = vmatprep.subr.bf16.mxu0 %v439
    %613 = vmatpush1.bf16.msra.mxu0 %v438
    %614 = vmatprep.subr.bf16.mxu0 %v445
    %615 = vmatpush1.bf16.msra.mxu0 %v444
    %616 = vmatprep.subr.bf16.mxu0 %v451
    %617 = vmatpush1.bf16.msra.mxu0 %v450
    %618 = vmatprep.subr.bf16.mxu0 %v457
    %619 = vmatpush1.bf16.msra.mxu0 %v456
    %620 = vmatprep.subr.bf16.mxu0 %v463
    %621 = vmatpush1.bf16.msra.mxu0 %v462
    %622 = vmatprep.subr.bf16.mxu0 %v469
    %623 = vmatpush1.bf16.msra.mxu0 %v468
    %624 = vmatprep.subr.bf16.mxu0 %v475
    %625 = vmatpush1.bf16.msra.mxu0 %v474
    %626 = vmatprep.subr.bf16.mxu0 0
    %627 = vmatpush1.bf16.msra.mxu0 0
    %628 = vmatprep.subr.bf16.mxu0 0
    %629 = vmatpush1.bf16.msra.mxu0 0
    %630 = vmatprep.subr.bf16.mxu0 0
    %631 = vmatpush1.bf16.msra.mxu0 0
    %632 = vmatprep.subr.bf16.mxu0 0
    %633 = vmatpush1.bf16.msra.mxu0 0
    %634 = vmatprep.subr.bf16.mxu0 0
    %635 = vmatpush1.bf16.msra.mxu0 0
    %636 = vmatprep.subr.bf16.mxu0 0
    %637 = vmatpush1.bf16.msra.mxu0 0
    %638 = vmatprep.subr.bf16.mxu0 0
    %639 = vmatpush1.bf16.msra.mxu0 0
    %640 = vmatprep.subr.bf16.mxu0 0
    %641 = vmatpush1.bf16.msra.mxu0 0
    %642 = vmatprep.mubr.bf16.mxu0 0
    %643 = vmatmul.mubr.bf16.gmra.mrb[0].mxu0 %v282
    %v644 = vpop.f32.mrb[0].mxu0
    %v645 = vadd.f32 0.0, %v644
    %v646 = vpop.f32.mrb[0].mxu0
    %v647 = vadd.f32 0.0, %v646
    %v648 = vpop.f32.mrb[0].mxu0
    %v649 = vadd.f32 0.0, %v648
    %v650 = vpop.f32.mrb[0].mxu0
    %v651 = vadd.f32 0.0, %v650
    %652 = vdwg.mxu0
    %v655 = vunpack.c.l.b16 %v178
    %v656 = vunpack.c.l.b16 %v179
    %v657 = vpack.c.b16 %v656, %v655
    %v707 = vunpack.c.l.b16 %v180
    %v708 = vunpack.c.h.b16 %v180
    %v709 = vunpack.c.l.b16 %v181
    %v710 = vunpack.c.h.b16 %v181
    %v711 = vunpack.c.l.b16 %v182
    %v712 = vunpack.c.h.b16 %v182
    %v713 = vunpack.c.l.b16 %v183
    %v714 = vunpack.c.h.b16 %v183
    %v715 = vunpack.c.l.b16 %v184
    %v716 = vunpack.c.h.b16 %v184
    %v717 = vunpack.c.l.b16 %v185
    %v718 = vunpack.c.h.b16 %v185
    %v719 = vunpack.c.l.b16 %v186
    %v720 = vunpack.c.h.b16 %v186
    %v721 = vunpack.c.l.b16 %v187
    %v722 = vunpack.c.h.b16 %v187
    %v723 = vunpack.c.l.b16 %v188
    %v724 = vunpack.c.h.b16 %v188
    %v725 = vunpack.c.l.b16 %v189
    %v726 = vunpack.c.h.b16 %v189
    %v727 = vunpack.c.l.b16 %v190
    %v728 = vunpack.c.h.b16 %v190
    %v729 = vunpack.c.l.b16 %v191
    %v730 = vunpack.c.h.b16 %v191
    %v731 = vunpack.c.l.b16 %v192
    %v732 = vunpack.c.h.b16 %v192
    %v733 = vunpack.c.l.b16 %v193
    %v734 = vunpack.c.h.b16 %v193
    %v735 = vunpack.c.l.b16 %v194
    %v736 = vunpack.c.h.b16 %v194
    %v737 = vunpack.c.l.b16 %v195
    %v738 = vunpack.c.h.b16 %v195
    %v739 = vunpack.c.l.b16 %v196
    %v740 = vunpack.c.h.b16 %v196
    %v741 = vunpack.c.l.b16 %v197
    %v742 = vunpack.c.h.b16 %v197
    %v743 = vunpack.c.l.b16 %v198
    %v744 = vunpack.c.h.b16 %v198
    %v745 = vunpack.c.l.b16 %v199
    %v746 = vunpack.c.h.b16 %v199
    %v747 = vunpack.c.l.b16 %v200
    %v748 = vunpack.c.h.b16 %v200
    %v749 = vunpack.c.l.b16 %v201
    %v750 = vunpack.c.h.b16 %v201
    %v751 = vunpack.c.l.b16 %v202
    %v752 = vunpack.c.h.b16 %v202
    %v753 = vunpack.c.l.b16 %v203
    %v754 = vunpack.c.h.b16 %v203
    %v755 = vunpack.c.l.b16 %v204
    %v756 = vunpack.c.h.b16 %v204
    %v757 = vunpack.c.l.b16 %v205
    %v758 = vunpack.c.h.b16 %v205
    %v759 = vunpack.c.l.b16 %v206
    %v760 = vunpack.c.h.b16 %v206
    %v761 = vunpack.c.l.b16 %v207
    %v762 = vunpack.c.h.b16 %v207
    %v763 = vunpack.c.l.b16 %v208
    %v764 = vunpack.c.h.b16 %v208
    %v765 = vunpack.c.l.b16 %v209
    %v766 = vunpack.c.h.b16 %v209
    %v767 = vunpack.c.l.b16 %v210
    %v768 = vunpack.c.h.b16 %v210
    %v769 = vunpack.c.l.b16 %v211
    %v770 = vunpack.c.h.b16 %v211
    %v771 = vunpack.c.l.b16 %v212
    %v772 = vunpack.c.h.b16 %v212
    %v773 = vunpack.c.l.b16 %v213
    %v774 = vunpack.c.h.b16 %v213
    %v775 = vunpack.c.l.b16 %v214
    %v776 = vunpack.c.h.b16 %v214
    %v777 = vunpack.c.l.b16 %v215
    %v778 = vunpack.c.h.b16 %v215
    %v779 = vunpack.c.l.b16 %v216
    %v780 = vunpack.c.h.b16 %v216
    %v781 = vunpack.c.l.b16 %v217
    %v782 = vunpack.c.h.b16 %v217
    %v783 = vunpack.c.l.b16 %v218
    %v784 = vunpack.c.h.b16 %v218
    %v785 = vunpack.c.l.b16 %v219
    %v786 = vunpack.c.h.b16 %v219
    %v787 = vunpack.c.l.b16 %v220
    %v788 = vunpack.c.h.b16 %v220
    %v789 = vunpack.c.l.b16 %v221
    %v790 = vunpack.c.h.b16 %v221
    %v791 = vunpack.c.l.b16 %v222
    %v792 = vunpack.c.h.b16 %v222
    %v793 = vunpack.c.l.b16 %v223
    %v794 = vunpack.c.h.b16 %v223
    %v795 = vunpack.c.l.b16 %v224
    %v796 = vunpack.c.h.b16 %v224
    %v797 = vunpack.c.l.b16 %v225
    %v798 = vunpack.c.h.b16 %v225
    %v799 = vunpack.c.l.b16 %v226
    %v800 = vunpack.c.h.b16 %v226
    %v801 = vunpack.c.l.b16 %v227
    %v802 = vunpack.c.h.b16 %v227
    %v803 = vpack.c.b16 %v713, %v707
    %v804 = vpack.c.b16 %v714, %v708
    %v805 = vpack.c.b16 %v715, %v709
    %v806 = vpack.c.b16 %v716, %v710
    %v807 = vpack.c.b16 %v717, %v711
    %v808 = vpack.c.b16 %v718, %v712
    %v809 = vpack.c.b16 %v725, %v719
    %v810 = vpack.c.b16 %v726, %v720
    %v811 = vpack.c.b16 %v727, %v721
    %v812 = vpack.c.b16 %v728, %v722
    %v813 = vpack.c.b16 %v729, %v723
    %v814 = vpack.c.b16 %v730, %v724
    %v815 = vpack.c.b16 %v737, %v731
    %v816 = vpack.c.b16 %v738, %v732
    %v817 = vpack.c.b16 %v739, %v733
    %v818 = vpack.c.b16 %v740, %v734
    %v819 = vpack.c.b16 %v741, %v735
    %v820 = vpack.c.b16 %v742, %v736
    %v821 = vpack.c.b16 %v749, %v743
    %v822 = vpack.c.b16 %v750, %v744
    %v823 = vpack.c.b16 %v751, %v745
    %v824 = vpack.c.b16 %v752, %v746
    %v825 = vpack.c.b16 %v753, %v747
    %v826 = vpack.c.b16 %v754, %v748
    %v827 = vpack.c.b16 %v761, %v755
    %v828 = vpack.c.b16 %v762, %v756
    %v829 = vpack.c.b16 %v763, %v757
    %v830 = vpack.c.b16 %v764, %v758
    %v831 = vpack.c.b16 %v765, %v759
    %v832 = vpack.c.b16 %v766, %v760
    %v833 = vpack.c.b16 %v773, %v767
    %v834 = vpack.c.b16 %v774, %v768
    %v835 = vpack.c.b16 %v775, %v769
    %v836 = vpack.c.b16 %v776, %v770
    %v837 = vpack.c.b16 %v777, %v771
    %v838 = vpack.c.b16 %v778, %v772
    %v839 = vpack.c.b16 %v785, %v779
    %v840 = vpack.c.b16 %v786, %v780
    %v841 = vpack.c.b16 %v787, %v781
    %v842 = vpack.c.b16 %v788, %v782
    %v843 = vpack.c.b16 %v789, %v783
    %v844 = vpack.c.b16 %v790, %v784
    %v845 = vpack.c.b16 %v797, %v791
    %v846 = vpack.c.b16 %v798, %v792
    %v847 = vpack.c.b16 %v799, %v793
    %v848 = vpack.c.b16 %v800, %v794
    %v849 = vpack.c.b16 %v801, %v795
    %v850 = vpack.c.b16 %v802, %v796
    %899 = vmatprep.subr.bf16.mxu0 %v804
    %900 = vmatpush1.bf16.msra.mxu0 %v803
    %901 = vmatprep.subr.bf16.mxu0 %v810
    %902 = vmatpush1.bf16.msra.mxu0 %v809
    %903 = vmatprep.subr.bf16.mxu0 %v816
    %904 = vmatpush1.bf16.msra.mxu0 %v815
    %905 = vmatprep.subr.bf16.mxu0 %v822
    %906 = vmatpush1.bf16.msra.mxu0 %v821
    %907 = vmatprep.subr.bf16.mxu0 %v828
    %908 = vmatpush1.bf16.msra.mxu0 %v827
    %909 = vmatprep.subr.bf16.mxu0 %v834
    %910 = vmatpush1.bf16.msra.mxu0 %v833
    %911 = vmatprep.subr.bf16.mxu0 %v840
    %912 = vmatpush1.bf16.msra.mxu0 %v839
    %913 = vmatprep.subr.bf16.mxu0 %v846
    %914 = vmatpush1.bf16.msra.mxu0 %v845
    %915 = vmatprep.subr.bf16.mxu0 0
    %916 = vmatpush1.bf16.msra.mxu0 0
    %917 = vmatprep.subr.bf16.mxu0 0
    %918 = vmatpush1.bf16.msra.mxu0 0
    %919 = vmatprep.subr.bf16.mxu0 0
    %920 = vmatpush1.bf16.msra.mxu0 0
    %921 = vmatprep.subr.bf16.mxu0 0
    %922 = vmatpush1.bf16.msra.mxu0 0
    %923 = vmatprep.subr.bf16.mxu0 0
    %924 = vmatpush1.bf16.msra.mxu0 0
    %925 = vmatprep.subr.bf16.mxu0 0
    %926 = vmatpush1.bf16.msra.mxu0 0
    %927 = vmatprep.subr.bf16.mxu0 0
    %928 = vmatpush1.bf16.msra.mxu0 0
    %929 = vmatprep.subr.bf16.mxu0 0
    %930 = vmatpush1.bf16.msra.mxu0 0
    %931 = vmatprep.mubr.bf16.mxu0 0
    %932 = vmatmul.mubr.bf16.gmra.mrb[0].mxu0 %v657
    %v933 = vpop.f32.mrb[0].mxu0
    %v934 = vadd.f32 %v559, %v933
    %v935 = vpop.f32.mrb[0].mxu0
    %v936 = vadd.f32 %v561, %v935
    %v937 = vpop.f32.mrb[0].mxu0
    %v938 = vadd.f32 %v563, %v937
    %v939 = vpop.f32.mrb[0].mxu0
    %v940 = vadd.f32 %v565, %v939
    %941 = vdwg.mxu0
    %942 = vmatprep.subr.bf16.mxu0 %v806
    %943 = vmatpush1.bf16.msra.mxu0 %v805
    %944 = vmatprep.subr.bf16.mxu0 %v812
    %945 = vmatpush1.bf16.msra.mxu0 %v811
    %946 = vmatprep.subr.bf16.mxu0 %v818
    %947 = vmatpush1.bf16.msra.mxu0 %v817
    %948 = vmatprep.subr.bf16.mxu0 %v824
    %949 = vmatpush1.bf16.msra.mxu0 %v823
    %950 = vmatprep.subr.bf16.mxu0 %v830
    %951 = vmatpush1.bf16.msra.mxu0 %v829
    %952 = vmatprep.subr.bf16.mxu0 %v836
    %953 = vmatpush1.bf16.msra.mxu0 %v835
    %954 = vmatprep.subr.bf16.mxu0 %v842
    %955 = vmatpush1.bf16.msra.mxu0 %v841
    %956 = vmatprep.subr.bf16.mxu0 %v848
    %957 = vmatpush1.bf16.msra.mxu0 %v847
    %958 = vmatprep.subr.bf16.mxu0 0
    %959 = vmatpush1.bf16.msra.mxu0 0
    %960 = vmatprep.subr.bf16.mxu0 0
    %961 = vmatpush1.bf16.msra.mxu0 0
    %962 = vmatprep.subr.bf16.mxu0 0
    %963 = vmatpush1.bf16.msra.mxu0 0
    %964 = vmatprep.subr.bf16.mxu0 0
    %965 = vmatpush1.bf16.msra.mxu0 0
    %966 = vmatprep.subr.bf16.mxu0 0
    %967 = vmatpush1.bf16.msra.mxu0 0
    %968 = vmatprep.subr.bf16.mxu0 0
    %969 = vmatpush1.bf16.msra.mxu0 0
    %970 = vmatprep.subr.bf16.mxu0 0
    %971 = vmatpush1.bf16.msra.mxu0 0
    %972 = vmatprep.subr.bf16.mxu0 0
    %973 = vmatpush1.bf16.msra.mxu0 0
    %974 = vmatprep.mubr.bf16.mxu0 0
    %975 = vmatmul.mubr.bf16.gmra.mrb[0].mxu0 %v657
    %v976 = vpop.f32.mrb[0].mxu0
    %v977 = vadd.f32 %v602, %v976
    %v978 = vpop.f32.mrb[0].mxu0
    %v979 = vadd.f32 %v604, %v978
    %v980 = vpop.f32.mrb[0].mxu0
    %v981 = vadd.f32 %v606, %v980
    %v982 = vpop.f32.mrb[0].mxu0
    %v983 = vadd.f32 %v608, %v982
    %984 = vdwg.mxu0
    %985 = vmatprep.subr.bf16.mxu0 %v808
    %986 = vmatpush1.bf16.msra.mxu0 %v807
    %987 = vmatprep.subr.bf16.mxu0 %v814
    %988 = vmatpush1.bf16.msra.mxu0 %v813
    %989 = vmatprep.subr.bf16.mxu0 %v820
    %990 = vmatpush1.bf16.msra.mxu0 %v819
    %991 = vmatprep.subr.bf16.mxu0 %v826
    %992 = vmatpush1.bf16.msra.mxu0 %v825
    %993 = vmatprep.subr.bf16.mxu0 %v832
    %994 = vmatpush1.bf16.msra.mxu0 %v831
    %995 = vmatprep.subr.bf16.mxu0 %v838
    %996 = vmatpush1.bf16.msra.mxu0 %v837
    %997 = vmatprep.subr.bf16.mxu0 %v844
    %998 = vmatpush1.bf16.msra.mxu0 %v843
    %999 = vmatprep.subr.bf16.mxu0 %v850
    %1000 = vmatpush1.bf16.msra.mxu0 %v849
    %1001 = vmatprep.subr.bf16.mxu0 0
    %1002 = vmatpush1.bf16.msra.mxu0 0
    %1003 = vmatprep.subr.bf16.mxu0 0
    %1004 = vmatpush1.bf16.msra.mxu0 0
    %1005 = vmatprep.subr.bf16.mxu0 0
    %1006 = vmatpush1.bf16.msra.mxu0 0
    %1007 = vmatprep.subr.bf16.mxu0 0
    %1008 = vmatpush1.bf16.msra.mxu0 0
    %1009 = vmatprep.subr.bf16.mxu0 0
    %1010 = vmatpush1.bf16.msra.mxu0 0
    %1011 = vmatprep.subr.bf16.mxu0 0
    %1012 = vmatpush1.bf16.msra.mxu0 0
    %1013 = vmatprep.subr.bf16.mxu0 0
    %1014 = vmatpush1.bf16.msra.mxu0 0
    %1015 = vmatprep.subr.bf16.mxu0 0
    %1016 = vmatpush1.bf16.msra.mxu0 0
    %1017 = vmatprep.mubr.bf16.mxu0 0
    %1018 = vmatmul.mubr.bf16.gmra.mrb[0].mxu0 %v657
    %v1019 = vpop.f32.mrb[0].mxu0
    %v1020 = vadd.f32 %v645, %v1019
    %v1021 = vpop.f32.mrb[0].mxu0
    %v1022 = vadd.f32 %v647, %v1021
    %v1023 = vpop.f32.mrb[0].mxu0
    %v1024 = vadd.f32 %v649, %v1023
    %v1025 = vpop.f32.mrb[0].mxu0
    %v1026 = vadd.f32 %v651, %v1025
    %1027 = vdwg.mxu0
    %v1028 = vld [vmem:[%s4] sm:$0x3f]
    %v1030 = vlaneseq
    %v1031 = vshrl.u32 %v1030, 7
    %v1032 = vsub.s32 0, %v1031
    %v1033 = vrot.slane %v1028, %v1032
    %v1034 = vlaneseq
    %v1035 = vshrl.u32 %v1034, 7
    %v1036 = vsub.s32 1, %v1035
    %v1037 = vrot.slane %v1028, %v1036
    %v1038 = vlaneseq
    %v1039 = vshrl.u32 %v1038, 7
    %v1040 = vsub.s32 2, %v1039
    %v1041 = vrot.slane %v1028, %v1040
    %v1042 = vlaneseq
    %v1043 = vshrl.u32 %v1042, 7
    %v1044 = vsub.s32 3, %v1043
    %v1045 = vrot.slane %v1028, %v1044
    %v1046 = vlaneseq
    %v1047 = vshrl.u32 %v1046, 7
    %v1048 = vsub.s32 4, %v1047
    %v1049 = vrot.slane %v1028, %v1048
    %v1050 = vlaneseq
    %v1051 = vshrl.u32 %v1050, 7
    %v1052 = vsub.s32 5, %v1051
    %v1053 = vrot.slane %v1028, %v1052
    %v1060 = vadd.f32 %v934, %v1033
    %v1061 = vadd.f32 %v936, %v1037
    %v1062 = vadd.f32 %v977, %v1041
    %v1063 = vadd.f32 %v979, %v1045
    %v1064 = vadd.f32 %v1020, %v1049
    %v1065 = vadd.f32 %v1022, %v1053
    %v1066 = vadd.f32 %v938, %v1033
    %v1067 = vadd.f32 %v940, %v1037
    %v1068 = vadd.f32 %v981, %v1041
    %v1069 = vadd.f32 %v983, %v1045
    %v1070 = vadd.f32 %v1024, %v1049
    %v1071 = vadd.f32 %v1026, %v1053
    %v1072 = vmax.f32 %v1060, 0.0
    %v1073 = vmax.f32 %v1061, 0.0
    %v1074 = vmax.f32 %v1062, 0.0
    %v1075 = vmax.f32 %v1063, 0.0
    %v1076 = vmax.f32 %v1064, 0.0
    %v1077 = vmax.f32 %v1065, 0.0
    %v1078 = vmax.f32 %v1066, 0.0
    %v1079 = vmax.f32 %v1067, 0.0
    %v1080 = vmax.f32 %v1068, 0.0
    %v1081 = vmax.f32 %v1069, 0.0
    %v1082 = vmax.f32 %v1070, 0.0
    %v1083 = vmax.f32 %v1071, 0.0
    %v1084 = vpack.c.bf16 %v1078, %v1072
    %v1085 = vpack.c.bf16 %v1079, %v1073
    %v1086 = vpack.c.bf16 %v1080, %v1074
    %v1087 = vpack.c.bf16 %v1081, %v1075
    %v1088 = vpack.c.bf16 %v1082, %v1076
    %v1089 = vpack.c.bf16 %v1083, %v1077
    %v1090 = vld [vmem:[#allocation6] sm:$0xff]
    %v1091 = vld [vmem:[#allocation6 + $0x8] sm:$0xff]
    %v1092 = vld [vmem:[#allocation6 + $0x10] sm:$0xff]
    %v1093 = vld [vmem:[#allocation6 + $0x18] sm:$0xff]
    %v1094 = vld [vmem:[#allocation6 + $0x20] sm:$0xff]
    %v1095 = vld [vmem:[#allocation6 + $0x28] sm:$0xff]
    %v1096 = vld [vmem:[#allocation6 + $0x30] sm:$0xff]
    %v1097 = vld [vmem:[#allocation6 + $0x38] sm:$0xff]
    %v1098 = vld [vmem:[#allocation6 + $0x40] sm:$0xff]
    %v1099 = vld [vmem:[#allocation6 + $0x48] sm:$0xff]
    %v1100 = vld [vmem:[#allocation6 + $0x50] sm:$0xff]
    %v1101 = vld [vmem:[#allocation6 + $0x58] sm:$0xff]
    %v1102 = vld [vmem:[#allocation6 + $0x60] sm:$0xff]
    %v1103 = vld [vmem:[#allocation6 + $0x68] sm:$0xff]
    %v1104 = vld [vmem:[#allocation6 + $0x70] sm:$0xff]
    %v1105 = vld [vmem:[#allocation6 + $0x78] sm:$0xff]
    %v1106 = vld [vmem:[#allocation6 + $0x80] sm:$0xff]
    %v1107 = vld [vmem:[#allocation6 + $0x88] sm:$0xff]
    %v1108 = vld [vmem:[#allocation6 + $0x90] sm:$0xff]
    %v1109 = vld [vmem:[#allocation6 + $0x98] sm:$0xff]
    %v1110 = vld [vmem:[#allocation6 + $0xa0] sm:$0xff]
    %v1111 = vld [vmem:[#allocation6 + $0xa8] sm:$0xff]
    %v1112 = vld [vmem:[#allocation6 + $0xb0] sm:$0xff]
    %v1113 = vld [vmem:[#allocation6 + $0xb8] sm:$0xff]
    %v1114 = vld [vmem:[#allocation6 + $0xc0] sm:$0xff]
    %v1115 = vld [vmem:[#allocation6 + $0xc8] sm:$0xff]
    %v1116 = vld [vmem:[#allocation6 + $0xd0] sm:$0xff]
    %v1117 = vld [vmem:[#allocation6 + $0xd8] sm:$0xff]
    %v1118 = vld [vmem:[#allocation6 + $0xe0] sm:$0xff]
    %v1119 = vld [vmem:[#allocation6 + $0xe8] sm:$0xff]
    %v1120 = vld [vmem:[#allocation6 + $0xf0] sm:$0xff]
    %v1121 = vld [vmem:[#allocation6 + $0xf8] sm:$0xff]
    %v1122 = vld [vmem:[#allocation6 + $0x100] sm:$0xff]
    %v1123 = vld [vmem:[#allocation6 + $0x108] sm:$0xff]
    %v1124 = vld [vmem:[#allocation6 + $0x110] sm:$0xff]
    %v1125 = vld [vmem:[#allocation6 + $0x118] sm:$0xff]
    %v1126 = vld [vmem:[#allocation6 + $0x120] sm:$0xff]
    %v1127 = vld [vmem:[#allocation6 + $0x128] sm:$0xff]
    %v1128 = vld [vmem:[#allocation6 + $0x130] sm:$0xff]
    %v1129 = vld [vmem:[#allocation6 + $0x138] sm:$0xff]
    %v1130 = vld [vmem:[#allocation6 + $0x140] sm:$0xff]
    %v1131 = vld [vmem:[#allocation6 + $0x148] sm:$0xff]
    %v1132 = vld [vmem:[#allocation6 + $0x150] sm:$0xff]
    %v1133 = vld [vmem:[#allocation6 + $0x158] sm:$0xff]
    %v1134 = vld [vmem:[#allocation6 + $0x160] sm:$0xff]
    %v1135 = vld [vmem:[#allocation6 + $0x168] sm:$0xff]
    %v1136 = vld [vmem:[#allocation6 + $0x170] sm:$0xff]
    %v1137 = vld [vmem:[#allocation6 + $0x178] sm:$0xff]
    %v1138 = vld [vmem:[#allocation6 + $0x180] sm:$0xff]
    %v1139 = vld [vmem:[#allocation6 + $0x188] sm:$0xff]
    %v1140 = vld [vmem:[#allocation6 + $0x190] sm:$0xff]
    %v1141 = vld [vmem:[#allocation6 + $0x198] sm:$0xff]
    %v1142 = vld [vmem:[#allocation6 + $0x1a0] sm:$0xff]
    %v1143 = vld [vmem:[#allocation6 + $0x1a8] sm:$0xff]
    %v1144 = vld [vmem:[#allocation6 + $0x1b0] sm:$0xff]
    %v1145 = vld [vmem:[#allocation6 + $0x1b8] sm:$0xff]
    %v1146 = vld [vmem:[#allocation6 + $0x1c0] sm:$0xff]
    %v1147 = vld [vmem:[#allocation6 + $0x1c8] sm:$0xff]
    %v1148 = vld [vmem:[#allocation6 + $0x1d0] sm:$0xff]
    %v1149 = vld [vmem:[#allocation6 + $0x1d8] sm:$0xff]
    %v1150 = vld [vmem:[#allocation6 + $0x1e0] sm:$0xff]
    %v1151 = vld [vmem:[#allocation6 + $0x1e8] sm:$0xff]
    %v1152 = vld [vmem:[#allocation6 + $0x1f0] sm:$0xff]
    %v1153 = vld [vmem:[#allocation6 + $0x1f8] sm:$0xff]
    %v1154 = vld [vmem:[#allocation6 + $0x200] sm:$0xff]
    %v1155 = vld [vmem:[#allocation6 + $0x208] sm:$0xff]
    %v1156 = vld [vmem:[#allocation6 + $0x210] sm:$0xff]
    %v1157 = vld [vmem:[#allocation6 + $0x218] sm:$0xff]
    %v1158 = vld [vmem:[#allocation6 + $0x220] sm:$0xff]
    %v1159 = vld [vmem:[#allocation6 + $0x228] sm:$0xff]
    %v1160 = vld [vmem:[#allocation6 + $0x230] sm:$0xff]
    %v1161 = vld [vmem:[#allocation6 + $0x238] sm:$0xff]
    %v1162 = vld [vmem:[#allocation6 + $0x240] sm:$0xff]
    %v1163 = vld [vmem:[#allocation6 + $0x248] sm:$0xff]
    %v1164 = vld [vmem:[#allocation6 + $0x250] sm:$0xff]
    %v1165 = vld [vmem:[#allocation6 + $0x258] sm:$0xff]
    %v1166 = vld [vmem:[#allocation6 + $0x260] sm:$0xff]
    %v1167 = vld [vmem:[#allocation6 + $0x268] sm:$0xff]
    %v1168 = vld [vmem:[#allocation6 + $0x270] sm:$0xff]
    %v1169 = vld [vmem:[#allocation6 + $0x278] sm:$0xff]
    %v1170 = vld [vmem:[#allocation6 + $0x280] sm:$0xff]
    %v1171 = vld [vmem:[#allocation6 + $0x288] sm:$0xff]
    %v1172 = vld [vmem:[#allocation6 + $0x290] sm:$0xff]
    %v1173 = vld [vmem:[#allocation6 + $0x298] sm:$0xff]
    %v1174 = vld [vmem:[#allocation6 + $0x2a0] sm:$0xff]
    %v1175 = vld [vmem:[#allocation6 + $0x2a8] sm:$0xff]
    %v1176 = vld [vmem:[#allocation6 + $0x2b0] sm:$0xff]
    %v1177 = vld [vmem:[#allocation6 + $0x2b8] sm:$0xff]
    %v1178 = vld [vmem:[#allocation6 + $0x2c0] sm:$0xff]
    %v1179 = vld [vmem:[#allocation6 + $0x2c8] sm:$0xff]
    %v1180 = vld [vmem:[#allocation6 + $0x2d0] sm:$0xff]
    %v1181 = vld [vmem:[#allocation6 + $0x2d8] sm:$0xff]
    %v1182 = vld [vmem:[#allocation6 + $0x2e0] sm:$0xff]
    %v1183 = vld [vmem:[#allocation6 + $0x2e8] sm:$0xff]
    %v1184 = vld [vmem:[#allocation6 + $0x2f0] sm:$0xff]
    %v1185 = vld [vmem:[#allocation6 + $0x2f8] sm:$0xff]
    %v1186 = vld [vmem:[#allocation6 + $0x300] sm:$0xff]
    %v1187 = vld [vmem:[#allocation6 + $0x308] sm:$0xff]
    %v1188 = vld [vmem:[#allocation6 + $0x310] sm:$0xff]
    %v1189 = vld [vmem:[#allocation6 + $0x318] sm:$0xff]
    %v1190 = vld [vmem:[#allocation6 + $0x320] sm:$0xff]
    %v1191 = vld [vmem:[#allocation6 + $0x328] sm:$0xff]
    %v1192 = vld [vmem:[#allocation6 + $0x330] sm:$0xff]
    %v1193 = vld [vmem:[#allocation6 + $0x338] sm:$0xff]
    %v1194 = vld [vmem:[#allocation6 + $0x340] sm:$0xff]
    %v1195 = vld [vmem:[#allocation6 + $0x348] sm:$0xff]
    %v1196 = vld [vmem:[#allocation6 + $0x350] sm:$0xff]
    %v1197 = vld [vmem:[#allocation6 + $0x358] sm:$0xff]
    %v1198 = vld [vmem:[#allocation6 + $0x360] sm:$0xff]
    %v1199 = vld [vmem:[#allocation6 + $0x368] sm:$0xff]
    %v1200 = vld [vmem:[#allocation6 + $0x370] sm:$0xff]
    %v1201 = vld [vmem:[#allocation6 + $0x378] sm:$0xff]
    %v1202 = vld [vmem:[#allocation6 + $0x380] sm:$0xff]
    %v1203 = vld [vmem:[#allocation6 + $0x388] sm:$0xff]
    %v1204 = vld [vmem:[#allocation6 + $0x390] sm:$0xff]
    %v1205 = vld [vmem:[#allocation6 + $0x398] sm:$0xff]
    %v1206 = vld [vmem:[#allocation6 + $0x3a0] sm:$0xff]
    %v1207 = vld [vmem:[#allocation6 + $0x3a8] sm:$0xff]
    %v1208 = vld [vmem:[#allocation6 + $0x3b0] sm:$0xff]
    %v1209 = vld [vmem:[#allocation6 + $0x3b8] sm:$0xff]
    %v1210 = vld [vmem:[#allocation6 + $0x3c0] sm:$0xff]
    %v1211 = vld [vmem:[#allocation6 + $0x3c8] sm:$0xff]
    %v1212 = vld [vmem:[#allocation6 + $0x3d0] sm:$0xff]
    %v1213 = vld [vmem:[#allocation6 + $0x3d8] sm:$0xff]
    %v1214 = vld [vmem:[#allocation6 + $0x3e0] sm:$0xff]
    %v1215 = vld [vmem:[#allocation6 + $0x3e8] sm:$0xff]
    %v1216 = vld [vmem:[#allocation6 + $0x3f0] sm:$0xff]
    %v1217 = vld [vmem:[#allocation6 + $0x3f8] sm:$0xff]
    %v1218 = vld [vmem:[#allocation6 + $0x400] sm:$0xff]
    %v1219 = vld [vmem:[#allocation6 + $0x408] sm:$0xff]
    %v1220 = vld [vmem:[#allocation6 + $0x410] sm:$0xff]
    %v1221 = vld [vmem:[#allocation6 + $0x418] sm:$0xff]
    %v1222 = vld [vmem:[#allocation6 + $0x420] sm:$0xff]
    %v1223 = vld [vmem:[#allocation6 + $0x428] sm:$0xff]
    %v1224 = vld [vmem:[#allocation6 + $0x430] sm:$0xff]
    %v1225 = vld [vmem:[#allocation6 + $0x438] sm:$0xff]
    %v1226 = vld [vmem:[#allocation6 + $0x440] sm:$0xff]
    %v1227 = vld [vmem:[#allocation6 + $0x448] sm:$0xff]
    %v1228 = vld [vmem:[#allocation6 + $0x450] sm:$0xff]
    %v1229 = vld [vmem:[#allocation6 + $0x458] sm:$0xff]
    %v1230 = vld [vmem:[#allocation6 + $0x460] sm:$0xff]
    %v1231 = vld [vmem:[#allocation6 + $0x468] sm:$0xff]
    %v1232 = vld [vmem:[#allocation6 + $0x470] sm:$0xff]
    %v1233 = vld [vmem:[#allocation6 + $0x478] sm:$0xff]
    %v1234 = vld [vmem:[#allocation6 + $0x480] sm:$0xff]
    %v1235 = vld [vmem:[#allocation6 + $0x488] sm:$0xff]
    %v1236 = vld [vmem:[#allocation6 + $0x490] sm:$0xff]
    %v1237 = vld [vmem:[#allocation6 + $0x498] sm:$0xff]
    %v1238 = vld [vmem:[#allocation6 + $0x4a0] sm:$0xff]
    %v1239 = vld [vmem:[#allocation6 + $0x4a8] sm:$0xff]
    %v1240 = vld [vmem:[#allocation6 + $0x4b0] sm:$0xff]
    %v1241 = vld [vmem:[#allocation6 + $0x4b8] sm:$0xff]
    %v1242 = vld [vmem:[#allocation6 + $0x4c0] sm:$0xff]
    %v1243 = vld [vmem:[#allocation6 + $0x4c8] sm:$0xff]
    %v1244 = vld [vmem:[#allocation6 + $0x4d0] sm:$0xff]
    %v1245 = vld [vmem:[#allocation6 + $0x4d8] sm:$0xff]
    %v1246 = vld [vmem:[#allocation6 + $0x4e0] sm:$0xff]
    %v1247 = vld [vmem:[#allocation6 + $0x4e8] sm:$0xff]
    %v1248 = vld [vmem:[#allocation6 + $0x4f0] sm:$0xff]
    %v1249 = vld [vmem:[#allocation6 + $0x4f8] sm:$0xff]
    %v1250 = vld [vmem:[#allocation6 + $0x500] sm:$0xff]
    %v1251 = vld [vmem:[#allocation6 + $0x508] sm:$0xff]
    %v1252 = vld [vmem:[#allocation6 + $0x510] sm:$0xff]
    %v1253 = vld [vmem:[#allocation6 + $0x518] sm:$0xff]
    %v1254 = vld [vmem:[#allocation6 + $0x520] sm:$0xff]
    %v1255 = vld [vmem:[#allocation6 + $0x528] sm:$0xff]
    %v1256 = vld [vmem:[#allocation6 + $0x530] sm:$0xff]
    %v1257 = vld [vmem:[#allocation6 + $0x538] sm:$0xff]
    %v1258 = vld [vmem:[#allocation6 + $0x540] sm:$0xff]
    %v1259 = vld [vmem:[#allocation6 + $0x548] sm:$0xff]
    %v1260 = vld [vmem:[#allocation6 + $0x550] sm:$0xff]
    %v1261 = vld [vmem:[#allocation6 + $0x558] sm:$0xff]
    %v1262 = vld [vmem:[#allocation6 + $0x560] sm:$0xff]
    %v1263 = vld [vmem:[#allocation6 + $0x568] sm:$0xff]
    %v1264 = vld [vmem:[#allocation6 + $0x570] sm:$0xff]
    %v1265 = vld [vmem:[#allocation6 + $0x578] sm:$0xff]
    %v1266 = vld [vmem:[#allocation6 + $0x580] sm:$0xff]
    %v1267 = vld [vmem:[#allocation6 + $0x588] sm:$0xff]
    %v1268 = vld [vmem:[#allocation6 + $0x590] sm:$0xff]
    %v1269 = vld [vmem:[#allocation6 + $0x598] sm:$0xff]
    %v1270 = vld [vmem:[#allocation6 + $0x5a0] sm:$0xff]
    %v1271 = vld [vmem:[#allocation6 + $0x5a8] sm:$0xff]
    %v1272 = vld [vmem:[#allocation6 + $0x5b0] sm:$0xff]
    %v1273 = vld [vmem:[#allocation6 + $0x5b8] sm:$0xff]
    %v1274 = vld [vmem:[#allocation6 + $0x5c0] sm:$0xff]
    %v1275 = vld [vmem:[#allocation6 + $0x5c8] sm:$0xff]
    %v1276 = vld [vmem:[#allocation6 + $0x5d0] sm:$0xff]
    %v1277 = vld [vmem:[#allocation6 + $0x5d8] sm:$0xff]
    %v1278 = vld [vmem:[#allocation6 + $0x5e0] sm:$0xff]
    %v1279 = vld [vmem:[#allocation6 + $0x5e8] sm:$0xff]
    %v1280 = vld [vmem:[#allocation6 + $0x5f0] sm:$0xff]
    %v1281 = vld [vmem:[#allocation6 + $0x5f8] sm:$0xff]
    %v1282 = vld [vmem:[%s6] sm:$0xf]
    %v1284 = vlaneseq
    %v1285 = vshrl.u32 %v1284, 7
    %v1286 = vsub.s32 0, %v1285
    %v1287 = vrot.slane %v1282, %v1286
    %v1288 = vlaneseq
    %v1289 = vshrl.u32 %v1288, 7
    %v1290 = vsub.s32 1, %v1289
    %v1291 = vrot.slane %v1282, %v1290
    %v1292 = vlaneseq
    %v1293 = vshrl.u32 %v1292, 7
    %v1294 = vsub.s32 2, %v1293
    %v1295 = vrot.slane %v1282, %v1294
    %v1296 = vlaneseq
    %v1297 = vshrl.u32 %v1296, 7
    %v1298 = vsub.s32 3, %v1297
    %v1299 = vrot.slane %v1282, %v1298
    %v1496 = vunpack.c.l.b16 %v1090
    %v1497 = vunpack.c.h.b16 %v1090
    %v1498 = vunpack.c.l.b16 %v1091
    %v1499 = vunpack.c.h.b16 %v1091
    %v1500 = vunpack.c.l.b16 %v1092
    %v1501 = vunpack.c.h.b16 %v1092
    %v1502 = vunpack.c.l.b16 %v1093
    %v1503 = vunpack.c.h.b16 %v1093
    %v1504 = vunpack.c.l.b16 %v1094
    %v1505 = vunpack.c.h.b16 %v1094
    %v1506 = vunpack.c.l.b16 %v1095
    %v1507 = vunpack.c.h.b16 %v1095
    %v1508 = vunpack.c.l.b16 %v1096
    %v1509 = vunpack.c.h.b16 %v1096
    %v1510 = vunpack.c.l.b16 %v1097
    %v1511 = vunpack.c.h.b16 %v1097
    %v1512 = vunpack.c.l.b16 %v1098
    %v1513 = vunpack.c.h.b16 %v1098
    %v1514 = vunpack.c.l.b16 %v1099
    %v1515 = vunpack.c.h.b16 %v1099
    %v1516 = vunpack.c.l.b16 %v1100
    %v1517 = vunpack.c.h.b16 %v1100
    %v1518 = vunpack.c.l.b16 %v1101
    %v1519 = vunpack.c.h.b16 %v1101
    %v1520 = vunpack.c.l.b16 %v1102
    %v1521 = vunpack.c.h.b16 %v1102
    %v1522 = vunpack.c.l.b16 %v1103
    %v1523 = vunpack.c.h.b16 %v1103
    %v1524 = vunpack.c.l.b16 %v1104
    %v1525 = vunpack.c.h.b16 %v1104
    %v1526 = vunpack.c.l.b16 %v1105
    %v1527 = vunpack.c.h.b16 %v1105
    %v1528 = vunpack.c.l.b16 %v1106
    %v1529 = vunpack.c.h.b16 %v1106
    %v1530 = vunpack.c.l.b16 %v1107
    %v1531 = vunpack.c.h.b16 %v1107
    %v1532 = vunpack.c.l.b16 %v1108
    %v1533 = vunpack.c.h.b16 %v1108
    %v1534 = vunpack.c.l.b16 %v1109
    %v1535 = vunpack.c.h.b16 %v1109
    %v1536 = vunpack.c.l.b16 %v1110
    %v1537 = vunpack.c.h.b16 %v1110
    %v1538 = vunpack.c.l.b16 %v1111
    %v1539 = vunpack.c.h.b16 %v1111
    %v1540 = vunpack.c.l.b16 %v1112
    %v1541 = vunpack.c.h.b16 %v1112
    %v1542 = vunpack.c.l.b16 %v1113
    %v1543 = vunpack.c.h.b16 %v1113
    %v1544 = vunpack.c.l.b16 %v1114
    %v1545 = vunpack.c.h.b16 %v1114
    %v1546 = vunpack.c.l.b16 %v1115
    %v1547 = vunpack.c.h.b16 %v1115
    %v1548 = vunpack.c.l.b16 %v1116
    %v1549 = vunpack.c.h.b16 %v1116
    %v1550 = vunpack.c.l.b16 %v1117
    %v1551 = vunpack.c.h.b16 %v1117
    %v1552 = vunpack.c.l.b16 %v1118
    %v1553 = vunpack.c.h.b16 %v1118
    %v1554 = vunpack.c.l.b16 %v1119
    %v1555 = vunpack.c.h.b16 %v1119
    %v1556 = vunpack.c.l.b16 %v1120
    %v1557 = vunpack.c.h.b16 %v1120
    %v1558 = vunpack.c.l.b16 %v1121
    %v1559 = vunpack.c.h.b16 %v1121
    %v1560 = vunpack.c.l.b16 %v1122
    %v1561 = vunpack.c.h.b16 %v1122
    %v1562 = vunpack.c.l.b16 %v1123
    %v1563 = vunpack.c.h.b16 %v1123
    %v1564 = vunpack.c.l.b16 %v1124
    %v1565 = vunpack.c.h.b16 %v1124
    %v1566 = vunpack.c.l.b16 %v1125
    %v1567 = vunpack.c.h.b16 %v1125
    %v1568 = vunpack.c.l.b16 %v1126
    %v1569 = vunpack.c.h.b16 %v1126
    %v1570 = vunpack.c.l.b16 %v1127
    %v1571 = vunpack.c.h.b16 %v1127
    %v1572 = vunpack.c.l.b16 %v1128
    %v1573 = vunpack.c.h.b16 %v1128
    %v1574 = vunpack.c.l.b16 %v1129
    %v1575 = vunpack.c.h.b16 %v1129
    %v1576 = vunpack.c.l.b16 %v1130
    %v1577 = vunpack.c.h.b16 %v1130
    %v1578 = vunpack.c.l.b16 %v1131
    %v1579 = vunpack.c.h.b16 %v1131
    %v1580 = vunpack.c.l.b16 %v1132
    %v1581 = vunpack.c.h.b16 %v1132
    %v1582 = vunpack.c.l.b16 %v1133
    %v1583 = vunpack.c.h.b16 %v1133
    %v1584 = vunpack.c.l.b16 %v1134
    %v1585 = vunpack.c.h.b16 %v1134
    %v1586 = vunpack.c.l.b16 %v1135
    %v1587 = vunpack.c.h.b16 %v1135
    %v1588 = vunpack.c.l.b16 %v1136
    %v1589 = vunpack.c.h.b16 %v1136
    %v1590 = vunpack.c.l.b16 %v1137
    %v1591 = vunpack.c.h.b16 %v1137
    %v1592 = vunpack.c.l.b16 %v1138
    %v1593 = vunpack.c.h.b16 %v1138
    %v1594 = vunpack.c.l.b16 %v1139
    %v1595 = vunpack.c.h.b16 %v1139
    %v1596 = vunpack.c.l.b16 %v1140
    %v1597 = vunpack.c.h.b16 %v1140
    %v1598 = vunpack.c.l.b16 %v1141
    %v1599 = vunpack.c.h.b16 %v1141
    %v1600 = vunpack.c.l.b16 %v1142
    %v1601 = vunpack.c.h.b16 %v1142
    %v1602 = vunpack.c.l.b16 %v1143
    %v1603 = vunpack.c.h.b16 %v1143
    %v1604 = vunpack.c.l.b16 %v1144
    %v1605 = vunpack.c.h.b16 %v1144
    %v1606 = vunpack.c.l.b16 %v1145
    %v1607 = vunpack.c.h.b16 %v1145
    %v1608 = vunpack.c.l.b16 %v1146
    %v1609 = vunpack.c.h.b16 %v1146
    %v1610 = vunpack.c.l.b16 %v1147
    %v1611 = vunpack.c.h.b16 %v1147
    %v1612 = vunpack.c.l.b16 %v1148
    %v1613 = vunpack.c.h.b16 %v1148
    %v1614 = vunpack.c.l.b16 %v1149
    %v1615 = vunpack.c.h.b16 %v1149
    %v1616 = vunpack.c.l.b16 %v1150
    %v1617 = vunpack.c.h.b16 %v1150
    %v1618 = vunpack.c.l.b16 %v1151
    %v1619 = vunpack.c.h.b16 %v1151
    %v1620 = vunpack.c.l.b16 %v1152
    %v1621 = vunpack.c.h.b16 %v1152
    %v1622 = vunpack.c.l.b16 %v1153
    %v1623 = vunpack.c.h.b16 %v1153
    %v1624 = vunpack.c.l.b16 %v1154
    %v1625 = vunpack.c.h.b16 %v1154
    %v1626 = vunpack.c.l.b16 %v1155
    %v1627 = vunpack.c.h.b16 %v1155
    %v1628 = vunpack.c.l.b16 %v1156
    %v1629 = vunpack.c.h.b16 %v1156
    %v1630 = vunpack.c.l.b16 %v1157
    %v1631 = vunpack.c.h.b16 %v1157
    %v1632 = vunpack.c.l.b16 %v1158
    %v1633 = vunpack.c.h.b16 %v1158
    %v1634 = vunpack.c.l.b16 %v1159
    %v1635 = vunpack.c.h.b16 %v1159
    %v1636 = vunpack.c.l.b16 %v1160
    %v1637 = vunpack.c.h.b16 %v1160
    %v1638 = vunpack.c.l.b16 %v1161
    %v1639 = vunpack.c.h.b16 %v1161
    %v1640 = vunpack.c.l.b16 %v1162
    %v1641 = vunpack.c.h.b16 %v1162
    %v1642 = vunpack.c.l.b16 %v1163
    %v1643 = vunpack.c.h.b16 %v1163
    %v1644 = vunpack.c.l.b16 %v1164
    %v1645 = vunpack.c.h.b16 %v1164
    %v1646 = vunpack.c.l.b16 %v1165
    %v1647 = vunpack.c.h.b16 %v1165
    %v1648 = vunpack.c.l.b16 %v1166
    %v1649 = vunpack.c.h.b16 %v1166
    %v1650 = vunpack.c.l.b16 %v1167
    %v1651 = vunpack.c.h.b16 %v1167
    %v1652 = vunpack.c.l.b16 %v1168
    %v1653 = vunpack.c.h.b16 %v1168
    %v1654 = vunpack.c.l.b16 %v1169
    %v1655 = vunpack.c.h.b16 %v1169
    %v1656 = vunpack.c.l.b16 %v1170
    %v1657 = vunpack.c.h.b16 %v1170
    %v1658 = vunpack.c.l.b16 %v1171
    %v1659 = vunpack.c.h.b16 %v1171
    %v1660 = vunpack.c.l.b16 %v1172
    %v1661 = vunpack.c.h.b16 %v1172
    %v1662 = vunpack.c.l.b16 %v1173
    %v1663 = vunpack.c.h.b16 %v1173
    %v1664 = vunpack.c.l.b16 %v1174
    %v1665 = vunpack.c.h.b16 %v1174
    %v1666 = vunpack.c.l.b16 %v1175
    %v1667 = vunpack.c.h.b16 %v1175
    %v1668 = vunpack.c.l.b16 %v1176
    %v1669 = vunpack.c.h.b16 %v1176
    %v1670 = vunpack.c.l.b16 %v1177
    %v1671 = vunpack.c.h.b16 %v1177
    %v1672 = vunpack.c.l.b16 %v1178
    %v1673 = vunpack.c.h.b16 %v1178
    %v1674 = vunpack.c.l.b16 %v1179
    %v1675 = vunpack.c.h.b16 %v1179
    %v1676 = vunpack.c.l.b16 %v1180
    %v1677 = vunpack.c.h.b16 %v1180
    %v1678 = vunpack.c.l.b16 %v1181
    %v1679 = vunpack.c.h.b16 %v1181
    %v1680 = vunpack.c.l.b16 %v1182
    %v1681 = vunpack.c.h.b16 %v1182
    %v1682 = vunpack.c.l.b16 %v1183
    %v1683 = vunpack.c.h.b16 %v1183
    %v1684 = vunpack.c.l.b16 %v1184
    %v1685 = vunpack.c.h.b16 %v1184
    %v1686 = vunpack.c.l.b16 %v1185
    %v1687 = vunpack.c.h.b16 %v1185
    %v1688 = vunpack.c.l.b16 %v1186
    %v1689 = vunpack.c.h.b16 %v1186
    %v1690 = vunpack.c.l.b16 %v1187
    %v1691 = vunpack.c.h.b16 %v1187
    %v1692 = vunpack.c.l.b16 %v1188
    %v1693 = vunpack.c.h.b16 %v1188
    %v1694 = vunpack.c.l.b16 %v1189
    %v1695 = vunpack.c.h.b16 %v1189
    %v1696 = vunpack.c.l.b16 %v1190
    %v1697 = vunpack.c.h.b16 %v1190
    %v1698 = vunpack.c.l.b16 %v1191
    %v1699 = vunpack.c.h.b16 %v1191
    %v1700 = vunpack.c.l.b16 %v1192
    %v1701 = vunpack.c.h.b16 %v1192
    %v1702 = vunpack.c.l.b16 %v1193
    %v1703 = vunpack.c.h.b16 %v1193
    %v1704 = vunpack.c.l.b16 %v1194
    %v1705 = vunpack.c.h.b16 %v1194
    %v1706 = vunpack.c.l.b16 %v1195
    %v1707 = vunpack.c.h.b16 %v1195
    %v1708 = vunpack.c.l.b16 %v1196
    %v1709 = vunpack.c.h.b16 %v1196
    %v1710 = vunpack.c.l.b16 %v1197
    %v1711 = vunpack.c.h.b16 %v1197
    %v1712 = vunpack.c.l.b16 %v1198
    %v1713 = vunpack.c.h.b16 %v1198
    %v1714 = vunpack.c.l.b16 %v1199
    %v1715 = vunpack.c.h.b16 %v1199
    %v1716 = vunpack.c.l.b16 %v1200
    %v1717 = vunpack.c.h.b16 %v1200
    %v1718 = vunpack.c.l.b16 %v1201
    %v1719 = vunpack.c.h.b16 %v1201
    %v1720 = vunpack.c.l.b16 %v1202
    %v1721 = vunpack.c.h.b16 %v1202
    %v1722 = vunpack.c.l.b16 %v1203
    %v1723 = vunpack.c.h.b16 %v1203
    %v1724 = vunpack.c.l.b16 %v1204
    %v1725 = vunpack.c.h.b16 %v1204
    %v1726 = vunpack.c.l.b16 %v1205
    %v1727 = vunpack.c.h.b16 %v1205
    %v1728 = vunpack.c.l.b16 %v1206
    %v1729 = vunpack.c.h.b16 %v1206
    %v1730 = vunpack.c.l.b16 %v1207
    %v1731 = vunpack.c.h.b16 %v1207
    %v1732 = vunpack.c.l.b16 %v1208
    %v1733 = vunpack.c.h.b16 %v1208
    %v1734 = vunpack.c.l.b16 %v1209
    %v1735 = vunpack.c.h.b16 %v1209
    %v1736 = vunpack.c.l.b16 %v1210
    %v1737 = vunpack.c.h.b16 %v1210
    %v1738 = vunpack.c.l.b16 %v1211
    %v1739 = vunpack.c.h.b16 %v1211
    %v1740 = vunpack.c.l.b16 %v1212
    %v1741 = vunpack.c.h.b16 %v1212
    %v1742 = vunpack.c.l.b16 %v1213
    %v1743 = vunpack.c.h.b16 %v1213
    %v1744 = vunpack.c.l.b16 %v1214
    %v1745 = vunpack.c.h.b16 %v1214
    %v1746 = vunpack.c.l.b16 %v1215
    %v1747 = vunpack.c.h.b16 %v1215
    %v1748 = vunpack.c.l.b16 %v1216
    %v1749 = vunpack.c.h.b16 %v1216
    %v1750 = vunpack.c.l.b16 %v1217
    %v1751 = vunpack.c.h.b16 %v1217
    %v1752 = vunpack.c.l.b16 %v1218
    %v1753 = vunpack.c.h.b16 %v1218
    %v1754 = vunpack.c.l.b16 %v1219
    %v1755 = vunpack.c.h.b16 %v1219
    %v1756 = vunpack.c.l.b16 %v1220
    %v1757 = vunpack.c.h.b16 %v1220
    %v1758 = vunpack.c.l.b16 %v1221
    %v1759 = vunpack.c.h.b16 %v1221
    %v1760 = vunpack.c.l.b16 %v1222
    %v1761 = vunpack.c.h.b16 %v1222
    %v1762 = vunpack.c.l.b16 %v1223
    %v1763 = vunpack.c.h.b16 %v1223
    %v1764 = vunpack.c.l.b16 %v1224
    %v1765 = vunpack.c.h.b16 %v1224
    %v1766 = vunpack.c.l.b16 %v1225
    %v1767 = vunpack.c.h.b16 %v1225
    %v1768 = vunpack.c.l.b16 %v1226
    %v1769 = vunpack.c.h.b16 %v1226
    %v1770 = vunpack.c.l.b16 %v1227
    %v1771 = vunpack.c.h.b16 %v1227
    %v1772 = vunpack.c.l.b16 %v1228
    %v1773 = vunpack.c.h.b16 %v1228
    %v1774 = vunpack.c.l.b16 %v1229
    %v1775 = vunpack.c.h.b16 %v1229
    %v1776 = vunpack.c.l.b16 %v1230
    %v1777 = vunpack.c.h.b16 %v1230
    %v1778 = vunpack.c.l.b16 %v1231
    %v1779 = vunpack.c.h.b16 %v1231
    %v1780 = vunpack.c.l.b16 %v1232
    %v1781 = vunpack.c.h.b16 %v1232
    %v1782 = vunpack.c.l.b16 %v1233
    %v1783 = vunpack.c.h.b16 %v1233
    %v1784 = vunpack.c.l.b16 %v1234
    %v1785 = vunpack.c.h.b16 %v1234
    %v1786 = vunpack.c.l.b16 %v1235
    %v1787 = vunpack.c.h.b16 %v1235
    %v1788 = vunpack.c.l.b16 %v1236
    %v1789 = vunpack.c.h.b16 %v1236
    %v1790 = vunpack.c.l.b16 %v1237
    %v1791 = vunpack.c.h.b16 %v1237
    %v1792 = vunpack.c.l.b16 %v1238
    %v1793 = vunpack.c.h.b16 %v1238
    %v1794 = vunpack.c.l.b16 %v1239
    %v1795 = vunpack.c.h.b16 %v1239
    %v1796 = vunpack.c.l.b16 %v1240
    %v1797 = vunpack.c.h.b16 %v1240
    %v1798 = vunpack.c.l.b16 %v1241
    %v1799 = vunpack.c.h.b16 %v1241
    %v1800 = vunpack.c.l.b16 %v1242
    %v1801 = vunpack.c.h.b16 %v1242
    %v1802 = vunpack.c.l.b16 %v1243
    %v1803 = vunpack.c.h.b16 %v1243
    %v1804 = vunpack.c.l.b16 %v1244
    %v1805 = vunpack.c.h.b16 %v1244
    %v1806 = vunpack.c.l.b16 %v1245
    %v1807 = vunpack.c.h.b16 %v1245
    %v1808 = vunpack.c.l.b16 %v1246
    %v1809 = vunpack.c.h.b16 %v1246
    %v1810 = vunpack.c.l.b16 %v1247
    %v1811 = vunpack.c.h.b16 %v1247
    %v1812 = vunpack.c.l.b16 %v1248
    %v1813 = vunpack.c.h.b16 %v1248
    %v1814 = vunpack.c.l.b16 %v1249
    %v1815 = vunpack.c.h.b16 %v1249
    %v1816 = vunpack.c.l.b16 %v1250
    %v1817 = vunpack.c.h.b16 %v1250
    %v1818 = vunpack.c.l.b16 %v1251
    %v1819 = vunpack.c.h.b16 %v1251
    %v1820 = vunpack.c.l.b16 %v1252
    %v1821 = vunpack.c.h.b16 %v1252
    %v1822 = vunpack.c.l.b16 %v1253
    %v1823 = vunpack.c.h.b16 %v1253
    %v1824 = vunpack.c.l.b16 %v1254
    %v1825 = vunpack.c.h.b16 %v1254
    %v1826 = vunpack.c.l.b16 %v1255
    %v1827 = vunpack.c.h.b16 %v1255
    %v1828 = vunpack.c.l.b16 %v1256
    %v1829 = vunpack.c.h.b16 %v1256
    %v1830 = vunpack.c.l.b16 %v1257
    %v1831 = vunpack.c.h.b16 %v1257
    %v1832 = vunpack.c.l.b16 %v1258
    %v1833 = vunpack.c.h.b16 %v1258
    %v1834 = vunpack.c.l.b16 %v1259
    %v1835 = vunpack.c.h.b16 %v1259
    %v1836 = vunpack.c.l.b16 %v1260
    %v1837 = vunpack.c.h.b16 %v1260
    %v1838 = vunpack.c.l.b16 %v1261
    %v1839 = vunpack.c.h.b16 %v1261
    %v1840 = vunpack.c.l.b16 %v1262
    %v1841 = vunpack.c.h.b16 %v1262
    %v1842 = vunpack.c.l.b16 %v1263
    %v1843 = vunpack.c.h.b16 %v1263
    %v1844 = vunpack.c.l.b16 %v1264
    %v1845 = vunpack.c.h.b16 %v1264
    %v1846 = vunpack.c.l.b16 %v1265
    %v1847 = vunpack.c.h.b16 %v1265
    %v1848 = vunpack.c.l.b16 %v1266
    %v1849 = vunpack.c.h.b16 %v1266
    %v1850 = vunpack.c.l.b16 %v1267
    %v1851 = vunpack.c.h.b16 %v1267
    %v1852 = vunpack.c.l.b16 %v1268
    %v1853 = vunpack.c.h.b16 %v1268
    %v1854 = vunpack.c.l.b16 %v1269
    %v1855 = vunpack.c.h.b16 %v1269
    %v1856 = vunpack.c.l.b16 %v1270
    %v1857 = vunpack.c.h.b16 %v1270
    %v1858 = vunpack.c.l.b16 %v1271
    %v1859 = vunpack.c.h.b16 %v1271
    %v1860 = vunpack.c.l.b16 %v1272
    %v1861 = vunpack.c.h.b16 %v1272
    %v1862 = vunpack.c.l.b16 %v1273
    %v1863 = vunpack.c.h.b16 %v1273
    %v1864 = vunpack.c.l.b16 %v1274
    %v1865 = vunpack.c.h.b16 %v1274
    %v1866 = vunpack.c.l.b16 %v1275
    %v1867 = vunpack.c.h.b16 %v1275
    %v1868 = vunpack.c.l.b16 %v1276
    %v1869 = vunpack.c.h.b16 %v1276
    %v1870 = vunpack.c.l.b16 %v1277
    %v1871 = vunpack.c.h.b16 %v1277
    %v1872 = vunpack.c.l.b16 %v1278
    %v1873 = vunpack.c.h.b16 %v1278
    %v1874 = vunpack.c.l.b16 %v1279
    %v1875 = vunpack.c.h.b16 %v1279
    %v1876 = vunpack.c.l.b16 %v1280
    %v1877 = vunpack.c.h.b16 %v1280
    %v1878 = vunpack.c.l.b16 %v1281
    %v1879 = vunpack.c.h.b16 %v1281
    %v1880 = vpack.c.b16 %v1500, %v1496
    %v1881 = vpack.c.b16 %v1501, %v1497
    %v1882 = vpack.c.b16 %v1502, %v1498
    %v1883 = vpack.c.b16 %v1503, %v1499
    %v1884 = vpack.c.b16 %v1508, %v1504
    %v1885 = vpack.c.b16 %v1509, %v1505
    %v1886 = vpack.c.b16 %v1510, %v1506
    %v1887 = vpack.c.b16 %v1511, %v1507
    %v1888 = vpack.c.b16 %v1516, %v1512
    %v1889 = vpack.c.b16 %v1517, %v1513
    %v1890 = vpack.c.b16 %v1518, %v1514
    %v1891 = vpack.c.b16 %v1519, %v1515
    %v1892 = vpack.c.b16 %v1524, %v1520
    %v1893 = vpack.c.b16 %v1525, %v1521
    %v1894 = vpack.c.b16 %v1526, %v1522
    %v1895 = vpack.c.b16 %v1527, %v1523
    %v1896 = vpack.c.b16 %v1532, %v1528
    %v1897 = vpack.c.b16 %v1533, %v1529
    %v1898 = vpack.c.b16 %v1534, %v1530
    %v1899 = vpack.c.b16 %v1535, %v1531
    %v1900 = vpack.c.b16 %v1540, %v1536
    %v1901 = vpack.c.b16 %v1541, %v1537
    %v1902 = vpack.c.b16 %v1542, %v1538
    %v1903 = vpack.c.b16 %v1543, %v1539
    %v1904 = vpack.c.b16 %v1548, %v1544
    %v1905 = vpack.c.b16 %v1549, %v1545
    %v1906 = vpack.c.b16 %v1550, %v1546
    %v1907 = vpack.c.b16 %v1551, %v1547
    %v1908 = vpack.c.b16 %v1556, %v1552
    %v1909 = vpack.c.b16 %v1557, %v1553
    %v1910 = vpack.c.b16 %v1558, %v1554
    %v1911 = vpack.c.b16 %v1559, %v1555
    %v1912 = vpack.c.b16 %v1564, %v1560
    %v1913 = vpack.c.b16 %v1565, %v1561
    %v1914 = vpack.c.b16 %v1566, %v1562
    %v1915 = vpack.c.b16 %v1567, %v1563
    %v1916 = vpack.c.b16 %v1572, %v1568
    %v1917 = vpack.c.b16 %v1573, %v1569
    %v1918 = vpack.c.b16 %v1574, %v1570
    %v1919 = vpack.c.b16 %v1575, %v1571
    %v1920 = vpack.c.b16 %v1580, %v1576
    %v1921 = vpack.c.b16 %v1581, %v1577
    %v1922 = vpack.c.b16 %v1582, %v1578
    %v1923 = vpack.c.b16 %v1583, %v1579
    %v1924 = vpack.c.b16 %v1588, %v1584
    %v1925 = vpack.c.b16 %v1589, %v1585
    %v1926 = vpack.c.b16 %v1590, %v1586
    %v1927 = vpack.c.b16 %v1591, %v1587
    %v1928 = vpack.c.b16 %v1596, %v1592
    %v1929 = vpack.c.b16 %v1597, %v1593
    %v1930 = vpack.c.b16 %v1598, %v1594
    %v1931 = vpack.c.b16 %v1599, %v1595
    %v1932 = vpack.c.b16 %v1604, %v1600
    %v1933 = vpack.c.b16 %v1605, %v1601
    %v1934 = vpack.c.b16 %v1606, %v1602
    %v1935 = vpack.c.b16 %v1607, %v1603
    %v1936 = vpack.c.b16 %v1612, %v1608
    %v1937 = vpack.c.b16 %v1613, %v1609
    %v1938 = vpack.c.b16 %v1614, %v1610
    %v1939 = vpack.c.b16 %v1615, %v1611
    %v1940 = vpack.c.b16 %v1620, %v1616
    %v1941 = vpack.c.b16 %v1621, %v1617
    %v1942 = vpack.c.b16 %v1622, %v1618
    %v1943 = vpack.c.b16 %v1623, %v1619
    %v1944 = vpack.c.b16 %v1628, %v1624
    %v1945 = vpack.c.b16 %v1629, %v1625
    %v1946 = vpack.c.b16 %v1630, %v1626
    %v1947 = vpack.c.b16 %v1631, %v1627
    %v1948 = vpack.c.b16 %v1636, %v1632
    %v1949 = vpack.c.b16 %v1637, %v1633
    %v1950 = vpack.c.b16 %v1638, %v1634
    %v1951 = vpack.c.b16 %v1639, %v1635
    %v1952 = vpack.c.b16 %v1644, %v1640
    %v1953 = vpack.c.b16 %v1645, %v1641
    %v1954 = vpack.c.b16 %v1646, %v1642
    %v1955 = vpack.c.b16 %v1647, %v1643
    %v1956 = vpack.c.b16 %v1652, %v1648
    %v1957 = vpack.c.b16 %v1653, %v1649
    %v1958 = vpack.c.b16 %v1654, %v1650
    %v1959 = vpack.c.b16 %v1655, %v1651
    %v1960 = vpack.c.b16 %v1660, %v1656
    %v1961 = vpack.c.b16 %v1661, %v1657
    %v1962 = vpack.c.b16 %v1662, %v1658
    %v1963 = vpack.c.b16 %v1663, %v1659
    %v1964 = vpack.c.b16 %v1668, %v1664
    %v1965 = vpack.c.b16 %v1669, %v1665
    %v1966 = vpack.c.b16 %v1670, %v1666
    %v1967 = vpack.c.b16 %v1671, %v1667
    %v1968 = vpack.c.b16 %v1676, %v1672
    %v1969 = vpack.c.b16 %v1677, %v1673
    %v1970 = vpack.c.b16 %v1678, %v1674
    %v1971 = vpack.c.b16 %v1679, %v1675
    %v1972 = vpack.c.b16 %v1684, %v1680
    %v1973 = vpack.c.b16 %v1685, %v1681
    %v1974 = vpack.c.b16 %v1686, %v1682
    %v1975 = vpack.c.b16 %v1687, %v1683
    %v1976 = vpack.c.b16 %v1692, %v1688
    %v1977 = vpack.c.b16 %v1693, %v1689
    %v1978 = vpack.c.b16 %v1694, %v1690
    %v1979 = vpack.c.b16 %v1695, %v1691
    %v1980 = vpack.c.b16 %v1700, %v1696
    %v1981 = vpack.c.b16 %v1701, %v1697
    %v1982 = vpack.c.b16 %v1702, %v1698
    %v1983 = vpack.c.b16 %v1703, %v1699
    %v1984 = vpack.c.b16 %v1708, %v1704
    %v1985 = vpack.c.b16 %v1709, %v1705
    %v1986 = vpack.c.b16 %v1710, %v1706
    %v1987 = vpack.c.b16 %v1711, %v1707
    %v1988 = vpack.c.b16 %v1716, %v1712
    %v1989 = vpack.c.b16 %v1717, %v1713
    %v1990 = vpack.c.b16 %v1718, %v1714
    %v1991 = vpack.c.b16 %v1719, %v1715
    %v1992 = vpack.c.b16 %v1724, %v1720
    %v1993 = vpack.c.b16 %v1725, %v1721
    %v1994 = vpack.c.b16 %v1726, %v1722
    %v1995 = vpack.c.b16 %v1727, %v1723
    %v1996 = vpack.c.b16 %v1732, %v1728
    %v1997 = vpack.c.b16 %v1733, %v1729
    %v1998 = vpack.c.b16 %v1734, %v1730
    %v1999 = vpack.c.b16 %v1735, %v1731
    %v2000 = vpack.c.b16 %v1740, %v1736
    %v2001 = vpack.c.b16 %v1741, %v1737
    %v2002 = vpack.c.b16 %v1742, %v1738
    %v2003 = vpack.c.b16 %v1743, %v1739
    %v2004 = vpack.c.b16 %v1748, %v1744
    %v2005 = vpack.c.b16 %v1749, %v1745
    %v2006 = vpack.c.b16 %v1750, %v1746
    %v2007 = vpack.c.b16 %v1751, %v1747
    %v2008 = vpack.c.b16 %v1756, %v1752
    %v2009 = vpack.c.b16 %v1757, %v1753
    %v2010 = vpack.c.b16 %v1758, %v1754
    %v2011 = vpack.c.b16 %v1759, %v1755
    %v2012 = vpack.c.b16 %v1764, %v1760
    %v2013 = vpack.c.b16 %v1765, %v1761
    %v2014 = vpack.c.b16 %v1766, %v1762
    %v2015 = vpack.c.b16 %v1767, %v1763
    %v2016 = vpack.c.b16 %v1772, %v1768
    %v2017 = vpack.c.b16 %v1773, %v1769
    %v2018 = vpack.c.b16 %v1774, %v1770
    %v2019 = vpack.c.b16 %v1775, %v1771
    %v2020 = vpack.c.b16 %v1780, %v1776
    %v2021 = vpack.c.b16 %v1781, %v1777
    %v2022 = vpack.c.b16 %v1782, %v1778
    %v2023 = vpack.c.b16 %v1783, %v1779
    %v2024 = vpack.c.b16 %v1788, %v1784
    %v2025 = vpack.c.b16 %v1789, %v1785
    %v2026 = vpack.c.b16 %v1790, %v1786
    %v2027 = vpack.c.b16 %v1791, %v1787
    %v2028 = vpack.c.b16 %v1796, %v1792
    %v2029 = vpack.c.b16 %v1797, %v1793
    %v2030 = vpack.c.b16 %v1798, %v1794
    %v2031 = vpack.c.b16 %v1799, %v1795
    %v2032 = vpack.c.b16 %v1804, %v1800
    %v2033 = vpack.c.b16 %v1805, %v1801
    %v2034 = vpack.c.b16 %v1806, %v1802
    %v2035 = vpack.c.b16 %v1807, %v1803
    %v2036 = vpack.c.b16 %v1812, %v1808
    %v2037 = vpack.c.b16 %v1813, %v1809
    %v2038 = vpack.c.b16 %v1814, %v1810
    %v2039 = vpack.c.b16 %v1815, %v1811
    %v2040 = vpack.c.b16 %v1820, %v1816
    %v2041 = vpack.c.b16 %v1821, %v1817
    %v2042 = vpack.c.b16 %v1822, %v1818
    %v2043 = vpack.c.b16 %v1823, %v1819
    %v2044 = vpack.c.b16 %v1828, %v1824
    %v2045 = vpack.c.b16 %v1829, %v1825
    %v2046 = vpack.c.b16 %v1830, %v1826
    %v2047 = vpack.c.b16 %v1831, %v1827
    %v2048 = vpack.c.b16 %v1836, %v1832
    %v2049 = vpack.c.b16 %v1837, %v1833
    %v2050 = vpack.c.b16 %v1838, %v1834
    %v2051 = vpack.c.b16 %v1839, %v1835
    %v2052 = vpack.c.b16 %v1844, %v1840
    %v2053 = vpack.c.b16 %v1845, %v1841
    %v2054 = vpack.c.b16 %v1846, %v1842
    %v2055 = vpack.c.b16 %v1847, %v1843
    %v2056 = vpack.c.b16 %v1852, %v1848
    %v2057 = vpack.c.b16 %v1853, %v1849
    %v2058 = vpack.c.b16 %v1854, %v1850
    %v2059 = vpack.c.b16 %v1855, %v1851
    %v2060 = vpack.c.b16 %v1860, %v1856
    %v2061 = vpack.c.b16 %v1861, %v1857
    %v2062 = vpack.c.b16 %v1862, %v1858
    %v2063 = vpack.c.b16 %v1863, %v1859
    %v2064 = vpack.c.b16 %v1868, %v1864
    %v2065 = vpack.c.b16 %v1869, %v1865
    %v2066 = vpack.c.b16 %v1870, %v1866
    %v2067 = vpack.c.b16 %v1871, %v1867
    %v2068 = vpack.c.b16 %v1876, %v1872
    %v2069 = vpack.c.b16 %v1877, %v1873
    %v2070 = vpack.c.b16 %v1878, %v1874
    %v2071 = vpack.c.b16 %v1879, %v1875
    %2264 = vmatprep.subr.bf16.mxu0 %v1881
    %2265 = vmatpush1.bf16.msra.mxu0 %v1880
    %2266 = vmatprep.subr.bf16.mxu0 %v1885
    %2267 = vmatpush1.bf16.msra.mxu0 %v1884
    %2268 = vmatprep.subr.bf16.mxu0 %v1889
    %2269 = vmatpush1.bf16.msra.mxu0 %v1888
    %2270 = vmatprep.subr.bf16.mxu0 %v1893
    %2271 = vmatpush1.bf16.msra.mxu0 %v1892
    %2272 = vmatprep.subr.bf16.mxu0 %v1897
    %2273 = vmatpush1.bf16.msra.mxu0 %v1896
    %2274 = vmatprep.subr.bf16.mxu0 %v1901
    %2275 = vmatpush1.bf16.msra.mxu0 %v1900
    %2276 = vmatprep.subr.bf16.mxu0 %v1905
    %2277 = vmatpush1.bf16.msra.mxu0 %v1904
    %2278 = vmatprep.subr.bf16.mxu0 %v1909
    %2279 = vmatpush1.bf16.msra.mxu0 %v1908
    %2280 = vmatprep.subr.bf16.mxu0 %v1913
    %2281 = vmatpush1.bf16.msra.mxu0 %v1912
    %2282 = vmatprep.subr.bf16.mxu0 %v1917
    %2283 = vmatpush1.bf16.msra.mxu0 %v1916
    %2284 = vmatprep.subr.bf16.mxu0 %v1921
    %2285 = vmatpush1.bf16.msra.mxu0 %v1920
    %2286 = vmatprep.subr.bf16.mxu0 %v1925
    %2287 = vmatpush1.bf16.msra.mxu0 %v1924
    %2288 = vmatprep.subr.bf16.mxu0 %v1929
    %2289 = vmatpush1.bf16.msra.mxu0 %v1928
    %2290 = vmatprep.subr.bf16.mxu0 %v1933
    %2291 = vmatpush1.bf16.msra.mxu0 %v1932
    %2292 = vmatprep.subr.bf16.mxu0 %v1937
    %2293 = vmatpush1.bf16.msra.mxu0 %v1936
    %2294 = vmatprep.subr.bf16.mxu0 %v1941
    %2295 = vmatpush1.bf16.msra.mxu0 %v1940
    %2296 = vmatprep.mubr.bf16.mxu0 %v1085
    %2297 = vmatmul.mubr.bf16.gmra.mrb[0].mxu0 %v1084
    %v2298 = vpop.f32.mrb[0].mxu0
    %v2299 = vadd.f32 %v1287, %v2298
    %v2300 = vpop.f32.mrb[0].mxu0
    %v2301 = vadd.f32 %v1291, %v2300
    %v2302 = vpop.f32.mrb[0].mxu0
    %v2303 = vadd.f32 %v1287, %v2302
    %v2304 = vpop.f32.mrb[0].mxu0
    %v2305 = vadd.f32 %v1291, %v2304
    %2306 = vdwg.mxu0
    %2307 = vmatprep.subr.bf16.mxu0 %v1945
    %2308 = vmatpush1.bf16.msra.mxu0 %v1944
    %2309 = vmatprep.subr.bf16.mxu0 %v1949
    %2310 = vmatpush1.bf16.msra.mxu0 %v1948
    %2311 = vmatprep.subr.bf16.mxu0 %v1953
    %2312 = vmatpush1.bf16.msra.mxu0 %v1952
    %2313 = vmatprep.subr.bf16.mxu0 %v1957
    %2314 = vmatpush1.bf16.msra.mxu0 %v1956
    %2315 = vmatprep.subr.bf16.mxu0 %v1961
    %2316 = vmatpush1.bf16.msra.mxu0 %v1960
    %2317 = vmatprep.subr.bf16.mxu0 %v1965
    %2318 = vmatpush1.bf16.msra.mxu0 %v1964
    %2319 = vmatprep.subr.bf16.mxu0 %v1969
    %2320 = vmatpush1.bf16.msra.mxu0 %v1968
    %2321 = vmatprep.subr.bf16.mxu0 %v1973
    %2322 = vmatpush1.bf16.msra.mxu0 %v1972
    %2323 = vmatprep.subr.bf16.mxu0 %v1977
    %2324 = vmatpush1.bf16.msra.mxu0 %v1976
    %2325 = vmatprep.subr.bf16.mxu0 %v1981
    %2326 = vmatpush1.bf16.msra.mxu0 %v1980
    %2327 = vmatprep.subr.bf16.mxu0 %v1985
    %2328 = vmatpush1.bf16.msra.mxu0 %v1984
    %2329 = vmatprep.subr.bf16.mxu0 %v1989
    %2330 = vmatpush1.bf16.msra.mxu0 %v1988
    %2331 = vmatprep.subr.bf16.mxu0 %v1993
    %2332 = vmatpush1.bf16.msra.mxu0 %v1992
    %2333 = vmatprep.subr.bf16.mxu0 %v1997
    %2334 = vmatpush1.bf16.msra.mxu0 %v1996
    %2335 = vmatprep.subr.bf16.mxu0 %v2001
    %2336 = vmatpush1.bf16.msra.mxu0 %v2000
    %2337 = vmatprep.subr.bf16.mxu0 %v2005
    %2338 = vmatpush1.bf16.msra.mxu0 %v2004
    %2339 = vmatprep.mubr.bf16.mxu0 %v1087
    %2340 = vmatmul.mubr.bf16.gmra.mrb[0].mxu0 %v1086
    %v2341 = vpop.f32.mrb[0].mxu0
    %v2342 = vadd.f32 %v2299, %v2341
    %v2343 = vpop.f32.mrb[0].mxu0
    %v2344 = vadd.f32 %v2301, %v2343
    %v2345 = vpop.f32.mrb[0].mxu0
    %v2346 = vadd.f32 %v2303, %v2345
    %v2347 = vpop.f32.mrb[0].mxu0
    %v2348 = vadd.f32 %v2305, %v2347
    %2349 = vdwg.mxu0
    %2350 = vmatprep.subr.bf16.mxu0 %v2009
    %2351 = vmatpush1.bf16.msra.mxu0 %v2008
    %2352 = vmatprep.subr.bf16.mxu0 %v2013
    %2353 = vmatpush1.bf16.msra.mxu0 %v2012
    %2354 = vmatprep.subr.bf16.mxu0 %v2017
    %2355 = vmatpush1.bf16.msra.mxu0 %v2016
    %2356 = vmatprep.subr.bf16.mxu0 %v2021
    %2357 = vmatpush1.bf16.msra.mxu0 %v2020
    %2358 = vmatprep.subr.bf16.mxu0 %v2025
    %2359 = vmatpush1.bf16.msra.mxu0 %v2024
    %2360 = vmatprep.subr.bf16.mxu0 %v2029
    %2361 = vmatpush1.bf16.msra.mxu0 %v2028
    %2362 = vmatprep.subr.bf16.mxu0 %v2033
    %2363 = vmatpush1.bf16.msra.mxu0 %v2032
    %2364 = vmatprep.subr.bf16.mxu0 %v2037
    %2365 = vmatpush1.bf16.msra.mxu0 %v2036
    %2366 = vmatprep.subr.bf16.mxu0 %v2041
    %2367 = vmatpush1.bf16.msra.mxu0 %v2040
    %2368 = vmatprep.subr.bf16.mxu0 %v2045
    %2369 = vmatpush1.bf16.msra.mxu0 %v2044
    %2370 = vmatprep.subr.bf16.mxu0 %v2049
    %2371 = vmatpush1.bf16.msra.mxu0 %v2048
    %2372 = vmatprep.subr.bf16.mxu0 %v2053
    %2373 = vmatpush1.bf16.msra.mxu0 %v2052
    %2374 = vmatprep.subr.bf16.mxu0 %v2057
    %2375 = vmatpush1.bf16.msra.mxu0 %v2056
    %2376 = vmatprep.subr.bf16.mxu0 %v2061
    %2377 = vmatpush1.bf16.msra.mxu0 %v2060
    %2378 = vmatprep.subr.bf16.mxu0 %v2065
    %2379 = vmatpush1.bf16.msra.mxu0 %v2064
    %2380 = vmatprep.subr.bf16.mxu0 %v2069
    %2381 = vmatpush1.bf16.msra.mxu0 %v2068
    %2382 = vmatprep.mubr.bf16.mxu0 %v1089
    %2383 = vmatmul.mubr.bf16.gmra.mrb[0].mxu0 %v1088
    %v2384 = vpop.f32.mrb[0].mxu0
    %v2385 = vadd.f32 %v2342, %v2384
    %v2386 = vpop.f32.mrb[0].mxu0
    %v2387 = vadd.f32 %v2344, %v2386
    %v2388 = vpop.f32.mrb[0].mxu0
    %v2389 = vadd.f32 %v2346, %v2388
    %v2390 = vpop.f32.mrb[0].mxu0
    %v2391 = vadd.f32 %v2348, %v2390
    %2392 = vdwg.mxu0
    %2393 = vmatprep.subr.bf16.mxu0 %v1883
    %2394 = vmatpush1.bf16.msra.mxu0 %v1882
    %2395 = vmatprep.subr.bf16.mxu0 %v1887
    %2396 = vmatpush1.bf16.msra.mxu0 %v1886
    %2397 = vmatprep.subr.bf16.mxu0 %v1891
    %2398 = vmatpush1.bf16.msra.mxu0 %v1890
    %2399 = vmatprep.subr.bf16.mxu0 %v1895
    %2400 = vmatpush1.bf16.msra.mxu0 %v1894
    %2401 = vmatprep.subr.bf16.mxu0 %v1899
    %2402 = vmatpush1.bf16.msra.mxu0 %v1898
    %2403 = vmatprep.subr.bf16.mxu0 %v1903
    %2404 = vmatpush1.bf16.msra.mxu0 %v1902
    %2405 = vmatprep.subr.bf16.mxu0 %v1907
    %2406 = vmatpush1.bf16.msra.mxu0 %v1906
    %2407 = vmatprep.subr.bf16.mxu0 %v1911
    %2408 = vmatpush1.bf16.msra.mxu0 %v1910
    %2409 = vmatprep.subr.bf16.mxu0 %v1915
    %2410 = vmatpush1.bf16.msra.mxu0 %v1914
    %2411 = vmatprep.subr.bf16.mxu0 %v1919
    %2412 = vmatpush1.bf16.msra.mxu0 %v1918
    %2413 = vmatprep.subr.bf16.mxu0 %v1923
    %2414 = vmatpush1.bf16.msra.mxu0 %v1922
    %2415 = vmatprep.subr.bf16.mxu0 %v1927
    %2416 = vmatpush1.bf16.msra.mxu0 %v1926
    %2417 = vmatprep.subr.bf16.mxu0 %v1931
    %2418 = vmatpush1.bf16.msra.mxu0 %v1930
    %2419 = vmatprep.subr.bf16.mxu0 %v1935
    %2420 = vmatpush1.bf16.msra.mxu0 %v1934
    %2421 = vmatprep.subr.bf16.mxu0 %v1939
    %2422 = vmatpush1.bf16.msra.mxu0 %v1938
    %2423 = vmatprep.subr.bf16.mxu0 %v1943
    %2424 = vmatpush1.bf16.msra.mxu0 %v1942
    %2425 = vmatprep.mubr.bf16.mxu0 %v1085
    %2426 = vmatmul.mubr.bf16.gmra.mrb[0].mxu0 %v1084
    %v2427 = vpop.f32.mrb[0].mxu0
    %v2428 = vadd.f32 %v1295, %v2427
    %v2429 = vpop.f32.mrb[0].mxu0
    %v2430 = vadd.f32 %v1299, %v2429
    %v2431 = vpop.f32.mrb[0].mxu0
    %v2432 = vadd.f32 %v1295, %v2431
    %v2433 = vpop.f32.mrb[0].mxu0
    %v2434 = vadd.f32 %v1299, %v2433
    %2435 = vdwg.mxu0
    %2436 = vmatprep.subr.bf16.mxu0 %v1947
    %2437 = vmatpush1.bf16.msra.mxu0 %v1946
    %2438 = vmatprep.subr.bf16.mxu0 %v1951
    %2439 = vmatpush1.bf16.msra.mxu0 %v1950
    %2440 = vmatprep.subr.bf16.mxu0 %v1955
    %2441 = vmatpush1.bf16.msra.mxu0 %v1954
    %2442 = vmatprep.subr.bf16.mxu0 %v1959
    %2443 = vmatpush1.bf16.msra.mxu0 %v1958
    %2444 = vmatprep.subr.bf16.mxu0 %v1963
    %2445 = vmatpush1.bf16.msra.mxu0 %v1962
    %2446 = vmatprep.subr.bf16.mxu0 %v1967
    %2447 = vmatpush1.bf16.msra.mxu0 %v1966
    %2448 = vmatprep.subr.bf16.mxu0 %v1971
    %2449 = vmatpush1.bf16.msra.mxu0 %v1970
    %2450 = vmatprep.subr.bf16.mxu0 %v1975
    %2451 = vmatpush1.bf16.msra.mxu0 %v1974
    %2452 = vmatprep.subr.bf16.mxu0 %v1979
    %2453 = vmatpush1.bf16.msra.mxu0 %v1978
    %2454 = vmatprep.subr.bf16.mxu0 %v1983
    %2455 = vmatpush1.bf16.msra.mxu0 %v1982
    %2456 = vmatprep.subr.bf16.mxu0 %v1987
    %2457 = vmatpush1.bf16.msra.mxu0 %v1986
    %2458 = vmatprep.subr.bf16.mxu0 %v1991
    %2459 = vmatpush1.bf16.msra.mxu0 %v1990
    %2460 = vmatprep.subr.bf16.mxu0 %v1995
    %2461 = vmatpush1.bf16.msra.mxu0 %v1994
    %2462 = vmatprep.subr.bf16.mxu0 %v1999
    %2463 = vmatpush1.bf16.msra.mxu0 %v1998
    %2464 = vmatprep.subr.bf16.mxu0 %v2003
    %2465 = vmatpush1.bf16.msra.mxu0 %v2002
    %2466 = vmatprep.subr.bf16.mxu0 %v2007
    %2467 = vmatpush1.bf16.msra.mxu0 %v2006
    %2468 = vmatprep.mubr.bf16.mxu0 %v1087
    %2469 = vmatmul.mubr.bf16.gmra.mrb[0].mxu0 %v1086
    %v2470 = vpop.f32.mrb[0].mxu0
    %v2471 = vadd.f32 %v2428, %v2470
    %v2472 = vpop.f32.mrb[0].mxu0
    %v2473 = vadd.f32 %v2430, %v2472
    %v2474 = vpop.f32.mrb[0].mxu0
    %v2475 = vadd.f32 %v2432, %v2474
    %v2476 = vpop.f32.mrb[0].mxu0
    %v2477 = vadd.f32 %v2434, %v2476
    %2478 = vdwg.mxu0
    %2479 = vmatprep.subr.bf16.mxu0 %v2011
    %2480 = vmatpush1.bf16.msra.mxu0 %v2010
    %2481 = vmatprep.subr.bf16.mxu0 %v2015
    %2482 = vmatpush1.bf16.msra.mxu0 %v2014
    %2483 = vmatprep.subr.bf16.mxu0 %v2019
    %2484 = vmatpush1.bf16.msra.mxu0 %v2018
    %2485 = vmatprep.subr.bf16.mxu0 %v2023
    %2486 = vmatpush1.bf16.msra.mxu0 %v2022
    %2487 = vmatprep.subr.bf16.mxu0 %v2027
    %2488 = vmatpush1.bf16.msra.mxu0 %v2026
    %2489 = vmatprep.subr.bf16.mxu0 %v2031
    %2490 = vmatpush1.bf16.msra.mxu0 %v2030
    %2491 = vmatprep.subr.bf16.mxu0 %v2035
    %2492 = vmatpush1.bf16.msra.mxu0 %v2034
    %2493 = vmatprep.subr.bf16.mxu0 %v2039
    %2494 = vmatpush1.bf16.msra.mxu0 %v2038
    %2495 = vmatprep.subr.bf16.mxu0 %v2043
    %2496 = vmatpush1.bf16.msra.mxu0 %v2042
    %2497 = vmatprep.subr.bf16.mxu0 %v2047
    %2498 = vmatpush1.bf16.msra.mxu0 %v2046
    %2499 = vmatprep.subr.bf16.mxu0 %v2051
    %2500 = vmatpush1.bf16.msra.mxu0 %v2050
    %2501 = vmatprep.subr.bf16.mxu0 %v2055
    %2502 = vmatpush1.bf16.msra.mxu0 %v2054
    %2503 = vmatprep.subr.bf16.mxu0 %v2059
    %2504 = vmatpush1.bf16.msra.mxu0 %v2058
    %2505 = vmatprep.subr.bf16.mxu0 %v2063
    %2506 = vmatpush1.bf16.msra.mxu0 %v2062
    %2507 = vmatprep.subr.bf16.mxu0 %v2067
    %2508 = vmatpush1.bf16.msra.mxu0 %v2066
    %2509 = vmatprep.subr.bf16.mxu0 %v2071
    %2510 = vmatpush1.bf16.msra.mxu0 %v2070
    %2511 = vmatprep.mubr.bf16.mxu0 %v1089
    %2512 = vmatmul.mubr.bf16.gmra.mrb[0].mxu0 %v1088
    %v2513 = vpop.f32.mrb[0].mxu0
    %v2514 = vadd.f32 %v2471, %v2513
    %v2515 = vpop.f32.mrb[0].mxu0
    %v2516 = vadd.f32 %v2473, %v2515
    %v2517 = vpop.f32.mrb[0].mxu0
    %v2518 = vadd.f32 %v2475, %v2517
    %v2519 = vpop.f32.mrb[0].mxu0
    %v2520 = vadd.f32 %v2477, %v2519
    %2521 = vdwg.mxu0
    %v2522 = vmax.f32 %v2385, 0.0
    %v2523 = vmax.f32 %v2387, 0.0
    %v2524 = vmax.f32 %v2514, 0.0
    %v2525 = vmax.f32 %v2516, 0.0
    %v2526 = vmax.f32 %v2389, 0.0
    %v2527 = vmax.f32 %v2391, 0.0
    %v2528 = vmax.f32 %v2518, 0.0
    %v2529 = vmax.f32 %v2520, 0.0
    %v2530 = vpack.c.bf16 %v2526, %v2522
    %v2531 = vpack.c.bf16 %v2527, %v2523
    %v2532 = vpack.c.bf16 %v2528, %v2524
    %v2533 = vpack.c.bf16 %v2529, %v2525
    %v2534 = vld [vmem:[#allocation7] sm:$0xff]
    %v2535 = vld [vmem:[#allocation7 + $0x8] sm:$0xff]
    %v2536 = vld [vmem:[#allocation7 + $0x10] sm:$0xff]
    %v2537 = vld [vmem:[#allocation7 + $0x18] sm:$0xff]
    %v2538 = vld [vmem:[#allocation7 + $0x20] sm:$0xff]
    %v2539 = vld [vmem:[#allocation7 + $0x28] sm:$0xff]
    %v2540 = vld [vmem:[#allocation7 + $0x30] sm:$0xff]
    %v2541 = vld [vmem:[#allocation7 + $0x38] sm:$0xff]
    %v2542 = vld [vmem:[#allocation7 + $0x40] sm:$0xff]
    %v2543 = vld [vmem:[#allocation7 + $0x48] sm:$0xff]
    %v2544 = vld [vmem:[#allocation7 + $0x50] sm:$0xff]
    %v2545 = vld [vmem:[#allocation7 + $0x58] sm:$0xff]
    %v2546 = vld [vmem:[#allocation7 + $0x60] sm:$0xff]
    %v2547 = vld [vmem:[#allocation7 + $0x68] sm:$0xff]
    %v2548 = vld [vmem:[#allocation7 + $0x70] sm:$0xff]
    %v2549 = vld [vmem:[#allocation7 + $0x78] sm:$0xff]
    %v2550 = vld [vmem:[#allocation7 + $0x80] sm:$0xff]
    %v2551 = vld [vmem:[#allocation7 + $0x88] sm:$0xff]
    %v2552 = vld [vmem:[#allocation7 + $0x90] sm:$0xff]
    %v2553 = vld [vmem:[#allocation7 + $0x98] sm:$0xff]
    %v2554 = vld [vmem:[#allocation7 + $0xa0] sm:$0xff]
    %v2555 = vld [vmem:[#allocation7 + $0xa8] sm:$0xff]
    %v2556 = vld [vmem:[#allocation7 + $0xb0] sm:$0xff]
    %v2557 = vld [vmem:[#allocation7 + $0xb8] sm:$0xff]
    %v2558 = vld [vmem:[#allocation7 + $0xc0] sm:$0xff]
    %v2559 = vld [vmem:[#allocation7 + $0xc8] sm:$0xff]
    %v2560 = vld [vmem:[#allocation7 + $0xd0] sm:$0xff]
    %v2561 = vld [vmem:[#allocation7 + $0xd8] sm:$0xff]
    %v2562 = vld [vmem:[#allocation7 + $0xe0] sm:$0xff]
    %v2563 = vld [vmem:[#allocation7 + $0xe8] sm:$0xff]
    %v2564 = vld [vmem:[#allocation7 + $0xf0] sm:$0xff]
    %v2565 = vld [vmem:[#allocation7 + $0xf8] sm:$0xff]
    %v2566 = vld [vmem:[#allocation7 + $0x100] sm:$0xff]
    %v2567 = vld [vmem:[#allocation7 + $0x108] sm:$0xff]
    %v2568 = vld [vmem:[#allocation7 + $0x110] sm:$0xff]
    %v2569 = vld [vmem:[#allocation7 + $0x118] sm:$0xff]
    %v2570 = vld [vmem:[#allocation7 + $0x120] sm:$0xff]
    %v2571 = vld [vmem:[#allocation7 + $0x128] sm:$0xff]
    %v2572 = vld [vmem:[#allocation7 + $0x130] sm:$0xff]
    %v2573 = vld [vmem:[#allocation7 + $0x138] sm:$0xff]
    %v2574 = vld [vmem:[#allocation7 + $0x140] sm:$0xff]
    %v2575 = vld [vmem:[#allocation7 + $0x148] sm:$0xff]
    %v2576 = vld [vmem:[#allocation7 + $0x150] sm:$0xff]
    %v2577 = vld [vmem:[#allocation7 + $0x158] sm:$0xff]
    %v2578 = vld [vmem:[#allocation7 + $0x160] sm:$0xff]
    %v2579 = vld [vmem:[#allocation7 + $0x168] sm:$0xff]
    %v2580 = vld [vmem:[#allocation7 + $0x170] sm:$0xff]
    %v2581 = vld [vmem:[#allocation7 + $0x178] sm:$0xff]
    %v2582 = vld [vmem:[#allocation7 + $0x180] sm:$0xff]
    %v2583 = vld [vmem:[#allocation7 + $0x188] sm:$0xff]
    %v2584 = vld [vmem:[#allocation7 + $0x190] sm:$0xff]
    %v2585 = vld [vmem:[#allocation7 + $0x198] sm:$0xff]
    %v2586 = vld [vmem:[#allocation7 + $0x1a0] sm:$0xff]
    %v2587 = vld [vmem:[#allocation7 + $0x1a8] sm:$0xff]
    %v2588 = vld [vmem:[#allocation7 + $0x1b0] sm:$0xff]
    %v2589 = vld [vmem:[#allocation7 + $0x1b8] sm:$0xff]
    %v2590 = vld [vmem:[#allocation7 + $0x1c0] sm:$0xff]
    %v2591 = vld [vmem:[#allocation7 + $0x1c8] sm:$0xff]
    %v2592 = vld [vmem:[#allocation7 + $0x1d0] sm:$0xff]
    %v2593 = vld [vmem:[#allocation7 + $0x1d8] sm:$0xff]
    %v2594 = vld [vmem:[#allocation7 + $0x1e0] sm:$0xff]
    %v2595 = vld [vmem:[#allocation7 + $0x1e8] sm:$0xff]
    %v2596 = vld [vmem:[#allocation7 + $0x1f0] sm:$0xff]
    %v2597 = vld [vmem:[#allocation7 + $0x1f8] sm:$0xff]
    %v2598 = vld [vmem:[%s8] sm:$0x3]
    %v2600 = vlaneseq
    %v2601 = vshrl.u32 %v2600, 7
    %v2602 = vsub.s32 0, %v2601
    %v2603 = vrot.slane %v2598, %v2602
    %v2604 = vlaneseq
    %v2605 = vshrl.u32 %v2604, 7
    %v2606 = vsub.s32 1, %v2605
    %v2607 = vrot.slane %v2598, %v2606
    %v2674 = vunpack.c.l.b16 %v2534
    %v2675 = vunpack.c.h.b16 %v2534
    %v2676 = vunpack.c.l.b16 %v2535
    %v2677 = vunpack.c.h.b16 %v2535
    %v2678 = vunpack.c.l.b16 %v2536
    %v2679 = vunpack.c.h.b16 %v2536
    %v2680 = vunpack.c.l.b16 %v2537
    %v2681 = vunpack.c.h.b16 %v2537
    %v2682 = vunpack.c.l.b16 %v2538
    %v2683 = vunpack.c.h.b16 %v2538
    %v2684 = vunpack.c.l.b16 %v2539
    %v2685 = vunpack.c.h.b16 %v2539
    %v2686 = vunpack.c.l.b16 %v2540
    %v2687 = vunpack.c.h.b16 %v2540
    %v2688 = vunpack.c.l.b16 %v2541
    %v2689 = vunpack.c.h.b16 %v2541
    %v2690 = vunpack.c.l.b16 %v2542
    %v2691 = vunpack.c.h.b16 %v2542
    %v2692 = vunpack.c.l.b16 %v2543
    %v2693 = vunpack.c.h.b16 %v2543
    %v2694 = vunpack.c.l.b16 %v2544
    %v2695 = vunpack.c.h.b16 %v2544
    %v2696 = vunpack.c.l.b16 %v2545
    %v2697 = vunpack.c.h.b16 %v2545
    %v2698 = vunpack.c.l.b16 %v2546
    %v2699 = vunpack.c.h.b16 %v2546
    %v2700 = vunpack.c.l.b16 %v2547
    %v2701 = vunpack.c.h.b16 %v2547
    %v2702 = vunpack.c.l.b16 %v2548
    %v2703 = vunpack.c.h.b16 %v2548
    %v2704 = vunpack.c.l.b16 %v2549
    %v2705 = vunpack.c.h.b16 %v2549
    %v2706 = vunpack.c.l.b16 %v2550
    %v2707 = vunpack.c.h.b16 %v2550
    %v2708 = vunpack.c.l.b16 %v2551
    %v2709 = vunpack.c.h.b16 %v2551
    %v2710 = vunpack.c.l.b16 %v2552
    %v2711 = vunpack.c.h.b16 %v2552
    %v2712 = vunpack.c.l.b16 %v2553
    %v2713 = vunpack.c.h.b16 %v2553
    %v2714 = vunpack.c.l.b16 %v2554
    %v2715 = vunpack.c.h.b16 %v2554
    %v2716 = vunpack.c.l.b16 %v2555
    %v2717 = vunpack.c.h.b16 %v2555
    %v2718 = vunpack.c.l.b16 %v2556
    %v2719 = vunpack.c.h.b16 %v2556
    %v2720 = vunpack.c.l.b16 %v2557
    %v2721 = vunpack.c.h.b16 %v2557
    %v2722 = vunpack.c.l.b16 %v2558
    %v2723 = vunpack.c.h.b16 %v2558
    %v2724 = vunpack.c.l.b16 %v2559
    %v2725 = vunpack.c.h.b16 %v2559
    %v2726 = vunpack.c.l.b16 %v2560
    %v2727 = vunpack.c.h.b16 %v2560
    %v2728 = vunpack.c.l.b16 %v2561
    %v2729 = vunpack.c.h.b16 %v2561
    %v2730 = vunpack.c.l.b16 %v2562
    %v2731 = vunpack.c.h.b16 %v2562
    %v2732 = vunpack.c.l.b16 %v2563
    %v2733 = vunpack.c.h.b16 %v2563
    %v2734 = vunpack.c.l.b16 %v2564
    %v2735 = vunpack.c.h.b16 %v2564
    %v2736 = vunpack.c.l.b16 %v2565
    %v2737 = vunpack.c.h.b16 %v2565
    %v2738 = vunpack.c.l.b16 %v2566
    %v2739 = vunpack.c.h.b16 %v2566
    %v2740 = vunpack.c.l.b16 %v2567
    %v2741 = vunpack.c.h.b16 %v2567
    %v2742 = vunpack.c.l.b16 %v2568
    %v2743 = vunpack.c.h.b16 %v2568
    %v2744 = vunpack.c.l.b16 %v2569
    %v2745 = vunpack.c.h.b16 %v2569
    %v2746 = vunpack.c.l.b16 %v2570
    %v2747 = vunpack.c.h.b16 %v2570
    %v2748 = vunpack.c.l.b16 %v2571
    %v2749 = vunpack.c.h.b16 %v2571
    %v2750 = vunpack.c.l.b16 %v2572
    %v2751 = vunpack.c.h.b16 %v2572
    %v2752 = vunpack.c.l.b16 %v2573
    %v2753 = vunpack.c.h.b16 %v2573
    %v2754 = vunpack.c.l.b16 %v2574
    %v2755 = vunpack.c.h.b16 %v2574
    %v2756 = vunpack.c.l.b16 %v2575
    %v2757 = vunpack.c.h.b16 %v2575
    %v2758 = vunpack.c.l.b16 %v2576
    %v2759 = vunpack.c.h.b16 %v2576
    %v2760 = vunpack.c.l.b16 %v2577
    %v2761 = vunpack.c.h.b16 %v2577
    %v2762 = vunpack.c.l.b16 %v2578
    %v2763 = vunpack.c.h.b16 %v2578
    %v2764 = vunpack.c.l.b16 %v2579
    %v2765 = vunpack.c.h.b16 %v2579
    %v2766 = vunpack.c.l.b16 %v2580
    %v2767 = vunpack.c.h.b16 %v2580
    %v2768 = vunpack.c.l.b16 %v2581
    %v2769 = vunpack.c.h.b16 %v2581
    %v2770 = vunpack.c.l.b16 %v2582
    %v2771 = vunpack.c.h.b16 %v2582
    %v2772 = vunpack.c.l.b16 %v2583
    %v2773 = vunpack.c.h.b16 %v2583
    %v2774 = vunpack.c.l.b16 %v2584
    %v2775 = vunpack.c.h.b16 %v2584
    %v2776 = vunpack.c.l.b16 %v2585
    %v2777 = vunpack.c.h.b16 %v2585
    %v2778 = vunpack.c.l.b16 %v2586
    %v2779 = vunpack.c.h.b16 %v2586
    %v2780 = vunpack.c.l.b16 %v2587
    %v2781 = vunpack.c.h.b16 %v2587
    %v2782 = vunpack.c.l.b16 %v2588
    %v2783 = vunpack.c.h.b16 %v2588
    %v2784 = vunpack.c.l.b16 %v2589
    %v2785 = vunpack.c.h.b16 %v2589
    %v2786 = vunpack.c.l.b16 %v2590
    %v2787 = vunpack.c.h.b16 %v2590
    %v2788 = vunpack.c.l.b16 %v2591
    %v2789 = vunpack.c.h.b16 %v2591
    %v2790 = vunpack.c.l.b16 %v2592
    %v2791 = vunpack.c.h.b16 %v2592
    %v2792 = vunpack.c.l.b16 %v2593
    %v2793 = vunpack.c.h.b16 %v2593
    %v2794 = vunpack.c.l.b16 %v2594
    %v2795 = vunpack.c.h.b16 %v2594
    %v2796 = vunpack.c.l.b16 %v2595
    %v2797 = vunpack.c.h.b16 %v2595
    %v2798 = vunpack.c.l.b16 %v2596
    %v2799 = vunpack.c.h.b16 %v2596
    %v2800 = vunpack.c.l.b16 %v2597
    %v2801 = vunpack.c.h.b16 %v2597
    %v2802 = vpack.c.b16 %v2676, %v2674
    %v2803 = vpack.c.b16 %v2677, %v2675
    %v2804 = vpack.c.b16 %v2680, %v2678
    %v2805 = vpack.c.b16 %v2681, %v2679
    %v2806 = vpack.c.b16 %v2684, %v2682
    %v2807 = vpack.c.b16 %v2685, %v2683
    %v2808 = vpack.c.b16 %v2688, %v2686
    %v2809 = vpack.c.b16 %v2689, %v2687
    %v2810 = vpack.c.b16 %v2692, %v2690
    %v2811 = vpack.c.b16 %v2693, %v2691
    %v2812 = vpack.c.b16 %v2696, %v2694
    %v2813 = vpack.c.b16 %v2697, %v2695
    %v2814 = vpack.c.b16 %v2700, %v2698
    %v2815 = vpack.c.b16 %v2701, %v2699
    %v2816 = vpack.c.b16 %v2704, %v2702
    %v2817 = vpack.c.b16 %v2705, %v2703
    %v2818 = vpack.c.b16 %v2708, %v2706
    %v2819 = vpack.c.b16 %v2709, %v2707
    %v2820 = vpack.c.b16 %v2712, %v2710
    %v2821 = vpack.c.b16 %v2713, %v2711
    %v2822 = vpack.c.b16 %v2716, %v2714
    %v2823 = vpack.c.b16 %v2717, %v2715
    %v2824 = vpack.c.b16 %v2720, %v2718
    %v2825 = vpack.c.b16 %v2721, %v2719
    %v2826 = vpack.c.b16 %v2724, %v2722
    %v2827 = vpack.c.b16 %v2725, %v2723
    %v2828 = vpack.c.b16 %v2728, %v2726
    %v2829 = vpack.c.b16 %v2729, %v2727
    %v2830 = vpack.c.b16 %v2732, %v2730
    %v2831 = vpack.c.b16 %v2733, %v2731
    %v2832 = vpack.c.b16 %v2736, %v2734
    %v2833 = vpack.c.b16 %v2737, %v2735
    %v2834 = vpack.c.b16 %v2740, %v2738
    %v2835 = vpack.c.b16 %v2741, %v2739
    %v2836 = vpack.c.b16 %v2744, %v2742
    %v2837 = vpack.c.b16 %v2745, %v2743
    %v2838 = vpack.c.b16 %v2748, %v2746
    %v2839 = vpack.c.b16 %v2749, %v2747
    %v2840 = vpack.c.b16 %v2752, %v2750
    %v2841 = vpack.c.b16 %v2753, %v2751
    %v2842 = vpack.c.b16 %v2756, %v2754
    %v2843 = vpack.c.b16 %v2757, %v2755
    %v2844 = vpack.c.b16 %v2760, %v2758
    %v2845 = vpack.c.b16 %v2761, %v2759
    %v2846 = vpack.c.b16 %v2764, %v2762
    %v2847 = vpack.c.b16 %v2765, %v2763
    %v2848 = vpack.c.b16 %v2768, %v2766
    %v2849 = vpack.c.b16 %v2769, %v2767
    %v2850 = vpack.c.b16 %v2772, %v2770
    %v2851 = vpack.c.b16 %v2773, %v2771
    %v2852 = vpack.c.b16 %v2776, %v2774
    %v2853 = vpack.c.b16 %v2777, %v2775
    %v2854 = vpack.c.b16 %v2780, %v2778
    %v2855 = vpack.c.b16 %v2781, %v2779
    %v2856 = vpack.c.b16 %v2784, %v2782
    %v2857 = vpack.c.b16 %v2785, %v2783
    %v2858 = vpack.c.b16 %v2788, %v2786
    %v2859 = vpack.c.b16 %v2789, %v2787
    %v2860 = vpack.c.b16 %v2792, %v2790
    %v2861 = vpack.c.b16 %v2793, %v2791
    %v2862 = vpack.c.b16 %v2796, %v2794
    %v2863 = vpack.c.b16 %v2797, %v2795
    %v2864 = vpack.c.b16 %v2800, %v2798
    %v2865 = vpack.c.b16 %v2801, %v2799
    %2930 = vmatprep.subr.bf16.mxu0 %v2803
    %2931 = vmatpush1.bf16.msra.mxu0 %v2802
    %2932 = vmatprep.subr.bf16.mxu0 %v2805
    %2933 = vmatpush1.bf16.msra.mxu0 %v2804
    %2934 = vmatprep.subr.bf16.mxu0 %v2807
    %2935 = vmatpush1.bf16.msra.mxu0 %v2806
    %2936 = vmatprep.subr.bf16.mxu0 %v2809
    %2937 = vmatpush1.bf16.msra.mxu0 %v2808
    %2938 = vmatprep.subr.bf16.mxu0 %v2811
    %2939 = vmatpush1.bf16.msra.mxu0 %v2810
    %2940 = vmatprep.subr.bf16.mxu0 %v2813
    %2941 = vmatpush1.bf16.msra.mxu0 %v2812
    %2942 = vmatprep.subr.bf16.mxu0 %v2815
    %2943 = vmatpush1.bf16.msra.mxu0 %v2814
    %2944 = vmatprep.subr.bf16.mxu0 %v2817
    %2945 = vmatpush1.bf16.msra.mxu0 %v2816
    %2946 = vmatprep.subr.bf16.mxu0 %v2819
    %2947 = vmatpush1.bf16.msra.mxu0 %v2818
    %2948 = vmatprep.subr.bf16.mxu0 %v2821
    %2949 = vmatpush1.bf16.msra.mxu0 %v2820
    %2950 = vmatprep.subr.bf16.mxu0 %v2823
    %2951 = vmatpush1.bf16.msra.mxu0 %v2822
    %2952 = vmatprep.subr.bf16.mxu0 %v2825
    %2953 = vmatpush1.bf16.msra.mxu0 %v2824
    %2954 = vmatprep.subr.bf16.mxu0 %v2827
    %2955 = vmatpush1.bf16.msra.mxu0 %v2826
    %2956 = vmatprep.subr.bf16.mxu0 %v2829
    %2957 = vmatpush1.bf16.msra.mxu0 %v2828
    %2958 = vmatprep.subr.bf16.mxu0 %v2831
    %2959 = vmatpush1.bf16.msra.mxu0 %v2830
    %2960 = vmatprep.subr.bf16.mxu0 %v2833
    %2961 = vmatpush1.bf16.msra.mxu0 %v2832
    %2962 = vmatprep.mubr.bf16.mxu0 %v2531
    %2963 = vmatmul.mubr.bf16.gmra.mrb[0].mxu0 %v2530
    %v2964 = vpop.f32.mrb[0].mxu0
    %v2965 = vadd.f32 %v2603, %v2964
    %v2966 = vpop.f32.mrb[0].mxu0
    %v2967 = vadd.f32 %v2607, %v2966
    %v2968 = vpop.f32.mrb[0].mxu0
    %v2969 = vadd.f32 %v2603, %v2968
    %v2970 = vpop.f32.mrb[0].mxu0
    %v2971 = vadd.f32 %v2607, %v2970
    %2972 = vdwg.mxu0
    %2973 = vmatprep.subr.bf16.mxu0 %v2835
    %2974 = vmatpush1.bf16.msra.mxu0 %v2834
    %2975 = vmatprep.subr.bf16.mxu0 %v2837
    %2976 = vmatpush1.bf16.msra.mxu0 %v2836
    %2977 = vmatprep.subr.bf16.mxu0 %v2839
    %2978 = vmatpush1.bf16.msra.mxu0 %v2838
    %2979 = vmatprep.subr.bf16.mxu0 %v2841
    %2980 = vmatpush1.bf16.msra.mxu0 %v2840
    %2981 = vmatprep.subr.bf16.mxu0 %v2843
    %2982 = vmatpush1.bf16.msra.mxu0 %v2842
    %2983 = vmatprep.subr.bf16.mxu0 %v2845
    %2984 = vmatpush1.bf16.msra.mxu0 %v2844
    %2985 = vmatprep.subr.bf16.mxu0 %v2847
    %2986 = vmatpush1.bf16.msra.mxu0 %v2846
    %2987 = vmatprep.subr.bf16.mxu0 %v2849
    %2988 = vmatpush1.bf16.msra.mxu0 %v2848
    %2989 = vmatprep.subr.bf16.mxu0 %v2851
    %2990 = vmatpush1.bf16.msra.mxu0 %v2850
    %2991 = vmatprep.subr.bf16.mxu0 %v2853
    %2992 = vmatpush1.bf16.msra.mxu0 %v2852
    %2993 = vmatprep.subr.bf16.mxu0 %v2855
    %2994 = vmatpush1.bf16.msra.mxu0 %v2854
    %2995 = vmatprep.subr.bf16.mxu0 %v2857
    %2996 = vmatpush1.bf16.msra.mxu0 %v2856
    %2997 = vmatprep.subr.bf16.mxu0 %v2859
    %2998 = vmatpush1.bf16.msra.mxu0 %v2858
    %2999 = vmatprep.subr.bf16.mxu0 %v2861
    %3000 = vmatpush1.bf16.msra.mxu0 %v2860
    %3001 = vmatprep.subr.bf16.mxu0 %v2863
    %3002 = vmatpush1.bf16.msra.mxu0 %v2862
    %3003 = vmatprep.subr.bf16.mxu0 %v2865
    %3004 = vmatpush1.bf16.msra.mxu0 %v2864
    %3005 = vmatprep.mubr.bf16.mxu0 %v2533
    %3006 = vmatmul.mubr.bf16.gmra.mrb[0].mxu0 %v2532
    %v3007 = vpop.f32.mrb[0].mxu0
    %v3008 = vadd.f32 %v2965, %v3007
    %v3009 = vpop.f32.mrb[0].mxu0
    %v3010 = vadd.f32 %v2967, %v3009
    %v3011 = vpop.f32.mrb[0].mxu0
    %v3012 = vadd.f32 %v2969, %v3011
    %v3013 = vpop.f32.mrb[0].mxu0
    %v3014 = vadd.f32 %v2971, %v3013
    %3015 = vdwg.mxu0
    %v3016 = vpack.c.bf16 %v3012, %v3008
    %v3017 = vpack.c.bf16 %v3014, %v3010
    %v3020 = vunpack.c.l.b16 %v3016
    %v3021 = vunpack.c.l.b16 %v3017
    %v3022 = vunpack.c.h.b16 %v3016
    %v3023 = vunpack.c.h.b16 %v3017
    %v3024 = vpack.c.b16 %v3021, %v3020
    %v3025 = vpack.c.b16 %v3023, %v3022
    %3028 = vst [vmem:[%s20] sm:$0xff] %v3024
    %3029 = vst [vmem:[%s20 + $0x8] sm:$0xff] %v3025
    %v3030 = vld [vmem:[%s9] sm:$0xf]
    %v3031 = vld [vmem:[%s9 + $0x4] sm:$0xf]
    %v3032 = vld [vmem:[%s9 + $0x8] sm:$0xf]
    %v3033 = vld [vmem:[%s9 + $0xc] sm:$0xf]
    %v3034 = vld [vmem:[%s9 + $0x10] sm:$0xf]
    %v3035 = vld [vmem:[%s9 + $0x14] sm:$0xf]
    %v3036 = vld [vmem:[%s9 + $0x18] sm:$0xf]
    %v3037 = vld [vmem:[%s9 + $0x1c] sm:$0xf]
    %v3038 = vld [vmem:[%s9 + $0x20] sm:$0xf]
    %v3039 = vld [vmem:[%s9 + $0x24] sm:$0xf]
    %v3040 = vld [vmem:[%s9 + $0x28] sm:$0xf]
    %v3041 = vld [vmem:[%s9 + $0x2c] sm:$0xf]
    %v3042 = vld [vmem:[%s9 + $0x30] sm:$0xf]
    %v3043 = vld [vmem:[%s9 + $0x34] sm:$0xf]
    %v3044 = vld [vmem:[%s9 + $0x38] sm:$0xf]
    %v3045 = vld [vmem:[%s9 + $0x3c] sm:$0xf]
    %v3046 = vld [vmem:[%s9 + $0x40] sm:$0xf]
    %v3047 = vld [vmem:[%s9 + $0x44] sm:$0xf]
    %v3048 = vld [vmem:[%s9 + $0x48] sm:$0xf]
    %v3049 = vld [vmem:[%s9 + $0x4c] sm:$0xf]
    %v3050 = vld [vmem:[%s9 + $0x50] sm:$0xf]
    %v3051 = vld [vmem:[%s9 + $0x54] sm:$0xf]
    %v3052 = vld [vmem:[%s9 + $0x58] sm:$0xf]
    %v3053 = vld [vmem:[%s9 + $0x5c] sm:$0xf]
    %v3054 = vld [vmem:[%s9 + $0x60] sm:$0xf]
    %v3055 = vld [vmem:[%s9 + $0x64] sm:$0xf]
    %v3056 = vld [vmem:[%s9 + $0x68] sm:$0xf]
    %v3057 = vld [vmem:[%s9 + $0x6c] sm:$0xf]
    %v3058 = vld [vmem:[%s9 + $0x70] sm:$0xf]
    %v3059 = vld [vmem:[%s9 + $0x74] sm:$0xf]
    %v3060 = vld [vmem:[%s9 + $0x78] sm:$0xf]
    %v3061 = vld [vmem:[%s9 + $0x7c] sm:$0xf]
    %v3062 = vld [vmem:[%s10] sm:$0x1]
    %v3064 = vlaneseq
    %v3065 = vshrl.u32 %v3064, 7
    %v3066 = vsub.s32 0, %v3065
    %v3067 = vrot.slane %v3062, %v3066
    %v3101 = vunpack.c.l.b16 %v3030
    %v3102 = vunpack.c.l.b16 %v3031
    %v3103 = vunpack.c.l.b16 %v3032
    %v3104 = vunpack.c.l.b16 %v3033
    %v3105 = vunpack.c.l.b16 %v3034
    %v3106 = vunpack.c.l.b16 %v3035
    %v3107 = vunpack.c.l.b16 %v3036
    %v3108 = vunpack.c.l.b16 %v3037
    %v3109 = vunpack.c.l.b16 %v3038
    %v3110 = vunpack.c.l.b16 %v3039
    %v3111 = vunpack.c.l.b16 %v3040
    %v3112 = vunpack.c.l.b16 %v3041
    %v3113 = vunpack.c.l.b16 %v3042
    %v3114 = vunpack.c.l.b16 %v3043
    %v3115 = vunpack.c.l.b16 %v3044
    %v3116 = vunpack.c.l.b16 %v3045
    %v3117 = vunpack.c.l.b16 %v3046
    %v3118 = vunpack.c.l.b16 %v3047
    %v3119 = vunpack.c.l.b16 %v3048
    %v3120 = vunpack.c.l.b16 %v3049
    %v3121 = vunpack.c.l.b16 %v3050
    %v3122 = vunpack.c.l.b16 %v3051
    %v3123 = vunpack.c.l.b16 %v3052
    %v3124 = vunpack.c.l.b16 %v3053
    %v3125 = vunpack.c.l.b16 %v3054
    %v3126 = vunpack.c.l.b16 %v3055
    %v3127 = vunpack.c.l.b16 %v3056
    %v3128 = vunpack.c.l.b16 %v3057
    %v3129 = vunpack.c.l.b16 %v3058
    %v3130 = vunpack.c.l.b16 %v3059
    %v3131 = vunpack.c.l.b16 %v3060
    %v3132 = vunpack.c.l.b16 %v3061
    %v3133 = vpack.c.b16 %v3102, %v3101
    %v3134 = vpack.c.b16 %v3104, %v3103
    %v3135 = vpack.c.b16 %v3106, %v3105
    %v3136 = vpack.c.b16 %v3108, %v3107
    %v3137 = vpack.c.b16 %v3110, %v3109
    %v3138 = vpack.c.b16 %v3112, %v3111
    %v3139 = vpack.c.b16 %v3114, %v3113
    %v3140 = vpack.c.b16 %v3116, %v3115
    %v3141 = vpack.c.b16 %v3118, %v3117
    %v3142 = vpack.c.b16 %v3120, %v3119
    %v3143 = vpack.c.b16 %v3122, %v3121
    %v3144 = vpack.c.b16 %v3124, %v3123
    %v3145 = vpack.c.b16 %v3126, %v3125
    %v3146 = vpack.c.b16 %v3128, %v3127
    %v3147 = vpack.c.b16 %v3130, %v3129
    %v3148 = vpack.c.b16 %v3132, %v3131
    %3165 = vmatprep.subr.bf16.mxu0 0
    %3166 = vmatpush1.bf16.msra.mxu0 %v3133
    %3167 = vmatprep.subr.bf16.mxu0 0
    %3168 = vmatpush1.bf16.msra.mxu0 %v3134
    %3169 = vmatprep.subr.bf16.mxu0 0
    %3170 = vmatpush1.bf16.msra.mxu0 %v3135
    %3171 = vmatprep.subr.bf16.mxu0 0
    %3172 = vmatpush1.bf16.msra.mxu0 %v3136
    %3173 = vmatprep.subr.bf16.mxu0 0
    %3174 = vmatpush1.bf16.msra.mxu0 %v3137
    %3175 = vmatprep.subr.bf16.mxu0 0
    %3176 = vmatpush1.bf16.msra.mxu0 %v3138
    %3177 = vmatprep.subr.bf16.mxu0 0
    %3178 = vmatpush1.bf16.msra.mxu0 %v3139
    %3179 = vmatprep.subr.bf16.mxu0 0
    %3180 = vmatpush1.bf16.msra.mxu0 %v3140
    %3181 = vmatprep.subr.bf16.mxu0 0
    %3182 = vmatpush1.bf16.msra.mxu0 %v3141
    %3183 = vmatprep.subr.bf16.mxu0 0
    %3184 = vmatpush1.bf16.msra.mxu0 %v3142
    %3185 = vmatprep.subr.bf16.mxu0 0
    %3186 = vmatpush1.bf16.msra.mxu0 %v3143
    %3187 = vmatprep.subr.bf16.mxu0 0
    %3188 = vmatpush1.bf16.msra.mxu0 %v3144
    %3189 = vmatprep.subr.bf16.mxu0 0
    %3190 = vmatpush1.bf16.msra.mxu0 %v3145
    %3191 = vmatprep.subr.bf16.mxu0 0
    %3192 = vmatpush1.bf16.msra.mxu0 %v3146
    %3193 = vmatprep.subr.bf16.mxu0 0
    %3194 = vmatpush1.bf16.msra.mxu0 %v3147
    %3195 = vmatprep.subr.bf16.mxu0 0
    %3196 = vmatpush1.bf16.msra.mxu0 %v3148
    %3197 = vmatprep.mubr.bf16.mxu0 %v3017
    %3198 = vmatmul.mubr.bf16.gmra.mrb[0].mxu0 %v3016
    %v3199 = vpop.f32.mrb[0].mxu0
    %v3200 = vadd.f32 %v3067, %v3199
    %v3201 = vpop.f32.mrb[0].mxu0
    %v3202 = vpop.f32.mrb[0].mxu0
    %v3203 = vadd.f32 %v3067, %v3202
    %v3204 = vpop.f32.mrb[0].mxu0
    %3205 = vdwg.mxu0
    %v3206 = vmax.f32 %v3200, 0.0
    %v3207 = vmax.f32 %v3203, 0.0
    %v3208 = vpack.c.bf16 %v3207, %v3206
    %v3209 = vld [vmem:[%s11] sm:$0xf]
    %v3210 = vld [vmem:[%s11 + $0x4] sm:$0xf]
    %v3211 = vld [vmem:[%s11 + $0x8] sm:$0xf]
    %v3212 = vld [vmem:[%s11 + $0xc] sm:$0xf]
    %v3213 = vld [vmem:[%s11 + $0x10] sm:$0xf]
    %v3214 = vld [vmem:[%s11 + $0x14] sm:$0xf]
    %v3215 = vld [vmem:[%s11 + $0x18] sm:$0xf]
    %v3216 = vld [vmem:[%s11 + $0x1c] sm:$0xf]
    %v3217 = vld [vmem:[%s11 + $0x20] sm:$0xf]
    %v3218 = vld [vmem:[%s11 + $0x24] sm:$0xf]
    %v3219 = vld [vmem:[%s11 + $0x28] sm:$0xf]
    %v3220 = vld [vmem:[%s11 + $0x2c] sm:$0xf]
    %v3221 = vld [vmem:[%s11 + $0x30] sm:$0xf]
    %v3222 = vld [vmem:[%s11 + $0x34] sm:$0xf]
    %v3223 = vld [vmem:[%s11 + $0x38] sm:$0xf]
    %v3224 = vld [vmem:[%s11 + $0x3c] sm:$0xf]
    %v3225 = vld [vmem:[%s12] sm:$0x1]
    %v3227 = vlaneseq
    %v3228 = vshrl.u32 %v3227, 7
    %v3229 = vsub.s32 0, %v3228
    %v3230 = vrot.slane %v3225, %v3229
    %v3248 = vunpack.c.l.b16 %v3209
    %v3249 = vunpack.c.l.b16 %v3210
    %v3250 = vunpack.c.l.b16 %v3211
    %v3251 = vunpack.c.l.b16 %v3212
    %v3252 = vunpack.c.l.b16 %v3213
    %v3253 = vunpack.c.l.b16 %v3214
    %v3254 = vunpack.c.l.b16 %v3215
    %v3255 = vunpack.c.l.b16 %v3216
    %v3256 = vunpack.c.l.b16 %v3217
    %v3257 = vunpack.c.l.b16 %v3218
    %v3258 = vunpack.c.l.b16 %v3219
    %v3259 = vunpack.c.l.b16 %v3220
    %v3260 = vunpack.c.l.b16 %v3221
    %v3261 = vunpack.c.l.b16 %v3222
    %v3262 = vunpack.c.l.b16 %v3223
    %v3263 = vunpack.c.l.b16 %v3224
    %v3264 = vpack.c.b16 %v3249, %v3248
    %v3265 = vpack.c.b16 %v3251, %v3250
    %v3266 = vpack.c.b16 %v3253, %v3252
    %v3267 = vpack.c.b16 %v3255, %v3254
    %v3268 = vpack.c.b16 %v3257, %v3256
    %v3269 = vpack.c.b16 %v3259, %v3258
    %v3270 = vpack.c.b16 %v3261, %v3260
    %v3271 = vpack.c.b16 %v3263, %v3262
    %3280 = vmatprep.subr.bf16.mxu0 0
    %3281 = vmatpush1.bf16.msra.mxu0 %v3264
    %3282 = vmatprep.subr.bf16.mxu0 0
    %3283 = vmatpush1.bf16.msra.mxu0 %v3265
    %3284 = vmatprep.subr.bf16.mxu0 0
    %3285 = vmatpush1.bf16.msra.mxu0 %v3266
    %3286 = vmatprep.subr.bf16.mxu0 0
    %3287 = vmatpush1.bf16.msra.mxu0 %v3267
    %3288 = vmatprep.subr.bf16.mxu0 0
    %3289 = vmatpush1.bf16.msra.mxu0 %v3268
    %3290 = vmatprep.subr.bf16.mxu0 0
    %3291 = vmatpush1.bf16.msra.mxu0 %v3269
    %3292 = vmatprep.subr.bf16.mxu0 0
    %3293 = vmatpush1.bf16.msra.mxu0 %v3270
    %3294 = vmatprep.subr.bf16.mxu0 0
    %3295 = vmatpush1.bf16.msra.mxu0 %v3271
    %3296 = vmatprep.subr.bf16.mxu0 0
    %3297 = vmatpush1.bf16.msra.mxu0 0
    %3298 = vmatprep.subr.bf16.mxu0 0
    %3299 = vmatpush1.bf16.msra.mxu0 0
    %3300 = vmatprep.subr.bf16.mxu0 0
    %3301 = vmatpush1.bf16.msra.mxu0 0
    %3302 = vmatprep.subr.bf16.mxu0 0
    %3303 = vmatpush1.bf16.msra.mxu0 0
    %3304 = vmatprep.subr.bf16.mxu0 0
    %3305 = vmatpush1.bf16.msra.mxu0 0
    %3306 = vmatprep.subr.bf16.mxu0 0
    %3307 = vmatpush1.bf16.msra.mxu0 0
    %3308 = vmatprep.subr.bf16.mxu0 0
    %3309 = vmatpush1.bf16.msra.mxu0 0
    %3310 = vmatprep.subr.bf16.mxu0 0
    %3311 = vmatpush1.bf16.msra.mxu0 0
    %3312 = vmatprep.mubr.bf16.mxu0 0
    %3313 = vmatmul.mubr.bf16.gmra.mrb[0].mxu0 %v3208
    %v3314 = vpop.f32.mrb[0].mxu0
    %v3315 = vadd.f32 %v3230, %v3314
    %v3316 = vpop.f32.mrb[0].mxu0
    %v3317 = vpop.f32.mrb[0].mxu0
    %v3318 = vadd.f32 %v3230, %v3317
    %v3319 = vpop.f32.mrb[0].mxu0
    %3320 = vdwg.mxu0
    %v3321 = vmax.f32 %v3315, 0.0
    %v3322 = vmax.f32 %v3318, 0.0
    %v3323 = vpack.c.bf16 %v3322, %v3321
    %v3324 = vld [vmem:[#allocation9] sm:$0xf]
    %v3325 = vld [vmem:[#allocation9 + $0x4] sm:$0xf]
    %v3326 = vld [vmem:[#allocation9 + $0x8] sm:$0xf]
    %v3327 = vld [vmem:[#allocation9 + $0xc] sm:$0xf]
    %v3328 = vld [vmem:[#allocation9 + $0x10] sm:$0xf]
    %v3329 = vld [vmem:[#allocation9 + $0x14] sm:$0xf]
    %v3330 = vld [vmem:[#allocation9 + $0x18] sm:$0xf]
    %v3331 = vld [vmem:[#allocation9 + $0x1c] sm:$0xf]
    %v3332 = vld [vmem:[%s14] sm:$0x1]
    %v3334 = vlaneseq
    %v3335 = vshrl.u32 %v3334, 7
    %v3336 = vsub.s32 0, %v3335
    %v3337 = vrot.slane %v3332, %v3336
    %v3347 = vunpack.c.l.b16 %v3324
    %v3348 = vunpack.c.l.b16 %v3325
    %v3349 = vunpack.c.l.b16 %v3326
    %v3350 = vunpack.c.l.b16 %v3327
    %v3351 = vunpack.c.l.b16 %v3328
    %v3352 = vunpack.c.l.b16 %v3329
    %v3353 = vunpack.c.l.b16 %v3330
    %v3354 = vunpack.c.l.b16 %v3331
    %v3355 = vpack.c.b16 %v3348, %v3347
    %v3356 = vpack.c.b16 %v3350, %v3349
    %v3357 = vpack.c.b16 %v3352, %v3351
    %v3358 = vpack.c.b16 %v3354, %v3353
    %vm3363 = vcmask 523264
    %v3365 = vsel %vm3363, %v3323, 0
    %3367 = vmatprep.subr.bf16.mxu0 0
    %3368 = vmatpush1.bf16.msra.mxu0 %v3355
    %3369 = vmatprep.subr.bf16.mxu0 0
    %3370 = vmatpush1.bf16.msra.mxu0 %v3356
    %3371 = vmatprep.subr.bf16.mxu0 0
    %3372 = vmatpush1.bf16.msra.mxu0 %v3357
    %3373 = vmatprep.subr.bf16.mxu0 0
    %3374 = vmatpush1.bf16.msra.mxu0 %v3358
    %3375 = vmatprep.subr.bf16.mxu0 0
    %3376 = vmatpush1.bf16.msra.mxu0 0
    %3377 = vmatprep.subr.bf16.mxu0 0
    %3378 = vmatpush1.bf16.msra.mxu0 0
    %3379 = vmatprep.subr.bf16.mxu0 0
    %3380 = vmatpush1.bf16.msra.mxu0 0
    %3381 = vmatprep.subr.bf16.mxu0 0
    %3382 = vmatpush1.bf16.msra.mxu0 0
    %3383 = vmatprep.subr.bf16.mxu0 0
    %3384 = vmatpush1.bf16.msra.mxu0 0
    %3385 = vmatprep.subr.bf16.mxu0 0
    %3386 = vmatpush1.bf16.msra.mxu0 0
    %3387 = vmatprep.subr.bf16.mxu0 0
    %3388 = vmatpush1.bf16.msra.mxu0 0
    %3389 = vmatprep.subr.bf16.mxu0 0
    %3390 = vmatpush1.bf16.msra.mxu0 0
    %3391 = vmatprep.subr.bf16.mxu0 0
    %3392 = vmatpush1.bf16.msra.mxu0 0
    %3393 = vmatprep.subr.bf16.mxu0 0
    %3394 = vmatpush1.bf16.msra.mxu0 0
    %3395 = vmatprep.subr.bf16.mxu0 0
    %3396 = vmatpush1.bf16.msra.mxu0 0
    %3397 = vmatprep.subr.bf16.mxu0 0
    %3398 = vmatpush1.bf16.msra.mxu0 0
    %3399 = vmatprep.mubr.bf16.mxu0 0
    %3400 = vmatmul.mubr.bf16.gmra.mrb[0].mxu0 %v3365
    %v3401 = vpop.f32.mrb[0].mxu0
    %v3402 = vadd.f32 %v3337, %v3401
    %v3403 = vpop.f32.mrb[0].mxu0
    %v3404 = vpop.f32.mrb[0].mxu0
    %v3405 = vadd.f32 %v3337, %v3404
    %v3406 = vpop.f32.mrb[0].mxu0
    %3407 = vdwg.mxu0
    %v3408 = vxor.u32 %v3402, 2147483648
    %v3409 = vxor.u32 %v3405, 2147483648
    %v3410 = vmul.f32 %v3408, 1.442695
    %v3411 = vpow.pop %v3410
    %v3412 = vmul.f32 %v3409, 1.442695
    %v3413 = vpow.pop %v3412
    %v3414 = vadd.f32 %v3411, 1.0
    %v3415 = vadd.f32 %v3413, 1.0
    %v3416 = vrcp.pop %v3414
    %v3417 = vmul.f32 1.0, %v3416
    %v3418 = vrcp.pop %v3415
    %v3419 = vmul.f32 1.0, %v3418
    %v3420 = vpack.c.bf16 %v3419, %v3417
    %v3422 = vunpack.c.l.b16 %v3420
    %v3423 = vunpack.c.h.b16 %v3420
    %v3424 = vpack.c.b16 %v3422, %v3422
    %v3425 = vpack.c.b16 %v3423, %v3423
    %3428 = vst [vmem:[%s21] sm:$0xf] %v3424
    %3429 = vst [vmem:[%s21 + $0x4] sm:$0xf] %v3425
    %v3430 = vld [vmem:[#allocation10] sm:$0xf]
    %v3431 = vld [vmem:[#allocation10 + $0x4] sm:$0xf]
    %v3432 = vld [vmem:[#allocation10 + $0x8] sm:$0xf]
    %v3433 = vld [vmem:[#allocation10 + $0xc] sm:$0xf]
    %v3434 = vld [vmem:[#allocation10 + $0x10] sm:$0xf]
    %v3435 = vld [vmem:[#allocation10 + $0x14] sm:$0xf]
    %v3436 = vld [vmem:[#allocation10 + $0x18] sm:$0xf]
    %v3437 = vld [vmem:[#allocation10 + $0x1c] sm:$0xf]
    %v3438 = vld [vmem:[#allocation10 + $0x20] sm:$0xf]
    %v3439 = vld [vmem:[#allocation10 + $0x24] sm:$0xf]
    %v3440 = vld [vmem:[#allocation10 + $0x28] sm:$0xf]
    %v3441 = vld [vmem:[#allocation10 + $0x2c] sm:$0xf]
    %v3442 = vld [vmem:[#allocation10 + $0x30] sm:$0xf]
    %v3443 = vld [vmem:[#allocation10 + $0x34] sm:$0xf]
    %v3444 = vld [vmem:[#allocation10 + $0x38] sm:$0xf]
    %v3445 = vld [vmem:[#allocation10 + $0x3c] sm:$0xf]
    %v3446 = vld [vmem:[#allocation10 + $0x40] sm:$0xf]
    %v3447 = vld [vmem:[#allocation10 + $0x44] sm:$0xf]
    %v3448 = vld [vmem:[#allocation10 + $0x48] sm:$0xf]
    %v3449 = vld [vmem:[#allocation10 + $0x4c] sm:$0xf]
    %v3450 = vld [vmem:[#allocation10 + $0x50] sm:$0xf]
    %v3451 = vld [vmem:[#allocation10 + $0x54] sm:$0xf]
    %v3452 = vld [vmem:[#allocation10 + $0x58] sm:$0xf]
    %v3453 = vld [vmem:[#allocation10 + $0x5c] sm:$0xf]
    %v3454 = vld [vmem:[#allocation10 + $0x60] sm:$0xf]
    %v3455 = vld [vmem:[#allocation10 + $0x64] sm:$0xf]
    %v3456 = vld [vmem:[#allocation10 + $0x68] sm:$0xf]
    %v3457 = vld [vmem:[#allocation10 + $0x6c] sm:$0xf]
    %v3458 = vld [vmem:[#allocation10 + $0x70] sm:$0xf]
    %v3459 = vld [vmem:[#allocation10 + $0x74] sm:$0xf]
    %v3460 = vld [vmem:[#allocation10 + $0x78] sm:$0xf]
    %v3461 = vld [vmem:[#allocation10 + $0x7c] sm:$0xf]
    %v3462 = vld [vmem:[#allocation12] sm:$0xf]
    %v3463 = vld [vmem:[#allocation12 + $0x4] sm:$0xf]
    %v3464 = vld [vmem:[#allocation12 + $0x8] sm:$0xf]
    %v3465 = vld [vmem:[#allocation12 + $0xc] sm:$0xf]
    %v3466 = vld [vmem:[#allocation12 + $0x10] sm:$0xf]
    %v3467 = vld [vmem:[#allocation12 + $0x14] sm:$0xf]
    %v3468 = vld [vmem:[#allocation12 + $0x18] sm:$0xf]
    %v3469 = vld [vmem:[#allocation12 + $0x1c] sm:$0xf]
    %v3470 = vld [vmem:[#allocation12 + $0x20] sm:$0xf]
    %v3471 = vld [vmem:[#allocation12 + $0x24] sm:$0xf]
    %v3472 = vld [vmem:[#allocation12 + $0x28] sm:$0xf]
    %v3473 = vld [vmem:[#allocation12 + $0x2c] sm:$0xf]
    %v3474 = vld [vmem:[#allocation12 + $0x30] sm:$0xf]
    %v3475 = vld [vmem:[#allocation12 + $0x34] sm:$0xf]
    %v3476 = vld [vmem:[#allocation12 + $0x38] sm:$0xf]
    %v3477 = vld [vmem:[#allocation12 + $0x3c] sm:$0xf]
    %v3494 = vunpack.c.l.b16 %v3462
    %v3495 = vunpack.c.l.b16 %v3463
    %v3496 = vunpack.c.l.b16 %v3464
    %v3497 = vunpack.c.l.b16 %v3465
    %v3498 = vunpack.c.l.b16 %v3466
    %v3499 = vunpack.c.l.b16 %v3467
    %v3500 = vunpack.c.l.b16 %v3468
    %v3501 = vunpack.c.l.b16 %v3469
    %v3502 = vunpack.c.l.b16 %v3470
    %v3503 = vunpack.c.l.b16 %v3471
    %v3504 = vunpack.c.l.b16 %v3472
    %v3505 = vunpack.c.l.b16 %v3473
    %v3506 = vunpack.c.l.b16 %v3474
    %v3507 = vunpack.c.l.b16 %v3475
    %v3508 = vunpack.c.l.b16 %v3476
    %v3509 = vunpack.c.l.b16 %v3477
    %v3510 = vpack.c.b16 %v3495, %v3494
    %v3511 = vpack.c.b16 %v3497, %v3496
    %v3512 = vpack.c.b16 %v3499, %v3498
    %v3513 = vpack.c.b16 %v3501, %v3500
    %v3514 = vpack.c.b16 %v3503, %v3502
    %v3515 = vpack.c.b16 %v3505, %v3504
    %v3516 = vpack.c.b16 %v3507, %v3506
    %v3517 = vpack.c.b16 %v3509, %v3508
    %3526 = vmatprep.subr.bf16.mxu0 0
    %3527 = vmatpush1.bf16.msra.mxu0 %v3510
    %3528 = vmatprep.subr.bf16.mxu0 0
    %3529 = vmatpush1.bf16.msra.mxu0 %v3511
    %3530 = vmatprep.subr.bf16.mxu0 0
    %3531 = vmatpush1.bf16.msra.mxu0 %v3512
    %3532 = vmatprep.subr.bf16.mxu0 0
    %3533 = vmatpush1.bf16.msra.mxu0 %v3513
    %3534 = vmatprep.subr.bf16.mxu0 0
    %3535 = vmatpush1.bf16.msra.mxu0 %v3514
    %3536 = vmatprep.subr.bf16.mxu0 0
    %3537 = vmatpush1.bf16.msra.mxu0 %v3515
    %3538 = vmatprep.subr.bf16.mxu0 0
    %3539 = vmatpush1.bf16.msra.mxu0 %v3516
    %3540 = vmatprep.subr.bf16.mxu0 0
    %3541 = vmatpush1.bf16.msra.mxu0 %v3517
    %3542 = vmatprep.subr.bf16.mxu0 0
    %3543 = vmatpush1.bf16.msra.mxu0 0
    %3544 = vmatprep.subr.bf16.mxu0 0
    %3545 = vmatpush1.bf16.msra.mxu0 0
    %3546 = vmatprep.subr.bf16.mxu0 0
    %3547 = vmatpush1.bf16.msra.mxu0 0
    %3548 = vmatprep.subr.bf16.mxu0 0
    %3549 = vmatpush1.bf16.msra.mxu0 0
    %3550 = vmatprep.subr.bf16.mxu0 0
    %3551 = vmatpush1.bf16.msra.mxu0 0
    %3552 = vmatprep.subr.bf16.mxu0 0
    %3553 = vmatpush1.bf16.msra.mxu0 0
    %3554 = vmatprep.subr.bf16.mxu0 0
    %3555 = vmatpush1.bf16.msra.mxu0 0
    %3556 = vmatprep.subr.bf16.mxu0 0
    %3557 = vmatpush1.bf16.msra.mxu0 0
    %3558 = vmatprep.mubr.bf16.mxu0 0
    %3559 = vmatmul.mubr.bf16.gmra.mrb[0].mxu0 %v3420
    %v3560 = vpop.f32.mrb[0].mxu0
    %v3561 = vadd.f32 0.0, %v3560
    %v3562 = vpop.f32.mrb[0].mxu0
    %v3563 = vpop.f32.mrb[0].mxu0
    %v3564 = vadd.f32 0.0, %v3563
    %v3565 = vpop.f32.mrb[0].mxu0
    %3566 = vdwg.mxu0
    %v3599 = vunpack.c.l.b16 %v3430
    %v3600 = vunpack.c.l.b16 %v3431
    %v3601 = vunpack.c.l.b16 %v3432
    %v3602 = vunpack.c.l.b16 %v3433
    %v3603 = vunpack.c.l.b16 %v3434
    %v3604 = vunpack.c.l.b16 %v3435
    %v3605 = vunpack.c.l.b16 %v3436
    %v3606 = vunpack.c.l.b16 %v3437
    %v3607 = vunpack.c.l.b16 %v3438
    %v3608 = vunpack.c.l.b16 %v3439
    %v3609 = vunpack.c.l.b16 %v3440
    %v3610 = vunpack.c.l.b16 %v3441
    %v3611 = vunpack.c.l.b16 %v3442
    %v3612 = vunpack.c.l.b16 %v3443
    %v3613 = vunpack.c.l.b16 %v3444
    %v3614 = vunpack.c.l.b16 %v3445
    %v3615 = vunpack.c.l.b16 %v3446
    %v3616 = vunpack.c.l.b16 %v3447
    %v3617 = vunpack.c.l.b16 %v3448
    %v3618 = vunpack.c.l.b16 %v3449
    %v3619 = vunpack.c.l.b16 %v3450
    %v3620 = vunpack.c.l.b16 %v3451
    %v3621 = vunpack.c.l.b16 %v3452
    %v3622 = vunpack.c.l.b16 %v3453
    %v3623 = vunpack.c.l.b16 %v3454
    %v3624 = vunpack.c.l.b16 %v3455
    %v3625 = vunpack.c.l.b16 %v3456
    %v3626 = vunpack.c.l.b16 %v3457
    %v3627 = vunpack.c.l.b16 %v3458
    %v3628 = vunpack.c.l.b16 %v3459
    %v3629 = vunpack.c.l.b16 %v3460
    %v3630 = vunpack.c.l.b16 %v3461
    %v3631 = vpack.c.b16 %v3600, %v3599
    %v3632 = vpack.c.b16 %v3602, %v3601
    %v3633 = vpack.c.b16 %v3604, %v3603
    %v3634 = vpack.c.b16 %v3606, %v3605
    %v3635 = vpack.c.b16 %v3608, %v3607
    %v3636 = vpack.c.b16 %v3610, %v3609
    %v3637 = vpack.c.b16 %v3612, %v3611
    %v3638 = vpack.c.b16 %v3614, %v3613
    %v3639 = vpack.c.b16 %v3616, %v3615
    %v3640 = vpack.c.b16 %v3618, %v3617
    %v3641 = vpack.c.b16 %v3620, %v3619
    %v3642 = vpack.c.b16 %v3622, %v3621
    %v3643 = vpack.c.b16 %v3624, %v3623
    %v3644 = vpack.c.b16 %v3626, %v3625
    %v3645 = vpack.c.b16 %v3628, %v3627
    %v3646 = vpack.c.b16 %v3630, %v3629
    %3663 = vmatprep.subr.bf16.mxu0 0
    %3664 = vmatpush1.bf16.msra.mxu0 %v3631
    %3665 = vmatprep.subr.bf16.mxu0 0
    %3666 = vmatpush1.bf16.msra.mxu0 %v3632
    %3667 = vmatprep.subr.bf16.mxu0 0
    %3668 = vmatpush1.bf16.msra.mxu0 %v3633
    %3669 = vmatprep.subr.bf16.mxu0 0
    %3670 = vmatpush1.bf16.msra.mxu0 %v3634
    %3671 = vmatprep.subr.bf16.mxu0 0
    %3672 = vmatpush1.bf16.msra.mxu0 %v3635
    %3673 = vmatprep.subr.bf16.mxu0 0
    %3674 = vmatpush1.bf16.msra.mxu0 %v3636
    %3675 = vmatprep.subr.bf16.mxu0 0
    %3676 = vmatpush1.bf16.msra.mxu0 %v3637
    %3677 = vmatprep.subr.bf16.mxu0 0
    %3678 = vmatpush1.bf16.msra.mxu0 %v3638
    %3679 = vmatprep.subr.bf16.mxu0 0
    %3680 = vmatpush1.bf16.msra.mxu0 %v3639
    %3681 = vmatprep.subr.bf16.mxu0 0
    %3682 = vmatpush1.bf16.msra.mxu0 %v3640
    %3683 = vmatprep.subr.bf16.mxu0 0
    %3684 = vmatpush1.bf16.msra.mxu0 %v3641
    %3685 = vmatprep.subr.bf16.mxu0 0
    %3686 = vmatpush1.bf16.msra.mxu0 %v3642
    %3687 = vmatprep.subr.bf16.mxu0 0
    %3688 = vmatpush1.bf16.msra.mxu0 %v3643
    %3689 = vmatprep.subr.bf16.mxu0 0
    %3690 = vmatpush1.bf16.msra.mxu0 %v3644
    %3691 = vmatprep.subr.bf16.mxu0 0
    %3692 = vmatpush1.bf16.msra.mxu0 %v3645
    %3693 = vmatprep.subr.bf16.mxu0 0
    %3694 = vmatpush1.bf16.msra.mxu0 %v3646
    %3695 = vmatprep.mubr.bf16.mxu0 %v3017
    %3696 = vmatmul.mubr.bf16.gmra.mrb[0].mxu0 %v3016
    %v3697 = vpop.f32.mrb[0].mxu0
    %v3698 = vadd.f32 %v3561, %v3697
    %v3699 = vpop.f32.mrb[0].mxu0
    %v3700 = vpop.f32.mrb[0].mxu0
    %v3701 = vadd.f32 %v3564, %v3700
    %v3702 = vpop.f32.mrb[0].mxu0
    %3703 = vdwg.mxu0
    %v3704 = vld [vmem:[%s17] sm:$0x1]
    %v3706 = vlaneseq
    %v3707 = vshrl.u32 %v3706, 7
    %v3708 = vsub.s32 0, %v3707
    %v3709 = vrot.slane %v3704, %v3708
    %v3711 = vadd.f32 %v3698, %v3709
    %v3712 = vadd.f32 %v3701, %v3709
    %v3713 = vmax.f32 %v3711, 0.0
    %v3714 = vmax.f32 %v3712, 0.0
    %v3715 = vpack.c.bf16 %v3714, %v3713
    %v3716 = vld [vmem:[#allocation13] sm:$0xf]
    %v3717 = vld [vmem:[#allocation13 + $0x4] sm:$0xf]
    %v3718 = vld [vmem:[#allocation13 + $0x8] sm:$0xf]
    %v3719 = vld [vmem:[#allocation13 + $0xc] sm:$0xf]
    %v3720 = vld [vmem:[#allocation13 + $0x10] sm:$0xf]
    %v3721 = vld [vmem:[#allocation13 + $0x14] sm:$0xf]
    %v3722 = vld [vmem:[#allocation13 + $0x18] sm:$0xf]
    %v3723 = vld [vmem:[#allocation13 + $0x1c] sm:$0xf]
    %v3724 = vld [vmem:[#allocation13 + $0x20] sm:$0xf]
    %v3725 = vld [vmem:[#allocation13 + $0x24] sm:$0xf]
    %v3726 = vld [vmem:[#allocation13 + $0x28] sm:$0xf]
    %v3727 = vld [vmem:[#allocation13 + $0x2c] sm:$0xf]
    %v3728 = vld [vmem:[#allocation13 + $0x30] sm:$0xf]
    %v3729 = vld [vmem:[#allocation13 + $0x34] sm:$0xf]
    %v3730 = vld [vmem:[#allocation13 + $0x38] sm:$0xf]
    %v3731 = vld [vmem:[#allocation13 + $0x3c] sm:$0xf]
    %v3732 = vld [vmem:[%s19] sm:$0x1]
    %v3734 = vlaneseq
    %v3735 = vshrl.u32 %v3734, 7
    %v3736 = vsub.s32 0, %v3735
    %v3737 = vrot.slane %v3732, %v3736
    %v3755 = vunpack.c.l.b16 %v3716
    %v3756 = vunpack.c.l.b16 %v3717
    %v3757 = vunpack.c.l.b16 %v3718
    %v3758 = vunpack.c.l.b16 %v3719
    %v3759 = vunpack.c.l.b16 %v3720
    %v3760 = vunpack.c.l.b16 %v3721
    %v3761 = vunpack.c.l.b16 %v3722
    %v3762 = vunpack.c.l.b16 %v3723
    %v3763 = vunpack.c.l.b16 %v3724
    %v3764 = vunpack.c.l.b16 %v3725
    %v3765 = vunpack.c.l.b16 %v3726
    %v3766 = vunpack.c.l.b16 %v3727
    %v3767 = vunpack.c.l.b16 %v3728
    %v3768 = vunpack.c.l.b16 %v3729
    %v3769 = vunpack.c.l.b16 %v3730
    %v3770 = vunpack.c.l.b16 %v3731
    %v3771 = vpack.c.b16 %v3756, %v3755
    %v3772 = vpack.c.b16 %v3758, %v3757
    %v3773 = vpack.c.b16 %v3760, %v3759
    %v3774 = vpack.c.b16 %v3762, %v3761
    %v3775 = vpack.c.b16 %v3764, %v3763
    %v3776 = vpack.c.b16 %v3766, %v3765
    %v3777 = vpack.c.b16 %v3768, %v3767
    %v3778 = vpack.c.b16 %v3770, %v3769
    %3787 = vmatprep.subr.bf16.mxu0 0
    %3788 = vmatpush1.bf16.msra.mxu0 %v3771
    %3789 = vmatprep.subr.bf16.mxu0 0
    %3790 = vmatpush1.bf16.msra.mxu0 %v3772
    %3791 = vmatprep.subr.bf16.mxu0 0
    %3792 = vmatpush1.bf16.msra.mxu0 %v3773
    %3793 = vmatprep.subr.bf16.mxu0 0
    %3794 = vmatpush1.bf16.msra.mxu0 %v3774
    %3795 = vmatprep.subr.bf16.mxu0 0
    %3796 = vmatpush1.bf16.msra.mxu0 %v3775
    %3797 = vmatprep.subr.bf16.mxu0 0
    %3798 = vmatpush1.bf16.msra.mxu0 %v3776
    %3799 = vmatprep.subr.bf16.mxu0 0
    %3800 = vmatpush1.bf16.msra.mxu0 %v3777
    %3801 = vmatprep.subr.bf16.mxu0 0
    %3802 = vmatpush1.bf16.msra.mxu0 %v3778
    %3803 = vmatprep.subr.bf16.mxu0 0
    %3804 = vmatpush1.bf16.msra.mxu0 0
    %3805 = vmatprep.subr.bf16.mxu0 0
    %3806 = vmatpush1.bf16.msra.mxu0 0
    %3807 = vmatprep.subr.bf16.mxu0 0
    %3808 = vmatpush1.bf16.msra.mxu0 0
    %3809 = vmatprep.subr.bf16.mxu0 0
    %3810 = vmatpush1.bf16.msra.mxu0 0
    %3811 = vmatprep.subr.bf16.mxu0 0
    %3812 = vmatpush1.bf16.msra.mxu0 0
    %3813 = vmatprep.subr.bf16.mxu0 0
    %3814 = vmatpush1.bf16.msra.mxu0 0
    %3815 = vmatprep.subr.bf16.mxu0 0
    %3816 = vmatpush1.bf16.msra.mxu0 0
    %3817 = vmatprep.subr.bf16.mxu0 0
    %3818 = vmatpush1.bf16.msra.mxu0 0
    %3819 = vmatprep.mubr.bf16.mxu0 0
    %3820 = vmatmul.mubr.bf16.gmra.mrb[0].mxu0 %v3715
    %v3821 = vpop.f32.mrb[0].mxu0
    %v3822 = vadd.f32 %v3737, %v3821
    %v3823 = vpop.f32.mrb[0].mxu0
    %v3824 = vpop.f32.mrb[0].mxu0
    %v3825 = vadd.f32 %v3737, %v3824
    %v3826 = vpop.f32.mrb[0].mxu0
    %3827 = vdwg.mxu0
    %v3828 = vtanh.pop %v3822
    %v3829 = vtanh.pop %v3825
    %v3830 = vpack.c.bf16 %v3829, %v3828
    %v3832 = vunpack.c.l.b16 %v3830
    %v3833 = vunpack.c.h.b16 %v3830
    %v3834 = vpack.c.b16 %v3832, %v3832
    %v3835 = vpack.c.b16 %v3833, %v3833
    %3838 = vst [vmem:[%s22] sm:$0xf] %v3834
    %3839 = vst [vmem:[%s22 + $0x4] sm:$0xf] %v3835
    // Predicated region
    $region114: #{reflective_thinking_forward.1} parent=1 // pred_check
      _
    $region115: #{reflective_thinking_forward.1} parent=1 // pred_check_branch
      %3841 = sbr.rel (0) target = $region117
    $region116: #{reflective_thinking_forward.1} parent=1 // pred_region
      _
    $region117: #{reflective_thinking_forward.1} parent=1 // pred_fallthru
      _
    // Predicated region
    $region118: #{reflective_thinking_forward.1} parent=1 // pred_check
      _
    $region119: #{reflective_thinking_forward.1} parent=1 // pred_check_branch
      %3843 = sbr.rel (0) target = $region121
    $region120: #{reflective_thinking_forward.1} parent=1 // pred_region
      _
    $region121: #{reflective_thinking_forward.1} parent=1 // pred_fallthru
      _
    // Predicated region
    $region122: #{reflective_thinking_forward.1} parent=1 // pred_check
      _
    $region123: #{reflective_thinking_forward.1} parent=1 // pred_check_branch
      %3845 = sbr.rel (0) target = $region125
    $region124: #{reflective_thinking_forward.1} parent=1 // pred_region
      _
    $region125: #{reflective_thinking_forward.1} parent=1 // pred_fallthru
      _
    // Predicated region
    $region126: #{reflective_thinking_forward.1} parent=1 // pred_check
      _
    $region127: #{reflective_thinking_forward.1} parent=1 // pred_check_branch
      %3847 = sbr.rel (0) target = $region129
    $region128: #{reflective_thinking_forward.1} parent=1 // pred_region
      _
    $region129: #{reflective_thinking_forward.1} parent=1 // pred_fallthru
      _
    // Predicated region
    $region130: #{reflective_thinking_forward.1} parent=1 // pred_check
      _
    $region131: #{reflective_thinking_forward.1} parent=1 // pred_check_branch
      %3849 = sbr.rel (0) target = $region133
    $region132: #{reflective_thinking_forward.1} parent=1 // pred_region
      _
    $region133: #{reflective_thinking_forward.1} parent=1 // pred_fallthru
      _
    // Predicated region
    $region134: #{reflective_thinking_forward.1} parent=1 // pred_check
      _
    $region135: #{reflective_thinking_forward.1} parent=1 // pred_check_branch
      %3851 = sbr.rel (0) target = $region137
    $region136: #{reflective_thinking_forward.1} parent=1 // pred_region
      _
    $region137: #{reflective_thinking_forward.1} parent=1 // pred_fallthru
      _
    %3852 = vsyncpa [#allocation3], 1
    %3853 = vsyncpa [#allocation5], 1
    %3854 = vsyncpa [#allocation8], 1
    %3855 = vsyncpa [#allocation11], 1
    %3856 = vsyncpa [#allocation14], 1

</llo_original>
